<compile_context>
chip_gen: v7x
topology: tpu7x:2x2x1
jax: 0.10.0
libtpu: 0.0.40
codegen_flags: <defaults>
</compile_context>

<pallas_src>
import functools

import jax
import jax.numpy as jnp
from jax.experimental import pallas as pl
from jax.experimental.pallas import tpu as pltpu


def _round_up(x, m):
    return ((x + m - 1) // m) * m


def _vmem_capacity_bytes():
    """Physical VMEM per TensorCore; conservative fallback if the query fails."""
    try:
        info = pltpu.get_tpu_info()
        cap = getattr(info, "vmem_capacity_bytes", None)
        if cap:
            return int(cap)
    except Exception:
        pass
    return 64 * 1024 * 1024  # v7x per-TC size; safe lower bound for v5e/v6e too


@functools.partial(
    jax.jit, static_argnames=("kernel_size", "stride", "padding", "use_bf16"))
def cconv2d(x, w_real, w_im, b_real, b_im, *, kernel_size, stride=1, padding=0,
            use_bf16=False):
    """x: [B, Cin, H, W, 2] float32 ([..., 0]=real, [..., 1]=imag).
    Weights: [Cout, Cin, kh, kw]; biases: [Cout].
    Returns complex64 [B, Cout, OH, OW] matching the PyTorch module."""
    B, Cin, H, W, _ = x.shape
    Cout = w_real.shape[0]
    if isinstance(kernel_size, (tuple, list)):
        kh, kw = kernel_size
    else:
        kh = kw = int(kernel_size)
    s = int(stride)
    p = int(padding)

    Hp, Wp = H + 2 * p, W + 2 * p
    OH = (Hp - kh) // s + 1
    OW = (Wp - kw) // s + 1
    C2 = 2 * Cin                       # folded (real | imag) channel/lane axis
    N = Cout
    N2 = _round_up(2 * N, 128)         # ONE lane-dense pad of the combined width
    khkw = kh * kw
    ss = s * s

    in_dtype = jnp.bfloat16 if use_bf16 else jnp.float32

    # ---- input: fold complex into channels (lane dim), pad spatially once ----
    # [B, Cin, H, W, 2] -> [B, H, W, 2, Cin] -> [B, H, W, 2*Cin]
    # (first Cin lanes = real channels, next Cin lanes = imag channels)
    x_cl = jnp.transpose(x, (0, 2, 3, 4, 1)).reshape(B, H, W, C2)
    x_pad = jnp.pad(x_cl, ((0, 0), (p, p), (p, p), (0, 0)))

    # Strided-phase decomposition so every kernel-position window is a *static*
    # slice inside the kernel, even for stride > 1.  For stride == 1 this is
    # just x_pad[None, ...] (no data inflation).
    Hs = (Hp + s - 1) // s
    Ws = (Wp + s - 1) // s
    phases = []
    for r in range(s):
        for c in range(s):
            sl = x_pad[:, r::s, c::s, :]
            sl = jnp.pad(sl, ((0, 0), (0, Hs - sl.shape[1]),
                              (0, Ws - sl.shape[2]), (0, 0)))
            phases.append(sl)
    x_ph = jnp.stack(phases, axis=0).astype(in_dtype)  # [s*s, B, Hs, Ws, 2Cin]

    # ---- stacked complex weight per kernel position:  [kh*kw, 2Cin, N2] ------
    #   rows [0, Cin)    (real input ch):  cols [0,N) = Wr,  cols [N,2N) = Wi
    #   rows [Cin, 2Cin) (imag input ch):  cols [0,N) = -Wi, cols [N,2N) = Wr
    wr_t = jnp.transpose(w_real, (2, 3, 1, 0)).reshape(khkw, Cin, N)
    wi_t = jnp.transpose(w_im, (2, 3, 1, 0)).reshape(khkw, Cin, N)
    w_big = jnp.concatenate(
        [jnp.concatenate([wr_t, wi_t], axis=2),
         jnp.concatenate([-wi_t, wr_t], axis=2)], axis=1)       # [khkw, 2Cin, 2N]
    w_big = jnp.pad(w_big, ((0, 0), (0, 0), (0, N2 - 2 * N))).astype(in_dtype)

    # ---- combined bias: real cols get (br - bi), imag cols get (br + bi) -----
    br = b_real.reshape(1, N).astype(jnp.float32)
    bi = b_im.reshape(1, N).astype(jnp.float32)
    b_big = jnp.pad(jnp.concatenate([br - bi, br + bi], axis=1),
                    ((0, 0), (0, N2 - 2 * N)))

    # ------------------------------- tiling -----------------------------------
    vmem_cap = _vmem_capacity_bytes()
    vmem_budget = int(vmem_cap * 0.4)       # tile-selection budget
    vmem_limit = int(vmem_cap * 5 / 8)      # scoped limit (40 MiB on v7x, 80 MiB v5e/v6e)
    in_bytes = 2 if use_bf16 else 4

    def _footprint(tn_):
        lane = lambda d: _round_up(d, 128)
        sub = lambda d: _round_up(d, 8)
        x_blk = ss * Hs * sub(Ws) * lane(C2) * in_bytes          # per buffer
        w_blk = khkw * sub(C2) * tn_ * in_bytes
        o_blk = OH * sub(OW) * tn_ * 4
        acc = sub(OH * OW) * tn_ * 4                             # f32 accumulator
        win = sub(OH * OW) * lane(C2) * 4                        # one window temp
        return 2 * x_blk + 2 * w_blk + 2 * o_blk + acc + win + (1 << 20)

    tn = min(N2, 512)
    while N2 % tn:                    # keep tn a 128-multiple divisor of N2
        tn -= 128
    while tn > 128 and _footprint(tn) > vmem_budget:
        tn -= 128
    # v7x megacore: make sure the (batch, n) grid has >= 2 steps when possible.
    if B == 1 and N2 // tn == 1 and N2 % 256 == 0:
        tn = N2 // 2
    # TODO(synk): if _footprint(128) still exceeds the budget (huge images or
    # channel counts) this needs an OH-halo tile or a channel-reduction grid
    # axis with a VMEM accumulator; not required for typical CConv2d shapes.

    grid = (B, pl.cdiv(N2, tn))

    # ------------------------------- kernel -----------------------------------
    def kernel(x_ref, w_ref, b_ref, o_ref):
        # x_ref: [s*s, 1, Hs, Ws, 2Cin]  padded channels-last input (one image)
        # w_ref: [kh*kw, 2Cin, tn]       stacked complex weight slice (resident)
        # b_ref: [1, tn]                 combined bias slice
        # o_ref: [1, OH, OW, tn]         fused (real | imag) lane-dense output
        acc = None
        for i in range(kh):            # static unrolled implicit-im2col loop
            for j in range(kw):
                pidx = (i % s) * s + (j % s)
                oi, oj = i // s, j // s
                win = x_ref[pidx:pidx + 1, 0:1, oi:oi + OH, oj:oj + OW, :]
                win = win.reshape(OH * OW, C2)
                idx = i * kw + j
                wij = w_ref[idx:idx + 1, :, :].reshape(C2, tn)
                part = jnp.dot(win, wij, preferred_element_type=jnp.float32)
                acc = part if acc is None else acc + part
        out = acc + b_ref[...]
        o_ref[...] = out.reshape(o_ref.shape).astype(o_ref.dtype)

    out4 = pl.pallas_call(
        kernel,
        out_shape=jax.ShapeDtypeStruct((B, OH, OW, N2), jnp.float32),
        grid_spec=pltpu.PrefetchScalarGridSpec(
            num_scalar_prefetch=0,
            grid=grid,
            in_specs=[
                pl.BlockSpec((ss, 1, Hs, Ws, C2), lambda b, n: (0, b, 0, 0, 0)),
                pl.BlockSpec((khkw, C2, tn), lambda b, n: (0, 0, n)),
                pl.BlockSpec((1, tn), lambda b, n: (0, n)),
            ],
            out_specs=pl.BlockSpec((1, OH, OW, tn), lambda b, n: (b, 0, 0, n)),
        ),
        compiler_params=pltpu.CompilerParams(
            dimension_semantics=("parallel", "parallel"),
            vmem_limit_bytes=vmem_limit,
        ),
    )(x_ph, w_big, b_big)

    # Slice the two complex halves out of the combined width and restore the
    # NCHW complex64 layout required by the module's forward-pass semantics.
    c_real = jnp.transpose(out4[..., :N], (0, 3, 1, 2))
    c_im = jnp.transpose(out4[..., N:2 * N], (0, 3, 1, 2))
    return jax.lax.complex(c_real, c_im)


# ---------------------------- parameter construction --------------------------

def xavier_uniform(key, shape):
    # nn.init.xavier_uniform_ for conv weight [Cout, Cin, kh, kw]:
    # fan_in = Cin*kh*kw, fan_out = Cout*kh*kw, bound = sqrt(6/(fan_in+fan_out))
    cout, cin, kh, kw = shape
    fan_in = cin * kh * kw
    fan_out = cout * kh * kw
    bound = (6.0 / (fan_in + fan_out)) ** 0.5
    return jax.random.uniform(key, shape, jnp.float32, -bound, bound)


def conv_bias_init(key, cout, fan_in):
    bound = 1.0 / (fan_in ** 0.5)
    return jax.random.uniform(key, (cout,), jnp.float32, -bound, bound)


# ------------------------------------ main -------------------------------------

if __name__ == "__main__":
    # Small shapes: batch=2, in_channels=4, out_channels=4, spatial=16,
    # kernel_size=3, stride=1, padding=1.
    B, Cin, Cout, H, W = 2, 4, 4, 16, 16
    ksize, stride, padding = 3, 1, 1

    key = jax.random.PRNGKey(0)
    kx, kwr, kwi, kbr, kbi = jax.random.split(key, 5)

    x = jax.random.normal(kx, (B, Cin, H, W, 2), jnp.float32)
    w_real = xavier_uniform(kwr, (Cout, Cin, ksize, ksize))
    w_im = xavier_uniform(kwi, (Cout, Cin, ksize, ksize))
    b_real = conv_bias_init(kbr, Cout, Cin * ksize * ksize)
    b_im = conv_bias_init(kbi, Cout, Cin * ksize * ksize)

    out = cconv2d(x, w_real, w_im, b_real, b_im,
                  kernel_size=ksize, stride=stride, padding=padding)
    out = jax.block_until_ready(out)

    # Reference check against XLA's conv (same semantics as nn.Conv2d).
    def ref_conv(xx, ww, bb):
        y = jax.lax.conv_general_dilated(
            xx, ww, window_strides=(stride, stride),
            padding=[(padding, padding), (padding, padding)],
            dimension_numbers=("NCHW", "OIHW", "NCHW"))
        return y + bb.reshape(1, -1, 1, 1)

    xr, xi = x[..., 0], x[..., 1]
    ref_real = ref_conv(xr, w_real, b_real) - ref_conv(xi, w_im, b_im)
    ref_im = ref_conv(xr, w_im, b_im) + ref_conv(xi, w_real, b_real)
    assert jnp.allclose(out.real, ref_real, atol=1e-4, rtol=1e-4)
    assert jnp.allclose(out.imag, ref_im, atol=1e-4, rtol=1e-4)
    assert out.dtype == jnp.complex64 and out.shape == (B, Cout, H, W)

    print("KERNEL_OK")
</pallas_src>

<mosaic_0001>
module attributes {stable_mosaic.version = 11 : i64} {
  func.func @kernel(%arg0: i32, %arg1: i32, %arg2: memref<1x1x18x18x8xf32, #tpu.memory_space<vmem>>, %arg3: memref<9x8x128xf32, #tpu.memory_space<vmem>>, %arg4: memref<1x128xf32, #tpu.memory_space<vmem>>, %arg5: memref<1x16x16x128xf32, #tpu.memory_space<vmem>>) attributes {dimension_semantics = [#tpu.dimension_semantics<parallel>, #tpu.dimension_semantics<parallel>], iteration_bounds = array<i64: 2, 1>, scalar_prefetch = 0 : i64, scratch_operands = 0 : i64, tpu.core_type = #tpu.core_type<tc>, window_params = [{transform_indices = @transform_0, window_bounds = array<i64: 1, 1, 18, 18, 8>}, {transform_indices = @transform_1, window_bounds = array<i64: 9, 8, 128>}, {transform_indices = @transform_2, window_bounds = array<i64: 1, 128>}, {transform_indices = @transform_3, window_bounds = array<i64: 1, 16, 16, 128>}]} {
    %c0 = arith.constant 0 : index
    %c0_0 = arith.constant 0 : index
    %c0_1 = arith.constant 0 : index
    %c0_2 = arith.constant 0 : index
    %c0_3 = arith.constant 0 : index
    %0 = vector.load %arg2[%c0, %c0_0, %c0_1, %c0_2, %c0_3] : memref<1x1x18x18x8xf32, #tpu.memory_space<vmem>>, vector<1x1x16x16x8xf32>
    %1 = vector.shape_cast %0 : vector<1x1x16x16x8xf32> to vector<256x8xf32>
    %c0_4 = arith.constant 0 : index
    %c0_5 = arith.constant 0 : index
    %c0_6 = arith.constant 0 : index
    %2 = vector.load %arg3[%c0_4, %c0_5, %c0_6] : memref<9x8x128xf32, #tpu.memory_space<vmem>>, vector<1x8x128xf32>
    %3 = vector.shape_cast %2 : vector<1x8x128xf32> to vector<8x128xf32>
    %cst = arith.constant dense<0.000000e+00> : vector<256x128xf32>
    %4 = tpu.matmul %1, %3, %cst {dimension_numbers = #tpu.dot_dimension_numbers<[1], [0], [0], [1], [0, 0, 1, 1], [], []>} : vector<256x8xf32>, vector<8x128xf32>, vector<256x128xf32> -> vector<256x128xf32>
    %c0_7 = arith.constant 0 : index
    %c0_8 = arith.constant 0 : index
    %c0_9 = arith.constant 0 : index
    %c1 = arith.constant 1 : index
    %c0_10 = arith.constant 0 : index
    %5 = vector.load %arg2[%c0_7, %c0_8, %c0_9, %c1, %c0_10] : memref<1x1x18x18x8xf32, #tpu.memory_space<vmem>>, vector<1x1x16x16x8xf32>
    %6 = vector.shape_cast %5 : vector<1x1x16x16x8xf32> to vector<256x8xf32>
    %c1_11 = arith.constant 1 : index
    %c0_12 = arith.constant 0 : index
    %c0_13 = arith.constant 0 : index
    %7 = vector.load %arg3[%c1_11, %c0_12, %c0_13] : memref<9x8x128xf32, #tpu.memory_space<vmem>>, vector<1x8x128xf32>
    %8 = vector.shape_cast %7 : vector<1x8x128xf32> to vector<8x128xf32>
    %cst_14 = arith.constant dense<0.000000e+00> : vector<256x128xf32>
    %9 = tpu.matmul %6, %8, %cst_14 {dimension_numbers = #tpu.dot_dimension_numbers<[1], [0], [0], [1], [0, 0, 1, 1], [], []>} : vector<256x8xf32>, vector<8x128xf32>, vector<256x128xf32> -> vector<256x128xf32>
    %10 = arith.addf %4, %9 : vector<256x128xf32>
    %c0_15 = arith.constant 0 : index
    %c0_16 = arith.constant 0 : index
    %c0_17 = arith.constant 0 : index
    %c2 = arith.constant 2 : index
    %c0_18 = arith.constant 0 : index
    %11 = vector.load %arg2[%c0_15, %c0_16, %c0_17, %c2, %c0_18] : memref<1x1x18x18x8xf32, #tpu.memory_space<vmem>>, vector<1x1x16x16x8xf32>
    %12 = vector.shape_cast %11 : vector<1x1x16x16x8xf32> to vector<256x8xf32>
    %c2_19 = arith.constant 2 : index
    %c0_20 = arith.constant 0 : index
    %c0_21 = arith.constant 0 : index
    %13 = vector.load %arg3[%c2_19, %c0_20, %c0_21] : memref<9x8x128xf32, #tpu.memory_space<vmem>>, vector<1x8x128xf32>
    %14 = vector.shape_cast %13 : vector<1x8x128xf32> to vector<8x128xf32>
    %cst_22 = arith.constant dense<0.000000e+00> : vector<256x128xf32>
    %15 = tpu.matmul %12, %14, %cst_22 {dimension_numbers = #tpu.dot_dimension_numbers<[1], [0], [0], [1], [0, 0, 1, 1], [], []>} : vector<256x8xf32>, vector<8x128xf32>, vector<256x128xf32> -> vector<256x128xf32>
    %16 = arith.addf %10, %15 : vector<256x128xf32>
    %c0_23 = arith.constant 0 : index
    %c0_24 = arith.constant 0 : index
    %c1_25 = arith.constant 1 : index
    %c0_26 = arith.constant 0 : index
    %c0_27 = arith.constant 0 : index
    %17 = vector.load %arg2[%c0_23, %c0_24, %c1_25, %c0_26, %c0_27] : memref<1x1x18x18x8xf32, #tpu.memory_space<vmem>>, vector<1x1x16x16x8xf32>
    %18 = vector.shape_cast %17 : vector<1x1x16x16x8xf32> to vector<256x8xf32>
    %c3 = arith.constant 3 : index
    %c0_28 = arith.constant 0 : index
    %c0_29 = arith.constant 0 : index
    %19 = vector.load %arg3[%c3, %c0_28, %c0_29] : memref<9x8x128xf32, #tpu.memory_space<vmem>>, vector<1x8x128xf32>
    %20 = vector.shape_cast %19 : vector<1x8x128xf32> to vector<8x128xf32>
    %cst_30 = arith.constant dense<0.000000e+00> : vector<256x128xf32>
    %21 = tpu.matmul %18, %20, %cst_30 {dimension_numbers = #tpu.dot_dimension_numbers<[1], [0], [0], [1], [0, 0, 1, 1], [], []>} : vector<256x8xf32>, vector<8x128xf32>, vector<256x128xf32> -> vector<256x128xf32>
    %22 = arith.addf %16, %21 : vector<256x128xf32>
    %c0_31 = arith.constant 0 : index
    %c0_32 = arith.constant 0 : index
    %c1_33 = arith.constant 1 : index
    %c1_34 = arith.constant 1 : index
    %c0_35 = arith.constant 0 : index
    %23 = vector.load %arg2[%c0_31, %c0_32, %c1_33, %c1_34, %c0_35] : memref<1x1x18x18x8xf32, #tpu.memory_space<vmem>>, vector<1x1x16x16x8xf32>
    %24 = vector.shape_cast %23 : vector<1x1x16x16x8xf32> to vector<256x8xf32>
    %c4 = arith.constant 4 : index
    %c0_36 = arith.constant 0 : index
    %c0_37 = arith.constant 0 : index
    %25 = vector.load %arg3[%c4, %c0_36, %c0_37] : memref<9x8x128xf32, #tpu.memory_space<vmem>>, vector<1x8x128xf32>
    %26 = vector.shape_cast %25 : vector<1x8x128xf32> to vector<8x128xf32>
    %cst_38 = arith.constant dense<0.000000e+00> : vector<256x128xf32>
    %27 = tpu.matmul %24, %26, %cst_38 {dimension_numbers = #tpu.dot_dimension_numbers<[1], [0], [0], [1], [0, 0, 1, 1], [], []>} : vector<256x8xf32>, vector<8x128xf32>, vector<256x128xf32> -> vector<256x128xf32>
    %28 = arith.addf %22, %27 : vector<256x128xf32>
    %c0_39 = arith.constant 0 : index
    %c0_40 = arith.constant 0 : index
    %c1_41 = arith.constant 1 : index
    %c2_42 = arith.constant 2 : index
    %c0_43 = arith.constant 0 : index
    %29 = vector.load %arg2[%c0_39, %c0_40, %c1_41, %c2_42, %c0_43] : memref<1x1x18x18x8xf32, #tpu.memory_space<vmem>>, vector<1x1x16x16x8xf32>
    %30 = vector.shape_cast %29 : vector<1x1x16x16x8xf32> to vector<256x8xf32>
    %c5 = arith.constant 5 : index
    %c0_44 = arith.constant 0 : index
    %c0_45 = arith.constant 0 : index
    %31 = vector.load %arg3[%c5, %c0_44, %c0_45] : memref<9x8x128xf32, #tpu.memory_space<vmem>>, vector<1x8x128xf32>
    %32 = vector.shape_cast %31 : vector<1x8x128xf32> to vector<8x128xf32>
    %cst_46 = arith.constant dense<0.000000e+00> : vector<256x128xf32>
    %33 = tpu.matmul %30, %32, %cst_46 {dimension_numbers = #tpu.dot_dimension_numbers<[1], [0], [0], [1], [0, 0, 1, 1], [], []>} : vector<256x8xf32>, vector<8x128xf32>, vector<256x128xf32> -> vector<256x128xf32>
    %34 = arith.addf %28, %33 : vector<256x128xf32>
    %c0_47 = arith.constant 0 : index
    %c0_48 = arith.constant 0 : index
    %c2_49 = arith.constant 2 : index
    %c0_50 = arith.constant 0 : index
    %c0_51 = arith.constant 0 : index
    %35 = vector.load %arg2[%c0_47, %c0_48, %c2_49, %c0_50, %c0_51] : memref<1x1x18x18x8xf32, #tpu.memory_space<vmem>>, vector<1x1x16x16x8xf32>
    %36 = vector.shape_cast %35 : vector<1x1x16x16x8xf32> to vector<256x8xf32>
    %c6 = arith.constant 6 : index
    %c0_52 = arith.constant 0 : index
    %c0_53 = arith.constant 0 : index
    %37 = vector.load %arg3[%c6, %c0_52, %c0_53] : memref<9x8x128xf32, #tpu.memory_space<vmem>>, vector<1x8x128xf32>
    %38 = vector.shape_cast %37 : vector<1x8x128xf32> to vector<8x128xf32>
    %cst_54 = arith.constant dense<0.000000e+00> : vector<256x128xf32>
    %39 = tpu.matmul %36, %38, %cst_54 {dimension_numbers = #tpu.dot_dimension_numbers<[1], [0], [0], [1], [0, 0, 1, 1], [], []>} : vector<256x8xf32>, vector<8x128xf32>, vector<256x128xf32> -> vector<256x128xf32>
    %40 = arith.addf %34, %39 : vector<256x128xf32>
    %c0_55 = arith.constant 0 : index
    %c0_56 = arith.constant 0 : index
    %c2_57 = arith.constant 2 : index
    %c1_58 = arith.constant 1 : index
    %c0_59 = arith.constant 0 : index
    %41 = vector.load %arg2[%c0_55, %c0_56, %c2_57, %c1_58, %c0_59] : memref<1x1x18x18x8xf32, #tpu.memory_space<vmem>>, vector<1x1x16x16x8xf32>
    %42 = vector.shape_cast %41 : vector<1x1x16x16x8xf32> to vector<256x8xf32>
    %c7 = arith.constant 7 : index
    %c0_60 = arith.constant 0 : index
    %c0_61 = arith.constant 0 : index
    %43 = vector.load %arg3[%c7, %c0_60, %c0_61] : memref<9x8x128xf32, #tpu.memory_space<vmem>>, vector<1x8x128xf32>
    %44 = vector.shape_cast %43 : vector<1x8x128xf32> to vector<8x128xf32>
    %cst_62 = arith.constant dense<0.000000e+00> : vector<256x128xf32>
    %45 = tpu.matmul %42, %44, %cst_62 {dimension_numbers = #tpu.dot_dimension_numbers<[1], [0], [0], [1], [0, 0, 1, 1], [], []>} : vector<256x8xf32>, vector<8x128xf32>, vector<256x128xf32> -> vector<256x128xf32>
    %46 = arith.addf %40, %45 : vector<256x128xf32>
    %c0_63 = arith.constant 0 : index
    %c0_64 = arith.constant 0 : index
    %c2_65 = arith.constant 2 : index
    %c2_66 = arith.constant 2 : index
    %c0_67 = arith.constant 0 : index
    %47 = vector.load %arg2[%c0_63, %c0_64, %c2_65, %c2_66, %c0_67] : memref<1x1x18x18x8xf32, #tpu.memory_space<vmem>>, vector<1x1x16x16x8xf32>
    %48 = vector.shape_cast %47 : vector<1x1x16x16x8xf32> to vector<256x8xf32>
    %c8 = arith.constant 8 : index
    %c0_68 = arith.constant 0 : index
    %c0_69 = arith.constant 0 : index
    %49 = vector.load %arg3[%c8, %c0_68, %c0_69] : memref<9x8x128xf32, #tpu.memory_space<vmem>>, vector<1x8x128xf32>
    %50 = vector.shape_cast %49 : vector<1x8x128xf32> to vector<8x128xf32>
    %cst_70 = arith.constant dense<0.000000e+00> : vector<256x128xf32>
    %51 = tpu.matmul %48, %50, %cst_70 {dimension_numbers = #tpu.dot_dimension_numbers<[1], [0], [0], [1], [0, 0, 1, 1], [], []>} : vector<256x8xf32>, vector<8x128xf32>, vector<256x128xf32> -> vector<256x128xf32>
    %52 = arith.addf %46, %51 : vector<256x128xf32>
    %c0_71 = arith.constant 0 : index
    %c0_72 = arith.constant 0 : index
    %53 = vector.load %arg4[%c0_71, %c0_72] : memref<1x128xf32, #tpu.memory_space<vmem>>, vector<1x128xf32>
    %54 = vector.broadcast %53 : vector<1x128xf32> to vector<256x128xf32>
    %55 = arith.addf %52, %54 : vector<256x128xf32>
    %56 = vector.shape_cast %55 : vector<256x128xf32> to vector<1x16x16x128xf32>
    %c0_73 = arith.constant 0 : index
    %c0_74 = arith.constant 0 : index
    %c0_75 = arith.constant 0 : index
    %c0_76 = arith.constant 0 : index
    %57 = vector.load %arg5[%c0_73, %c0_74, %c0_75, %c0_76] : memref<1x16x16x128xf32, #tpu.memory_space<vmem>>, vector<1x16x16x128xf32>
    tpu.vector_store %arg5[%c0_73, %c0_74, %c0_75, %c0_76], %56 {strides = array<i32>} : memref<1x16x16x128xf32, #tpu.memory_space<vmem>>, vector<1x16x16x128xf32>,
    return
  }
  func.func @transform_0(%arg0: i32, %arg1: i32) -> (i32, i32, i32, i32, i32) {
    %c0_i32 = arith.constant 0 : i32
    %c0_i32_0 = arith.constant 0 : i32
    %c0_i32_1 = arith.constant 0 : i32
    %c0_i32_2 = arith.constant 0 : i32
    %c0_i32_3 = arith.constant 0 : i32
    return %c0_i32, %arg0, %c0_i32_0, %c0_i32_1, %c0_i32_2 : i32, i32, i32, i32, i32
  }
  func.func @transform_1(%arg0: i32, %arg1: i32) -> (i32, i32, i32) {
    %c0_i32 = arith.constant 0 : i32
    %c0_i32_0 = arith.constant 0 : i32
    %c0_i32_1 = arith.constant 0 : i32
    return %c0_i32, %c0_i32_0, %arg1 : i32, i32, i32
  }
  func.func @transform_2(%arg0: i32, %arg1: i32) -> (i32, i32) {
    %c0_i32 = arith.constant 0 : i32
    %c0_i32_0 = arith.constant 0 : i32
    return %c0_i32, %arg1 : i32, i32
  }
  func.func @transform_3(%arg0: i32, %arg1: i32) -> (i32, i32, i32, i32) {
    %c0_i32 = arith.constant 0 : i32
    %c0_i32_0 = arith.constant 0 : i32
    %c0_i32_1 = arith.constant 0 : i32
    return %arg0, %c0_i32, %c0_i32_0, %arg1 : i32, i32, i32, i32
  }
}

</mosaic_0001>

<llo_original>
// kernel: neg.1
$region0: #{neg.1}
  #allocation0 [shape = 's32[1]{0}', space=sflag, size = 0x4, scoped, tag = 'scoped memory for neg.1']
  %s0 = inlined_call_operand.vmem [shape: f32[9,4,4], index: 0, kind: input, shape index: {}]
  %s1 = inlined_call_operand.vmem [shape: f32[9,4,4], index: 1, kind: output, shape index: {}]
  %v2 = vld [vmem:[%s0] sm:$0xf]
  %3 = xla_tuple %v2
  %4 = xla_tuple %3
  %v5 = vxor.u32 %v2, 2147483648
  %6 = xla_tuple %v5
  %7 = vst [vmem:[%s1] sm:$0xf] %v5
  %s8 = scalar_lea.vmem %s0, 4
  %v9 = vld [vmem:[%s8] sm:$0xf]
  %10 = xla_tuple %v9
  %11 = xla_tuple %10
  %v12 = vxor.u32 %v9, 2147483648
  %13 = xla_tuple %v12
  %s14 = scalar_lea.vmem %s1, 4
  %15 = vst [vmem:[%s14] sm:$0xf] %v12
  %s16 = scalar_lea.vmem %s0, 8
  %v17 = vld [vmem:[%s16] sm:$0xf]
  %18 = xla_tuple %v17
  %19 = xla_tuple %18
  %v20 = vxor.u32 %v17, 2147483648
  %21 = xla_tuple %v20
  %s22 = scalar_lea.vmem %s1, 8
  %23 = vst [vmem:[%s22] sm:$0xf] %v20
  %s24 = scalar_lea.vmem %s0, 12
  %v25 = vld [vmem:[%s24] sm:$0xf]
  %26 = xla_tuple %v25
  %27 = xla_tuple %26
  %v28 = vxor.u32 %v25, 2147483648
  %29 = xla_tuple %v28
  %s30 = scalar_lea.vmem %s1, 12
  %31 = vst [vmem:[%s30] sm:$0xf] %v28
  %s32 = scalar_lea.vmem %s0, 16
  %v33 = vld [vmem:[%s32] sm:$0xf]
  %34 = xla_tuple %v33
  %35 = xla_tuple %34
  %v36 = vxor.u32 %v33, 2147483648
  %37 = xla_tuple %v36
  %s38 = scalar_lea.vmem %s1, 16
  %39 = vst [vmem:[%s38] sm:$0xf] %v36
  %s40 = scalar_lea.vmem %s0, 20
  %v41 = vld [vmem:[%s40] sm:$0xf]
  %42 = xla_tuple %v41
  %43 = xla_tuple %42
  %v44 = vxor.u32 %v41, 2147483648
  %45 = xla_tuple %v44
  %s46 = scalar_lea.vmem %s1, 20
  %47 = vst [vmem:[%s46] sm:$0xf] %v44
  %s48 = scalar_lea.vmem %s0, 24
  %v49 = vld [vmem:[%s48] sm:$0xf]
  %50 = xla_tuple %v49
  %51 = xla_tuple %50
  %v52 = vxor.u32 %v49, 2147483648
  %53 = xla_tuple %v52
  %s54 = scalar_lea.vmem %s1, 24
  %55 = vst [vmem:[%s54] sm:$0xf] %v52
  %s56 = scalar_lea.vmem %s0, 28
  %v57 = vld [vmem:[%s56] sm:$0xf]
  %58 = xla_tuple %v57
  %59 = xla_tuple %58
  %v60 = vxor.u32 %v57, 2147483648
  %61 = xla_tuple %v60
  %s62 = scalar_lea.vmem %s1, 28
  %63 = vst [vmem:[%s62] sm:$0xf] %v60
  %s64 = scalar_lea.vmem %s0, 32
  %v65 = vld [vmem:[%s64] sm:$0xf]
  %66 = xla_tuple %v65
  %67 = xla_tuple %66
  %v68 = vxor.u32 %v65, 2147483648
  %69 = xla_tuple %v68
  %s70 = scalar_lea.vmem %s1, 32
  %71 = vst [vmem:[%s70] sm:$0xf] %v68

// kernel: custom-call
$region0: #{custom-call}
  %s0 = inlined_call_operand.vmem [shape: f32[2,4,16,16], index: 0, kind: input, shape index: {}]
  %s1 = inlined_call_operand.vmem [shape: f32[2,4,16,16], index: 1, kind: input, shape index: {}]
  %s2 = inlined_call_operand.vmem [shape: c64[2,4,16,16], index: 2, kind: output, shape index: {}]
  %s4 = scalar_lea.vmem %s2, 512
  %v5 = vld [vmem:[%s0] sm:$0xff]
  %6 = vst [vmem:[%s2] sm:$0xff] %v5
  %s7 = scalar_lea.vmem %s2, 8
  %s8 = scalar_lea.vmem %s0, 8
  %v9 = vld [vmem:[%s8] sm:$0xff]
  %10 = vst [vmem:[%s7] sm:$0xff] %v9
  %s11 = scalar_lea.vmem %s2, 16
  %s12 = scalar_lea.vmem %s0, 16
  %v13 = vld [vmem:[%s12] sm:$0xff]
  %14 = vst [vmem:[%s11] sm:$0xff] %v13
  %s15 = scalar_lea.vmem %s2, 24
  %s16 = scalar_lea.vmem %s0, 24
  %v17 = vld [vmem:[%s16] sm:$0xff]
  %18 = vst [vmem:[%s15] sm:$0xff] %v17
  %s19 = scalar_lea.vmem %s2, 32
  %s20 = scalar_lea.vmem %s0, 32
  %v21 = vld [vmem:[%s20] sm:$0xff]
  %22 = vst [vmem:[%s19] sm:$0xff] %v21
  %s23 = scalar_lea.vmem %s2, 40
  %s24 = scalar_lea.vmem %s0, 40
  %v25 = vld [vmem:[%s24] sm:$0xff]
  %26 = vst [vmem:[%s23] sm:$0xff] %v25
  %s27 = scalar_lea.vmem %s2, 48
  %s28 = scalar_lea.vmem %s0, 48
  %v29 = vld [vmem:[%s28] sm:$0xff]
  %30 = vst [vmem:[%s27] sm:$0xff] %v29
  %s31 = scalar_lea.vmem %s2, 56
  %s32 = scalar_lea.vmem %s0, 56
  %v33 = vld [vmem:[%s32] sm:$0xff]
  %34 = vst [vmem:[%s31] sm:$0xff] %v33
  %s35 = scalar_lea.vmem %s2, 64
  %s36 = scalar_lea.vmem %s0, 64
  %v37 = vld [vmem:[%s36] sm:$0xff]
  %38 = vst [vmem:[%s35] sm:$0xff] %v37
  %s39 = scalar_lea.vmem %s2, 72
  %s40 = scalar_lea.vmem %s0, 72
  %v41 = vld [vmem:[%s40] sm:$0xff]
  %42 = vst [vmem:[%s39] sm:$0xff] %v41
  %s43 = scalar_lea.vmem %s2, 80
  %s44 = scalar_lea.vmem %s0, 80
  %v45 = vld [vmem:[%s44] sm:$0xff]
  %46 = vst [vmem:[%s43] sm:$0xff] %v45
  %s47 = scalar_lea.vmem %s2, 88
  %s48 = scalar_lea.vmem %s0, 88
  %v49 = vld [vmem:[%s48] sm:$0xff]
  %50 = vst [vmem:[%s47] sm:$0xff] %v49
  %s51 = scalar_lea.vmem %s2, 96
  %s52 = scalar_lea.vmem %s0, 96
  %v53 = vld [vmem:[%s52] sm:$0xff]
  %54 = vst [vmem:[%s51] sm:$0xff] %v53
  %s55 = scalar_lea.vmem %s2, 104
  %s56 = scalar_lea.vmem %s0, 104
  %v57 = vld [vmem:[%s56] sm:$0xff]
  %58 = vst [vmem:[%s55] sm:$0xff] %v57
  %s59 = scalar_lea.vmem %s2, 112
  %s60 = scalar_lea.vmem %s0, 112
  %v61 = vld [vmem:[%s60] sm:$0xff]
  %62 = vst [vmem:[%s59] sm:$0xff] %v61
  %s63 = scalar_lea.vmem %s2, 120
  %s64 = scalar_lea.vmem %s0, 120
  %v65 = vld [vmem:[%s64] sm:$0xff]
  %66 = vst [vmem:[%s63] sm:$0xff] %v65
  %s67 = scalar_lea.vmem %s2, 128
  %s68 = scalar_lea.vmem %s0, 128
  %v69 = vld [vmem:[%s68] sm:$0xff]
  %70 = vst [vmem:[%s67] sm:$0xff] %v69
  %s71 = scalar_lea.vmem %s2, 136
  %s72 = scalar_lea.vmem %s0, 136
  %v73 = vld [vmem:[%s72] sm:$0xff]
  %74 = vst [vmem:[%s71] sm:$0xff] %v73
  %s75 = scalar_lea.vmem %s2, 144
  %s76 = scalar_lea.vmem %s0, 144
  %v77 = vld [vmem:[%s76] sm:$0xff]
  %78 = vst [vmem:[%s75] sm:$0xff] %v77
  %s79 = scalar_lea.vmem %s2, 152
  %s80 = scalar_lea.vmem %s0, 152
  %v81 = vld [vmem:[%s80] sm:$0xff]
  %82 = vst [vmem:[%s79] sm:$0xff] %v81
  %s83 = scalar_lea.vmem %s2, 160
  %s84 = scalar_lea.vmem %s0, 160
  %v85 = vld [vmem:[%s84] sm:$0xff]
  %86 = vst [vmem:[%s83] sm:$0xff] %v85
  %s87 = scalar_lea.vmem %s2, 168
  %s88 = scalar_lea.vmem %s0, 168
  %v89 = vld [vmem:[%s88] sm:$0xff]
  %90 = vst [vmem:[%s87] sm:$0xff] %v89
  %s91 = scalar_lea.vmem %s2, 176
  %s92 = scalar_lea.vmem %s0, 176
  %v93 = vld [vmem:[%s92] sm:$0xff]
  %94 = vst [vmem:[%s91] sm:$0xff] %v93
  %s95 = scalar_lea.vmem %s2, 184
  %s96 = scalar_lea.vmem %s0, 184
  %v97 = vld [vmem:[%s96] sm:$0xff]
  %98 = vst [vmem:[%s95] sm:$0xff] %v97
  %s99 = scalar_lea.vmem %s2, 192
  %s100 = scalar_lea.vmem %s0, 192
  %v101 = vld [vmem:[%s100] sm:$0xff]
  %102 = vst [vmem:[%s99] sm:$0xff] %v101
  %s103 = scalar_lea.vmem %s2, 200
  %s104 = scalar_lea.vmem %s0, 200
  %v105 = vld [vmem:[%s104] sm:$0xff]
  %106 = vst [vmem:[%s103] sm:$0xff] %v105
  %s107 = scalar_lea.vmem %s2, 208
  %s108 = scalar_lea.vmem %s0, 208
  %v109 = vld [vmem:[%s108] sm:$0xff]
  %110 = vst [vmem:[%s107] sm:$0xff] %v109
  %s111 = scalar_lea.vmem %s2, 216
  %s112 = scalar_lea.vmem %s0, 216
  %v113 = vld [vmem:[%s112] sm:$0xff]
  %114 = vst [vmem:[%s111] sm:$0xff] %v113
  %s115 = scalar_lea.vmem %s2, 224
  %s116 = scalar_lea.vmem %s0, 224
  %v117 = vld [vmem:[%s116] sm:$0xff]
  %118 = vst [vmem:[%s115] sm:$0xff] %v117
  %s119 = scalar_lea.vmem %s2, 232
  %s120 = scalar_lea.vmem %s0, 232
  %v121 = vld [vmem:[%s120] sm:$0xff]
  %122 = vst [vmem:[%s119] sm:$0xff] %v121
  %s123 = scalar_lea.vmem %s2, 240
  %s124 = scalar_lea.vmem %s0, 240
  %v125 = vld [vmem:[%s124] sm:$0xff]
  %126 = vst [vmem:[%s123] sm:$0xff] %v125
  %s127 = scalar_lea.vmem %s2, 248
  %s128 = scalar_lea.vmem %s0, 248
  %v129 = vld [vmem:[%s128] sm:$0xff]
  %130 = vst [vmem:[%s127] sm:$0xff] %v129
  %s131 = scalar_lea.vmem %s2, 256
  %s132 = scalar_lea.vmem %s0, 256
  %v133 = vld [vmem:[%s132] sm:$0xff]
  %134 = vst [vmem:[%s131] sm:$0xff] %v133
  %s135 = scalar_lea.vmem %s2, 264
  %s136 = scalar_lea.vmem %s0, 264
  %v137 = vld [vmem:[%s136] sm:$0xff]
  %138 = vst [vmem:[%s135] sm:$0xff] %v137
  %s139 = scalar_lea.vmem %s2, 272
  %s140 = scalar_lea.vmem %s0, 272
  %v141 = vld [vmem:[%s140] sm:$0xff]
  %142 = vst [vmem:[%s139] sm:$0xff] %v141
  %s143 = scalar_lea.vmem %s2, 280
  %s144 = scalar_lea.vmem %s0, 280
  %v145 = vld [vmem:[%s144] sm:$0xff]
  %146 = vst [vmem:[%s143] sm:$0xff] %v145
  %s147 = scalar_lea.vmem %s2, 288
  %s148 = scalar_lea.vmem %s0, 288
  %v149 = vld [vmem:[%s148] sm:$0xff]
  %150 = vst [vmem:[%s147] sm:$0xff] %v149
  %s151 = scalar_lea.vmem %s2, 296
  %s152 = scalar_lea.vmem %s0, 296
  %v153 = vld [vmem:[%s152] sm:$0xff]
  %154 = vst [vmem:[%s151] sm:$0xff] %v153
  %s155 = scalar_lea.vmem %s2, 304
  %s156 = scalar_lea.vmem %s0, 304
  %v157 = vld [vmem:[%s156] sm:$0xff]
  %158 = vst [vmem:[%s155] sm:$0xff] %v157
  %s159 = scalar_lea.vmem %s2, 312
  %s160 = scalar_lea.vmem %s0, 312
  %v161 = vld [vmem:[%s160] sm:$0xff]
  %162 = vst [vmem:[%s159] sm:$0xff] %v161
  %s163 = scalar_lea.vmem %s2, 320
  %s164 = scalar_lea.vmem %s0, 320
  %v165 = vld [vmem:[%s164] sm:$0xff]
  %166 = vst [vmem:[%s163] sm:$0xff] %v165
  %s167 = scalar_lea.vmem %s2, 328
  %s168 = scalar_lea.vmem %s0, 328
  %v169 = vld [vmem:[%s168] sm:$0xff]
  %170 = vst [vmem:[%s167] sm:$0xff] %v169
  %s171 = scalar_lea.vmem %s2, 336
  %s172 = scalar_lea.vmem %s0, 336
  %v173 = vld [vmem:[%s172] sm:$0xff]
  %174 = vst [vmem:[%s171] sm:$0xff] %v173
  %s175 = scalar_lea.vmem %s2, 344
  %s176 = scalar_lea.vmem %s0, 344
  %v177 = vld [vmem:[%s176] sm:$0xff]
  %178 = vst [vmem:[%s175] sm:$0xff] %v177
  %s179 = scalar_lea.vmem %s2, 352
  %s180 = scalar_lea.vmem %s0, 352
  %v181 = vld [vmem:[%s180] sm:$0xff]
  %182 = vst [vmem:[%s179] sm:$0xff] %v181
  %s183 = scalar_lea.vmem %s2, 360
  %s184 = scalar_lea.vmem %s0, 360
  %v185 = vld [vmem:[%s184] sm:$0xff]
  %186 = vst [vmem:[%s183] sm:$0xff] %v185
  %s187 = scalar_lea.vmem %s2, 368
  %s188 = scalar_lea.vmem %s0, 368
  %v189 = vld [vmem:[%s188] sm:$0xff]
  %190 = vst [vmem:[%s187] sm:$0xff] %v189
  %s191 = scalar_lea.vmem %s2, 376
  %s192 = scalar_lea.vmem %s0, 376
  %v193 = vld [vmem:[%s192] sm:$0xff]
  %194 = vst [vmem:[%s191] sm:$0xff] %v193
  %s195 = scalar_lea.vmem %s2, 384
  %s196 = scalar_lea.vmem %s0, 384
  %v197 = vld [vmem:[%s196] sm:$0xff]
  %198 = vst [vmem:[%s195] sm:$0xff] %v197
  %s199 = scalar_lea.vmem %s2, 392
  %s200 = scalar_lea.vmem %s0, 392
  %v201 = vld [vmem:[%s200] sm:$0xff]
  %202 = vst [vmem:[%s199] sm:$0xff] %v201
  %s203 = scalar_lea.vmem %s2, 400
  %s204 = scalar_lea.vmem %s0, 400
  %v205 = vld [vmem:[%s204] sm:$0xff]
  %206 = vst [vmem:[%s203] sm:$0xff] %v205
  %s207 = scalar_lea.vmem %s2, 408
  %s208 = scalar_lea.vmem %s0, 408
  %v209 = vld [vmem:[%s208] sm:$0xff]
  %210 = vst [vmem:[%s207] sm:$0xff] %v209
  %s211 = scalar_lea.vmem %s2, 416
  %s212 = scalar_lea.vmem %s0, 416
  %v213 = vld [vmem:[%s212] sm:$0xff]
  %214 = vst [vmem:[%s211] sm:$0xff] %v213
  %s215 = scalar_lea.vmem %s2, 424
  %s216 = scalar_lea.vmem %s0, 424
  %v217 = vld [vmem:[%s216] sm:$0xff]
  %218 = vst [vmem:[%s215] sm:$0xff] %v217
  %s219 = scalar_lea.vmem %s2, 432
  %s220 = scalar_lea.vmem %s0, 432
  %v221 = vld [vmem:[%s220] sm:$0xff]
  %222 = vst [vmem:[%s219] sm:$0xff] %v221
  %s223 = scalar_lea.vmem %s2, 440
  %s224 = scalar_lea.vmem %s0, 440
  %v225 = vld [vmem:[%s224] sm:$0xff]
  %226 = vst [vmem:[%s223] sm:$0xff] %v225
  %s227 = scalar_lea.vmem %s2, 448
  %s228 = scalar_lea.vmem %s0, 448
  %v229 = vld [vmem:[%s228] sm:$0xff]
  %230 = vst [vmem:[%s227] sm:$0xff] %v229
  %s231 = scalar_lea.vmem %s2, 456
  %s232 = scalar_lea.vmem %s0, 456
  %v233 = vld [vmem:[%s232] sm:$0xff]
  %234 = vst [vmem:[%s231] sm:$0xff] %v233
  %s235 = scalar_lea.vmem %s2, 464
  %s236 = scalar_lea.vmem %s0, 464
  %v237 = vld [vmem:[%s236] sm:$0xff]
  %238 = vst [vmem:[%s235] sm:$0xff] %v237
  %s239 = scalar_lea.vmem %s2, 472
  %s240 = scalar_lea.vmem %s0, 472
  %v241 = vld [vmem:[%s240] sm:$0xff]
  %242 = vst [vmem:[%s239] sm:$0xff] %v241
  %s243 = scalar_lea.vmem %s2, 480
  %s244 = scalar_lea.vmem %s0, 480
  %v245 = vld [vmem:[%s244] sm:$0xff]
  %246 = vst [vmem:[%s243] sm:$0xff] %v245
  %s247 = scalar_lea.vmem %s2, 488
  %s248 = scalar_lea.vmem %s0, 488
  %v249 = vld [vmem:[%s248] sm:$0xff]
  %250 = vst [vmem:[%s247] sm:$0xff] %v249
  %s251 = scalar_lea.vmem %s2, 496
  %s252 = scalar_lea.vmem %s0, 496
  %v253 = vld [vmem:[%s252] sm:$0xff]
  %254 = vst [vmem:[%s251] sm:$0xff] %v253
  %s255 = scalar_lea.vmem %s2, 504
  %s256 = scalar_lea.vmem %s0, 504
  %v257 = vld [vmem:[%s256] sm:$0xff]
  %258 = vst [vmem:[%s255] sm:$0xff] %v257
  %v259 = vld [vmem:[%s1] sm:$0xff]
  %260 = vst [vmem:[%s4] sm:$0xff] %v259
  %s261 = scalar_lea.vmem %s4, 8
  %s262 = scalar_lea.vmem %s1, 8
  %v263 = vld [vmem:[%s262] sm:$0xff]
  %264 = vst [vmem:[%s261] sm:$0xff] %v263
  %s265 = scalar_lea.vmem %s4, 16
  %s266 = scalar_lea.vmem %s1, 16
  %v267 = vld [vmem:[%s266] sm:$0xff]
  %268 = vst [vmem:[%s265] sm:$0xff] %v267
  %s269 = scalar_lea.vmem %s4, 24
  %s270 = scalar_lea.vmem %s1, 24
  %v271 = vld [vmem:[%s270] sm:$0xff]
  %272 = vst [vmem:[%s269] sm:$0xff] %v271
  %s273 = scalar_lea.vmem %s4, 32
  %s274 = scalar_lea.vmem %s1, 32
  %v275 = vld [vmem:[%s274] sm:$0xff]
  %276 = vst [vmem:[%s273] sm:$0xff] %v275
  %s277 = scalar_lea.vmem %s4, 40
  %s278 = scalar_lea.vmem %s1, 40
  %v279 = vld [vmem:[%s278] sm:$0xff]
  %280 = vst [vmem:[%s277] sm:$0xff] %v279
  %s281 = scalar_lea.vmem %s4, 48
  %s282 = scalar_lea.vmem %s1, 48
  %v283 = vld [vmem:[%s282] sm:$0xff]
  %284 = vst [vmem:[%s281] sm:$0xff] %v283
  %s285 = scalar_lea.vmem %s4, 56
  %s286 = scalar_lea.vmem %s1, 56
  %v287 = vld [vmem:[%s286] sm:$0xff]
  %288 = vst [vmem:[%s285] sm:$0xff] %v287
  %s289 = scalar_lea.vmem %s4, 64
  %s290 = scalar_lea.vmem %s1, 64
  %v291 = vld [vmem:[%s290] sm:$0xff]
  %292 = vst [vmem:[%s289] sm:$0xff] %v291
  %s293 = scalar_lea.vmem %s4, 72
  %s294 = scalar_lea.vmem %s1, 72
  %v295 = vld [vmem:[%s294] sm:$0xff]
  %296 = vst [vmem:[%s293] sm:$0xff] %v295
  %s297 = scalar_lea.vmem %s4, 80
  %s298 = scalar_lea.vmem %s1, 80
  %v299 = vld [vmem:[%s298] sm:$0xff]
  %300 = vst [vmem:[%s297] sm:$0xff] %v299
  %s301 = scalar_lea.vmem %s4, 88
  %s302 = scalar_lea.vmem %s1, 88
  %v303 = vld [vmem:[%s302] sm:$0xff]
  %304 = vst [vmem:[%s301] sm:$0xff] %v303
  %s305 = scalar_lea.vmem %s4, 96
  %s306 = scalar_lea.vmem %s1, 96
  %v307 = vld [vmem:[%s306] sm:$0xff]
  %308 = vst [vmem:[%s305] sm:$0xff] %v307
  %s309 = scalar_lea.vmem %s4, 104
  %s310 = scalar_lea.vmem %s1, 104
  %v311 = vld [vmem:[%s310] sm:$0xff]
  %312 = vst [vmem:[%s309] sm:$0xff] %v311
  %s313 = scalar_lea.vmem %s4, 112
  %s314 = scalar_lea.vmem %s1, 112
  %v315 = vld [vmem:[%s314] sm:$0xff]
  %316 = vst [vmem:[%s313] sm:$0xff] %v315
  %s317 = scalar_lea.vmem %s4, 120
  %s318 = scalar_lea.vmem %s1, 120
  %v319 = vld [vmem:[%s318] sm:$0xff]
  %320 = vst [vmem:[%s317] sm:$0xff] %v319
  %s321 = scalar_lea.vmem %s4, 128
  %s322 = scalar_lea.vmem %s1, 128
  %v323 = vld [vmem:[%s322] sm:$0xff]
  %324 = vst [vmem:[%s321] sm:$0xff] %v323
  %s325 = scalar_lea.vmem %s4, 136
  %s326 = scalar_lea.vmem %s1, 136
  %v327 = vld [vmem:[%s326] sm:$0xff]
  %328 = vst [vmem:[%s325] sm:$0xff] %v327
  %s329 = scalar_lea.vmem %s4, 144
  %s330 = scalar_lea.vmem %s1, 144
  %v331 = vld [vmem:[%s330] sm:$0xff]
  %332 = vst [vmem:[%s329] sm:$0xff] %v331
  %s333 = scalar_lea.vmem %s4, 152
  %s334 = scalar_lea.vmem %s1, 152
  %v335 = vld [vmem:[%s334] sm:$0xff]
  %336 = vst [vmem:[%s333] sm:$0xff] %v335
  %s337 = scalar_lea.vmem %s4, 160
  %s338 = scalar_lea.vmem %s1, 160
  %v339 = vld [vmem:[%s338] sm:$0xff]
  %340 = vst [vmem:[%s337] sm:$0xff] %v339
  %s341 = scalar_lea.vmem %s4, 168
  %s342 = scalar_lea.vmem %s1, 168
  %v343 = vld [vmem:[%s342] sm:$0xff]
  %344 = vst [vmem:[%s341] sm:$0xff] %v343
  %s345 = scalar_lea.vmem %s4, 176
  %s346 = scalar_lea.vmem %s1, 176
  %v347 = vld [vmem:[%s346] sm:$0xff]
  %348 = vst [vmem:[%s345] sm:$0xff] %v347
  %s349 = scalar_lea.vmem %s4, 184
  %s350 = scalar_lea.vmem %s1, 184
  %v351 = vld [vmem:[%s350] sm:$0xff]
  %352 = vst [vmem:[%s349] sm:$0xff] %v351
  %s353 = scalar_lea.vmem %s4, 192
  %s354 = scalar_lea.vmem %s1, 192
  %v355 = vld [vmem:[%s354] sm:$0xff]
  %356 = vst [vmem:[%s353] sm:$0xff] %v355
  %s357 = scalar_lea.vmem %s4, 200
  %s358 = scalar_lea.vmem %s1, 200
  %v359 = vld [vmem:[%s358] sm:$0xff]
  %360 = vst [vmem:[%s357] sm:$0xff] %v359
  %s361 = scalar_lea.vmem %s4, 208
  %s362 = scalar_lea.vmem %s1, 208
  %v363 = vld [vmem:[%s362] sm:$0xff]
  %364 = vst [vmem:[%s361] sm:$0xff] %v363
  %s365 = scalar_lea.vmem %s4, 216
  %s366 = scalar_lea.vmem %s1, 216
  %v367 = vld [vmem:[%s366] sm:$0xff]
  %368 = vst [vmem:[%s365] sm:$0xff] %v367
  %s369 = scalar_lea.vmem %s4, 224
  %s370 = scalar_lea.vmem %s1, 224
  %v371 = vld [vmem:[%s370] sm:$0xff]
  %372 = vst [vmem:[%s369] sm:$0xff] %v371
  %s373 = scalar_lea.vmem %s4, 232
  %s374 = scalar_lea.vmem %s1, 232
  %v375 = vld [vmem:[%s374] sm:$0xff]
  %376 = vst [vmem:[%s373] sm:$0xff] %v375
  %s377 = scalar_lea.vmem %s4, 240
  %s378 = scalar_lea.vmem %s1, 240
  %v379 = vld [vmem:[%s378] sm:$0xff]
  %380 = vst [vmem:[%s377] sm:$0xff] %v379
  %s381 = scalar_lea.vmem %s4, 248
  %s382 = scalar_lea.vmem %s1, 248
  %v383 = vld [vmem:[%s382] sm:$0xff]
  %384 = vst [vmem:[%s381] sm:$0xff] %v383
  %s385 = scalar_lea.vmem %s4, 256
  %s386 = scalar_lea.vmem %s1, 256
  %v387 = vld [vmem:[%s386] sm:$0xff]
  %388 = vst [vmem:[%s385] sm:$0xff] %v387
  %s389 = scalar_lea.vmem %s4, 264
  %s390 = scalar_lea.vmem %s1, 264
  %v391 = vld [vmem:[%s390] sm:$0xff]
  %392 = vst [vmem:[%s389] sm:$0xff] %v391
  %s393 = scalar_lea.vmem %s4, 272
  %s394 = scalar_lea.vmem %s1, 272
  %v395 = vld [vmem:[%s394] sm:$0xff]
  %396 = vst [vmem:[%s393] sm:$0xff] %v395
  %s397 = scalar_lea.vmem %s4, 280
  %s398 = scalar_lea.vmem %s1, 280
  %v399 = vld [vmem:[%s398] sm:$0xff]
  %400 = vst [vmem:[%s397] sm:$0xff] %v399
  %s401 = scalar_lea.vmem %s4, 288
  %s402 = scalar_lea.vmem %s1, 288
  %v403 = vld [vmem:[%s402] sm:$0xff]
  %404 = vst [vmem:[%s401] sm:$0xff] %v403
  %s405 = scalar_lea.vmem %s4, 296
  %s406 = scalar_lea.vmem %s1, 296
  %v407 = vld [vmem:[%s406] sm:$0xff]
  %408 = vst [vmem:[%s405] sm:$0xff] %v407
  %s409 = scalar_lea.vmem %s4, 304
  %s410 = scalar_lea.vmem %s1, 304
  %v411 = vld [vmem:[%s410] sm:$0xff]
  %412 = vst [vmem:[%s409] sm:$0xff] %v411
  %s413 = scalar_lea.vmem %s4, 312
  %s414 = scalar_lea.vmem %s1, 312
  %v415 = vld [vmem:[%s414] sm:$0xff]
  %416 = vst [vmem:[%s413] sm:$0xff] %v415
  %s417 = scalar_lea.vmem %s4, 320
  %s418 = scalar_lea.vmem %s1, 320
  %v419 = vld [vmem:[%s418] sm:$0xff]
  %420 = vst [vmem:[%s417] sm:$0xff] %v419
  %s421 = scalar_lea.vmem %s4, 328
  %s422 = scalar_lea.vmem %s1, 328
  %v423 = vld [vmem:[%s422] sm:$0xff]
  %424 = vst [vmem:[%s421] sm:$0xff] %v423
  %s425 = scalar_lea.vmem %s4, 336
  %s426 = scalar_lea.vmem %s1, 336
  %v427 = vld [vmem:[%s426] sm:$0xff]
  %428 = vst [vmem:[%s425] sm:$0xff] %v427
  %s429 = scalar_lea.vmem %s4, 344
  %s430 = scalar_lea.vmem %s1, 344
  %v431 = vld [vmem:[%s430] sm:$0xff]
  %432 = vst [vmem:[%s429] sm:$0xff] %v431
  %s433 = scalar_lea.vmem %s4, 352
  %s434 = scalar_lea.vmem %s1, 352
  %v435 = vld [vmem:[%s434] sm:$0xff]
  %436 = vst [vmem:[%s433] sm:$0xff] %v435
  %s437 = scalar_lea.vmem %s4, 360
  %s438 = scalar_lea.vmem %s1, 360
  %v439 = vld [vmem:[%s438] sm:$0xff]
  %440 = vst [vmem:[%s437] sm:$0xff] %v439
  %s441 = scalar_lea.vmem %s4, 368
  %s442 = scalar_lea.vmem %s1, 368
  %v443 = vld [vmem:[%s442] sm:$0xff]
  %444 = vst [vmem:[%s441] sm:$0xff] %v443
  %s445 = scalar_lea.vmem %s4, 376
  %s446 = scalar_lea.vmem %s1, 376
  %v447 = vld [vmem:[%s446] sm:$0xff]
  %448 = vst [vmem:[%s445] sm:$0xff] %v447
  %s449 = scalar_lea.vmem %s4, 384
  %s450 = scalar_lea.vmem %s1, 384
  %v451 = vld [vmem:[%s450] sm:$0xff]
  %452 = vst [vmem:[%s449] sm:$0xff] %v451
  %s453 = scalar_lea.vmem %s4, 392
  %s454 = scalar_lea.vmem %s1, 392
  %v455 = vld [vmem:[%s454] sm:$0xff]
  %456 = vst [vmem:[%s453] sm:$0xff] %v455
  %s457 = scalar_lea.vmem %s4, 400
  %s458 = scalar_lea.vmem %s1, 400
  %v459 = vld [vmem:[%s458] sm:$0xff]
  %460 = vst [vmem:[%s457] sm:$0xff] %v459
  %s461 = scalar_lea.vmem %s4, 408
  %s462 = scalar_lea.vmem %s1, 408
  %v463 = vld [vmem:[%s462] sm:$0xff]
  %464 = vst [vmem:[%s461] sm:$0xff] %v463
  %s465 = scalar_lea.vmem %s4, 416
  %s466 = scalar_lea.vmem %s1, 416
  %v467 = vld [vmem:[%s466] sm:$0xff]
  %468 = vst [vmem:[%s465] sm:$0xff] %v467
  %s469 = scalar_lea.vmem %s4, 424
  %s470 = scalar_lea.vmem %s1, 424
  %v471 = vld [vmem:[%s470] sm:$0xff]
  %472 = vst [vmem:[%s469] sm:$0xff] %v471
  %s473 = scalar_lea.vmem %s4, 432
  %s474 = scalar_lea.vmem %s1, 432
  %v475 = vld [vmem:[%s474] sm:$0xff]
  %476 = vst [vmem:[%s473] sm:$0xff] %v475
  %s477 = scalar_lea.vmem %s4, 440
  %s478 = scalar_lea.vmem %s1, 440
  %v479 = vld [vmem:[%s478] sm:$0xff]
  %480 = vst [vmem:[%s477] sm:$0xff] %v479
  %s481 = scalar_lea.vmem %s4, 448
  %s482 = scalar_lea.vmem %s1, 448
  %v483 = vld [vmem:[%s482] sm:$0xff]
  %484 = vst [vmem:[%s481] sm:$0xff] %v483
  %s485 = scalar_lea.vmem %s4, 456
  %s486 = scalar_lea.vmem %s1, 456
  %v487 = vld [vmem:[%s486] sm:$0xff]
  %488 = vst [vmem:[%s485] sm:$0xff] %v487
  %s489 = scalar_lea.vmem %s4, 464
  %s490 = scalar_lea.vmem %s1, 464
  %v491 = vld [vmem:[%s490] sm:$0xff]
  %492 = vst [vmem:[%s489] sm:$0xff] %v491
  %s493 = scalar_lea.vmem %s4, 472
  %s494 = scalar_lea.vmem %s1, 472
  %v495 = vld [vmem:[%s494] sm:$0xff]
  %496 = vst [vmem:[%s493] sm:$0xff] %v495
  %s497 = scalar_lea.vmem %s4, 480
  %s498 = scalar_lea.vmem %s1, 480
  %v499 = vld [vmem:[%s498] sm:$0xff]
  %500 = vst [vmem:[%s497] sm:$0xff] %v499
  %s501 = scalar_lea.vmem %s4, 488
  %s502 = scalar_lea.vmem %s1, 488
  %v503 = vld [vmem:[%s502] sm:$0xff]
  %504 = vst [vmem:[%s501] sm:$0xff] %v503
  %s505 = scalar_lea.vmem %s4, 496
  %s506 = scalar_lea.vmem %s1, 496
  %v507 = vld [vmem:[%s506] sm:$0xff]
  %508 = vst [vmem:[%s505] sm:$0xff] %v507
  %s509 = scalar_lea.vmem %s4, 504
  %s510 = scalar_lea.vmem %s1, 504
  %v511 = vld [vmem:[%s510] sm:$0xff]
  %512 = vst [vmem:[%s509] sm:$0xff] %v511

// kernel: cconv2d.1
$region0: #{cconv2d.1}
  #allocation0 [shape = 'u32[]', space=smem, size = 0x4, offset = 0x4, fixed_abs, tag = 'smem constant byte address 0x4 - core index']
  #allocation1 [shape = 'u32[144,128]{1,0:T(1,128)}', space=vmem, size = 0x12000, scoped, tag = 'internal scratch']
  %s0 = inlined_call_operand.vmem [shape: f32[1,2,18,18,8], index: 0, kind: input, shape index: {}]
  %s1 = inlined_call_operand.vmem [shape: f32[9,8,128], index: 1, kind: input, shape index: {}]
  %s2 = inlined_call_operand.vmem [shape: f32[1,128], index: 2, kind: input, shape index: {}]
  %s3 = inlined_call_operand.vmem [shape: f32[2,16,16,128], index: 3, kind: output, shape index: {}]
  %s4 = sld [smem:[#allocation0]]
  $region45: #{cconv2d.1} parent=0
    _
  %s6 = ssub.s32 1, %s4
  %s7 = scalar_select 0, %s6, %s4
  loop: start=0, step=1, limit=4
  $region2: #{cconv2d.1} parent=0 // loop_pre_header
    _
  $region3: #{cconv2d.1} parent=0 // loop_header
    %s9 = sphi 0, %s13
    %p10 = scmp.ge.s32.totalorder %s9, 4
    %s16 = sphi 0, %s28
    %s17 = sphi 0, %s24
    %s18 = sphi 0, %s16
    %s19 = sphi 0, %s17
    %s20 = sphi 0, %s18
    %s21 = sphi 0, %s19
    %s31 = sphi 0, %s33
    %s34 = sphi 0, %s31
    %s35 = sphi 0, %s34
    %s51 = sphi 0, %s35
    %s57 = sphi 0, %s59
    %s60 = sphi 0, %s57
    %s61 = sphi 0, %s60
    %s77 = sphi 0, %s61
    %s83 = sphi 0, %s85
    %s86 = sphi 0, %s83
    %s87 = sphi 0, %s86
    %s103 = sphi 0, %s87
    %s111 = sphi 0, %s113
    %s114 = sphi 0, %s111
    %s115 = sphi 0, %s114
    %s131 = sphi 0, %s115
  $region4: #{cconv2d.1} parent=0 // loop_header_branch
    %12 = sbr.rel (%p10) target = $region8
  $region5: #{cconv2d.1} parent=0 // loop_body
    %s14 = ssub.s32 %s9, 1
    %s15 = ssub.s32 %s9, 2
    %s22 = sadd.s32 1, %s17
    %p23 = scmp.ge.s32.totalorder %s22, 1
    %s24 = scalar_select %p23, 0, %s22
    %s25 = sadd.s32 1, %s16
    %s26 = scalar_select %p23, %s25, %s16
    %p27 = scmp.ge.s32.totalorder %s26, 2
    %s28 = scalar_select %p27, 0, %s26
    %s29 = ssub.s32 %s16, %s28
    %p30 = scmp.eq.s32.totalorder %s29, 0
    %s32 = sadd.s32 %s31, 1
    %s33 = scalar_select %p30, %s31, %s32
    %p36 = pneg %p30
    %p37 = scmp.eq.s32.totalorder %s9, 1
    %p38 = por %p36, %p37
    %p39 = scmp.ne.s32.totalorder %s31, %s34
    %p40 = scmp.eq.s32.totalorder %s9, 0
    %p41 = por %p39, %p40
    %p42 = scmp.ne.s32.totalorder %s31, %s34
    %p43 = scmp.eq.s32.totalorder %s14, 1
    %p44 = por %p42, %p43
    %p45 = scmp.ne.s32.totalorder %s34, %s35
    %p46 = scmp.eq.s32.totalorder %s14, 0
    %p47 = por %p45, %p46
    %p48 = scmp.ne.s32.totalorder %s34, %s35
    %p49 = scmp.eq.s32.totalorder %s15, 1
    %p50 = por %p48, %p49
    %p52 = scmp.ne.s32.totalorder %s35, %s51
    %p53 = scmp.eq.s32.totalorder %s15, 0
    %p54 = por %p52, %p53
    %s55 = ssub.s32 %s17, %s24
    %p56 = scmp.eq.s32.totalorder %s55, 0
    %s58 = sadd.s32 %s57, 1
    %s59 = scalar_select %p56, %s57, %s58
    %p62 = pneg %p56
    %p63 = scmp.eq.s32.totalorder %s9, 1
    %p64 = por %p62, %p63
    %p65 = scmp.ne.s32.totalorder %s57, %s60
    %p66 = scmp.eq.s32.totalorder %s9, 0
    %p67 = por %p65, %p66
    %p68 = scmp.ne.s32.totalorder %s57, %s60
    %p69 = scmp.eq.s32.totalorder %s14, 1
    %p70 = por %p68, %p69
    %p71 = scmp.ne.s32.totalorder %s60, %s61
    %p72 = scmp.eq.s32.totalorder %s14, 0
    %p73 = por %p71, %p72
    %p74 = scmp.ne.s32.totalorder %s60, %s61
    %p75 = scmp.eq.s32.totalorder %s15, 1
    %p76 = por %p74, %p75
    %p78 = scmp.ne.s32.totalorder %s61, %s77
    %p79 = scmp.eq.s32.totalorder %s15, 0
    %p80 = por %p78, %p79
    %s81 = ssub.s32 %s17, %s24
    %p82 = scmp.eq.s32.totalorder %s81, 0
    %s84 = sadd.s32 %s83, 1
    %s85 = scalar_select %p82, %s83, %s84
    %p88 = pneg %p82
    %p89 = scmp.eq.s32.totalorder %s9, 1
    %p90 = por %p88, %p89
    %p91 = scmp.ne.s32.totalorder %s83, %s86
    %p92 = scmp.eq.s32.totalorder %s9, 0
    %p93 = por %p91, %p92
    %p94 = scmp.ne.s32.totalorder %s83, %s86
    %p95 = scmp.eq.s32.totalorder %s14, 1
    %p96 = por %p94, %p95
    %p97 = scmp.ne.s32.totalorder %s86, %s87
    %p98 = scmp.eq.s32.totalorder %s14, 0
    %p99 = por %p97, %p98
    %p100 = scmp.ne.s32.totalorder %s86, %s87
    %p101 = scmp.eq.s32.totalorder %s15, 1
    %p102 = por %p100, %p101
    %p104 = scmp.ne.s32.totalorder %s87, %s103
    %p105 = scmp.eq.s32.totalorder %s15, 0
    %p106 = por %p104, %p105
    %s107 = ssub.s32 %s16, %s28
    %s108 = ssub.s32 %s17, %s24
    %s109 = sor.u32 %s107, %s108
    %p110 = scmp.eq.s32.totalorder %s109, 0
    %s112 = sadd.s32 %s111, 1
    %s113 = scalar_select %p110, %s111, %s112
    %p116 = pneg %p110
    %p117 = scmp.eq.s32.totalorder %s9, 1
    %p118 = por %p116, %p117
    %p119 = scmp.ne.s32.totalorder %s111, %s114
    %p120 = scmp.eq.s32.totalorder %s9, 0
    %p121 = por %p119, %p120
    %p122 = scmp.ne.s32.totalorder %s111, %s114
    %p123 = scmp.eq.s32.totalorder %s14, 1
    %p124 = por %p122, %p123
    %p125 = scmp.ne.s32.totalorder %s114, %s115
    %p126 = scmp.eq.s32.totalorder %s14, 0
    %p127 = por %p125, %p126
    %p128 = scmp.ne.s32.totalorder %s114, %s115
    %p129 = scmp.eq.s32.totalorder %s15, 1
    %p130 = por %p128, %p129
    %p132 = scmp.ne.s32.totalorder %s115, %s131
    %p133 = scmp.eq.s32.totalorder %s15, 0
    %p134 = por %p132, %p133
    %p135 = scmp.le.s32.totalorder 1, %s9
    %p136 = scmp.lt.s32.totalorder %s9, 3
    %p137 = pnand %p135, %p136
    %p138 = pneg %p137
    // Predicated region
    $region9: #{cconv2d.1} parent=5 // pred_check
      _
    $region10: #{cconv2d.1} parent=5 // pred_check_branch
      %140 = sbr.rel (%p137) target = $region12
    $region11: #{cconv2d.1} parent=5 // pred_region
      %s141 = ssub.s32 %s9, 1
      // Predicated region
      $region13: #{cconv2d.1} parent=11 // pred_check
        %p142 = pneg %p73
      $region14: #{cconv2d.1} parent=11 // pred_check_branch
        %144 = sbr.rel (%p142) target = $region16
      $region15: #{cconv2d.1} parent=11 // pred_region
        %p145 = scmp.lt.s32.totalorder %s19, 0
        %s146 = scalar_select %p145, %s19, 0
        %s147 = smul.addr %s146, 8
        %s148 = scalar_lea.vmem %s1, %s147
      $region16: #{cconv2d.1} parent=11 // pred_fallthru
        _
      // Predicated region
      $region17: #{cconv2d.1} parent=11 // pred_check
        %p149 = pneg %p99
      $region18: #{cconv2d.1} parent=11 // pred_check_branch
        %151 = sbr.rel (%p149) target = $region20
      $region19: #{cconv2d.1} parent=11 // pred_region
        %p152 = scmp.lt.s32.totalorder %s19, 0
        %s153 = scalar_select %p152, %s19, 0
        %s154 = scalar_lea.vmem %s2, %s153
      $region20: #{cconv2d.1} parent=11 // pred_fallthru
        _
    $region12: #{cconv2d.1} parent=5 // pred_fallthru
      _
    %p155 = scmp.lt.s32.totalorder %s9, 2
    // Predicated region
    $region21: #{cconv2d.1} parent=5 // pred_check
      %p156 = pneg %p155
    $region22: #{cconv2d.1} parent=5 // pred_check_branch
      %158 = sbr.rel (%p156) target = $region24
    $region23: #{cconv2d.1} parent=5 // pred_region
      // Predicated region
      $region25: #{cconv2d.1} parent=23 // pred_check
        %p159 = pneg %p41
      $region26: #{cconv2d.1} parent=23 // pred_check_branch
        %161 = sbr.rel (%p159) target = $region28
      $region27: #{cconv2d.1} parent=23 // pred_region
        %p162 = scmp.lt.s32.totalorder %s16, 1
        %s163 = scalar_select %p162, %s16, 1
        %s164 = smul.addr %s163, 54
        %s165 = smul.addr %s164, 8
        %s166 = scalar_lea.vmem %s0, %s165
      $region28: #{cconv2d.1} parent=23 // pred_fallthru
        _
    $region24: #{cconv2d.1} parent=5 // pred_fallthru
      _
    %p167 = scmp.le.s32.totalorder 1, %s9
    %p168 = scmp.lt.s32.totalorder %s9, 3
    %p169 = pnand %p167, %p168
    %p170 = pneg %p169
    // Predicated region
    $region29: #{cconv2d.1} parent=5 // pred_check
      _
    $region30: #{cconv2d.1} parent=5 // pred_check_branch
      %172 = sbr.rel (%p169) target = $region32
    $region31: #{cconv2d.1} parent=5 // pred_region
      %s173 = ssub.s32 %s9, 1
      %p174 = scmp.lt.s32.totalorder %s18, 1
      %s175 = scalar_select %p174, %s18, 1
      %s176 = smul.addr %s175, 54
      %s177 = smul.addr %s176, 8
      %s178 = scalar_lea.vmem %s0, %s177
      %p179 = pneg %p47
      %p180 = pneg %p44
      %p181 = scmp.lt.s32.totalorder %s19, 0
      %s182 = scalar_select %p181, %s19, 0
      %s183 = smul.addr %s182, 8
      %s184 = scalar_lea.vmem %s1, %s183
      %p185 = pneg %p73
      %p186 = pneg %p70
      %p187 = scmp.lt.s32.totalorder %s19, 0
      %s188 = scalar_select %p187, %s19, 0
      %s189 = scalar_lea.vmem %s2, %s188
      %p190 = pneg %p99
      %p191 = pneg %p96
      %p192 = pneg %p127
      %p193 = pneg %p124
      %p194 = scmp.lt.s32.totalorder %s18, 1
      %s195 = scalar_select %p194, %s18, 1
      %p196 = scmp.lt.s32.totalorder %s19, 0
      %s197 = scalar_select %p196, %s19, 0
      %s198 = smul.addr %s195, 32
      %s199 = sadd.s32 %s197, %s198
      %s200 = smul.addr %s199, 8
      %s201 = scalar_lea.vmem %s3, %s200
      %p202 = scmp.lt.s32.totalorder %s18, 1
      %s203 = scalar_select %p202, %s18, 1
      %s204 = smul.addr %s203, 54
      %s205 = smul.addr %s204, 8
      %s206 = scalar_lea.vmem %s0, %s205
      %p207 = scmp.lt.s32.totalorder %s19, 0
      %s208 = scalar_select %p207, %s19, 0
      %s209 = smul.addr %s208, 8
      %s210 = scalar_lea.vmem %s1, %s209
      %p211 = scmp.lt.s32.totalorder %s19, 0
      %s212 = scalar_select %p211, %s19, 0
      %s213 = scalar_lea.vmem %s2, %s212
      %p214 = scmp.lt.s32.totalorder %s18, 1
      %s215 = scalar_select %p214, %s18, 1
      %p216 = scmp.lt.s32.totalorder %s19, 0
      %s217 = scalar_select %p216, %s19, 0
      %s218 = smul.addr %s215, 32
      %s219 = sadd.s32 %s217, %s218
      %s220 = smul.addr %s219, 8
      %s221 = scalar_lea.vmem %s3, %s220
      %v222 = vld [vmem:[%s206] sm:$0xff]
      %v223 = vld [vmem:[%s206 + $0x8] sm:$0xff]
      %v224 = vld [vmem:[%s206 + $0x18] sm:$0xff]
      %v225 = vld [vmem:[%s206 + $0x20] sm:$0xff]
      %v226 = vld [vmem:[%s206 + $0x30] sm:$0xff]
      %v227 = vld [vmem:[%s206 + $0x38] sm:$0xff]
      %v228 = vld [vmem:[%s206 + $0x48] sm:$0xff]
      %v229 = vld [vmem:[%s206 + $0x50] sm:$0xff]
      %v230 = vld [vmem:[%s206 + $0x60] sm:$0xff]
      %v231 = vld [vmem:[%s206 + $0x68] sm:$0xff]
      %v232 = vld [vmem:[%s206 + $0x78] sm:$0xff]
      %v233 = vld [vmem:[%s206 + $0x80] sm:$0xff]
      %v234 = vld [vmem:[%s206 + $0x90] sm:$0xff]
      %v235 = vld [vmem:[%s206 + $0x98] sm:$0xff]
      %v236 = vld [vmem:[%s206 + $0xa8] sm:$0xff]
      %v237 = vld [vmem:[%s206 + $0xb0] sm:$0xff]
      %v238 = vld [vmem:[%s206 + $0xc0] sm:$0xff]
      %v239 = vld [vmem:[%s206 + $0xc8] sm:$0xff]
      %v240 = vld [vmem:[%s206 + $0xd8] sm:$0xff]
      %v241 = vld [vmem:[%s206 + $0xe0] sm:$0xff]
      %v242 = vld [vmem:[%s206 + $0xf0] sm:$0xff]
      %v243 = vld [vmem:[%s206 + $0xf8] sm:$0xff]
      %v244 = vld [vmem:[%s206 + $0x108] sm:$0xff]
      %v245 = vld [vmem:[%s206 + $0x110] sm:$0xff]
      %v246 = vld [vmem:[%s206 + $0x120] sm:$0xff]
      %v247 = vld [vmem:[%s206 + $0x128] sm:$0xff]
      %v248 = vld [vmem:[%s206 + $0x138] sm:$0xff]
      %v249 = vld [vmem:[%s206 + $0x140] sm:$0xff]
      %v250 = vld [vmem:[%s206 + $0x150] sm:$0xff]
      %v251 = vld [vmem:[%s206 + $0x158] sm:$0xff]
      %v252 = vld [vmem:[%s206 + $0x168] sm:$0xff]
      %v253 = vld [vmem:[%s206 + $0x170] sm:$0xff]
      %v254 = vld [vmem:[%s210] sm:$0xff]
      %v255 = vld [vmem:[%s206 + $0x1] sm:$0xff]
      %v256 = vld [vmem:[%s206 + $0x9] sm:$0xff]
      %v257 = vld [vmem:[%s206 + $0x19] sm:$0xff]
      %v258 = vld [vmem:[%s206 + $0x21] sm:$0xff]
      %v259 = vld [vmem:[%s206 + $0x31] sm:$0xff]
      %v260 = vld [vmem:[%s206 + $0x39] sm:$0xff]
      %v261 = vld [vmem:[%s206 + $0x49] sm:$0xff]
      %v262 = vld [vmem:[%s206 + $0x51] sm:$0xff]
      %v263 = vld [vmem:[%s206 + $0x61] sm:$0xff]
      %v264 = vld [vmem:[%s206 + $0x69] sm:$0xff]
      %v265 = vld [vmem:[%s206 + $0x79] sm:$0xff]
      %v266 = vld [vmem:[%s206 + $0x81] sm:$0xff]
      %v267 = vld [vmem:[%s206 + $0x91] sm:$0xff]
      %v268 = vld [vmem:[%s206 + $0x99] sm:$0xff]
      %v269 = vld [vmem:[%s206 + $0xa9] sm:$0xff]
      %v270 = vld [vmem:[%s206 + $0xb1] sm:$0xff]
      %v271 = vld [vmem:[%s206 + $0xc1] sm:$0xff]
      %v272 = vld [vmem:[%s206 + $0xc9] sm:$0xff]
      %v273 = vld [vmem:[%s206 + $0xd9] sm:$0xff]
      %v274 = vld [vmem:[%s206 + $0xe1] sm:$0xff]
      %v275 = vld [vmem:[%s206 + $0xf1] sm:$0xff]
      %v276 = vld [vmem:[%s206 + $0xf9] sm:$0xff]
      %v277 = vld [vmem:[%s206 + $0x109] sm:$0xff]
      %v278 = vld [vmem:[%s206 + $0x111] sm:$0xff]
      %v279 = vld [vmem:[%s206 + $0x121] sm:$0xff]
      %v280 = vld [vmem:[%s206 + $0x129] sm:$0xff]
      %v281 = vld [vmem:[%s206 + $0x139] sm:$0xff]
      %v282 = vld [vmem:[%s206 + $0x141] sm:$0xff]
      %v283 = vld [vmem:[%s206 + $0x151] sm:$0xff]
      %v284 = vld [vmem:[%s206 + $0x159] sm:$0xff]
      %v285 = vld [vmem:[%s206 + $0x169] sm:$0xff]
      %v286 = vld [vmem:[%s206 + $0x171] sm:$0xff]
      %s287 = scalar_lea.vmem %s210, 8
      %v288 = vld [vmem:[%s287] sm:$0xff]
      %vm289 = vcmask 64512
      %v291 = vsel %vm289, %v255, 0
      %v294 = vsel %vm289, %v256, 0
      %v297 = vsel %vm289, %v257, 0
      %v300 = vsel %vm289, %v258, 0
      %v303 = vsel %vm289, %v259, 0
      %v306 = vsel %vm289, %v260, 0
      %v309 = vsel %vm289, %v261, 0
      %v312 = vsel %vm289, %v262, 0
      %v315 = vsel %vm289, %v263, 0
      %v318 = vsel %vm289, %v264, 0
      %v321 = vsel %vm289, %v265, 0
      %v324 = vsel %vm289, %v266, 0
      %v327 = vsel %vm289, %v267, 0
      %v330 = vsel %vm289, %v268, 0
      %v333 = vsel %vm289, %v269, 0
      %v336 = vsel %vm289, %v270, 0
      %v339 = vsel %vm289, %v271, 0
      %v342 = vsel %vm289, %v272, 0
      %v345 = vsel %vm289, %v273, 0
      %v348 = vsel %vm289, %v274, 0
      %v351 = vsel %vm289, %v275, 0
      %v354 = vsel %vm289, %v276, 0
      %v357 = vsel %vm289, %v277, 0
      %v360 = vsel %vm289, %v278, 0
      %v363 = vsel %vm289, %v279, 0
      %v366 = vsel %vm289, %v280, 0
      %v369 = vsel %vm289, %v281, 0
      %v372 = vsel %vm289, %v282, 0
      %v375 = vsel %vm289, %v283, 0
      %v378 = vsel %vm289, %v284, 0
      %v381 = vsel %vm289, %v285, 0
      %v384 = vsel %vm289, %v286, 0
      %386 = vmatprep.subr.mxu0 0.0
      %387 = vmatpush1.msra.mxu0 %v288
      %388 = vmatprep.subr.mxu0 0.0
      %389 = vmatpush1.msra.mxu0 0.0
      %390 = vmatprep.subr.mxu0 0.0
      %391 = vmatpush1.msra.mxu0 0.0
      %392 = vmatprep.subr.mxu0 0.0
      %393 = vmatpush1.msra.mxu0 0.0
      %394 = vmatprep.subr.mxu0 0.0
      %395 = vmatpush1.msra.mxu0 0.0
      %396 = vmatprep.subr.mxu0 0.0
      %397 = vmatpush1.msra.mxu0 0.0
      %398 = vmatprep.subr.mxu0 0.0
      %399 = vmatpush1.msra.mxu0 0.0
      %400 = vmatprep.subr.mxu0 0.0
      %401 = vmatpush1.msra.mxu0 0.0
      %402 = vmatprep.subr.mxu0 0.0
      %403 = vmatpush1.msra.mxu0 0.0
      %404 = vmatprep.subr.mxu0 0.0
      %405 = vmatpush1.msra.mxu0 0.0
      %406 = vmatprep.subr.mxu0 0.0
      %407 = vmatpush1.msra.mxu0 0.0
      %408 = vmatprep.subr.mxu0 0.0
      %409 = vmatpush1.msra.mxu0 0.0
      %410 = vmatprep.subr.mxu0 0.0
      %411 = vmatpush1.msra.mxu0 0.0
      %412 = vmatprep.subr.mxu0 0.0
      %413 = vmatpush1.msra.mxu0 0.0
      %414 = vmatprep.subr.mxu0 0.0
      %415 = vmatpush1.msra.mxu0 0.0
      %416 = vmatprep.subr.mxu0 0.0
      %417 = vmatpush1.msra.mxu0 0.0
      %418 = vmatprep.subr.mxu0 0.0
      %419 = vmatpush1.msra.mxu0 0.0
      %420 = vmatprep.subr.mxu0 0.0
      %421 = vmatpush1.msra.mxu0 0.0
      %422 = vmatprep.subr.mxu0 0.0
      %423 = vmatpush1.msra.mxu0 0.0
      %424 = vmatprep.subr.mxu0 0.0
      %425 = vmatpush1.msra.mxu0 0.0
      %426 = vmatprep.subr.mxu0 0.0
      %427 = vmatpush1.msra.mxu0 0.0
      %428 = vmatprep.subr.mxu0 0.0
      %429 = vmatpush1.msra.mxu0 0.0
      %430 = vmatprep.subr.mxu0 0.0
      %431 = vmatpush1.msra.mxu0 0.0
      %432 = vmatprep.subr.mxu0 0.0
      %433 = vmatpush1.msra.mxu0 0.0
      %434 = vmatprep.subr.mxu0 0.0
      %435 = vmatpush1.msra.mxu0 0.0
      %436 = vmatprep.subr.mxu0 0.0
      %437 = vmatpush1.msra.mxu0 0.0
      %438 = vmatprep.subr.mxu0 0.0
      %439 = vmatpush1.msra.mxu0 0.0
      %440 = vmatprep.subr.mxu0 0.0
      %441 = vmatpush1.msra.mxu0 0.0
      %442 = vmatprep.subr.mxu0 0.0
      %443 = vmatpush1.msra.mxu0 0.0
      %444 = vmatprep.subr.mxu0 0.0
      %445 = vmatpush1.msra.mxu0 0.0
      %446 = vmatprep.subr.mxu0 0.0
      %447 = vmatpush1.msra.mxu0 0.0
      %448 = vmatprep.subr.mxu0 0.0
      %449 = vmatpush1.msra.mxu0 0.0
      %450 = vmatprep.mubr.f32.mxu0 0.0
      %451 = vmatmul.mubr.f32.gmra.mrb[0].mxu0 %v291
      %v452 = vpop.f32.mrb[0].mxu0
      %v453 = vadd.f32 0.0, %v452
      %v454 = vpop.f32.mrb[0].mxu0
      %455 = vmatprep.mubr.f32.mxu0 0.0
      %456 = vmatmul.mubr.f32.gmra.mrb[0].mxu0 %v294
      %v457 = vpop.f32.mrb[0].mxu0
      %v458 = vadd.f32 0.0, %v457
      %v459 = vpop.f32.mrb[0].mxu0
      %460 = vmatprep.mubr.f32.mxu0 0.0
      %461 = vmatmul.mubr.f32.gmra.mrb[0].mxu0 %v297
      %v462 = vpop.f32.mrb[0].mxu0
      %v463 = vadd.f32 0.0, %v462
      %v464 = vpop.f32.mrb[0].mxu0
      %465 = vmatprep.mubr.f32.mxu0 0.0
      %466 = vmatmul.mubr.f32.gmra.mrb[0].mxu0 %v300
      %v467 = vpop.f32.mrb[0].mxu0
      %v468 = vadd.f32 0.0, %v467
      %v469 = vpop.f32.mrb[0].mxu0
      %470 = vmatprep.mubr.f32.mxu0 0.0
      %471 = vmatmul.mubr.f32.gmra.mrb[0].mxu0 %v303
      %v472 = vpop.f32.mrb[0].mxu0
      %v473 = vadd.f32 0.0, %v472
      %v474 = vpop.f32.mrb[0].mxu0
      %475 = vmatprep.mubr.f32.mxu0 0.0
      %476 = vmatmul.mubr.f32.gmra.mrb[0].mxu0 %v306
      %v477 = vpop.f32.mrb[0].mxu0
      %v478 = vadd.f32 0.0, %v477
      %v479 = vpop.f32.mrb[0].mxu0
      %480 = vmatprep.mubr.f32.mxu0 0.0
      %481 = vmatmul.mubr.f32.gmra.mrb[0].mxu0 %v309
      %v482 = vpop.f32.mrb[0].mxu0
      %v483 = vadd.f32 0.0, %v482
      %v484 = vpop.f32.mrb[0].mxu0
      %485 = vmatprep.mubr.f32.mxu0 0.0
      %486 = vmatmul.mubr.f32.gmra.mrb[0].mxu0 %v312
      %v487 = vpop.f32.mrb[0].mxu0
      %v488 = vadd.f32 0.0, %v487
      %v489 = vpop.f32.mrb[0].mxu0
      %490 = vmatprep.mubr.f32.mxu0 0.0
      %491 = vmatmul.mubr.f32.gmra.mrb[0].mxu0 %v315
      %v492 = vpop.f32.mrb[0].mxu0
      %v493 = vadd.f32 0.0, %v492
      %v494 = vpop.f32.mrb[0].mxu0
      %495 = vmatprep.mubr.f32.mxu0 0.0
      %496 = vmatmul.mubr.f32.gmra.mrb[0].mxu0 %v318
      %v497 = vpop.f32.mrb[0].mxu0
      %v498 = vadd.f32 0.0, %v497
      %v499 = vpop.f32.mrb[0].mxu0
      %500 = vmatprep.mubr.f32.mxu0 0.0
      %501 = vmatmul.mubr.f32.gmra.mrb[0].mxu0 %v321
      %v502 = vpop.f32.mrb[0].mxu0
      %v503 = vadd.f32 0.0, %v502
      %v504 = vpop.f32.mrb[0].mxu0
      %505 = vmatprep.mubr.f32.mxu0 0.0
      %506 = vmatmul.mubr.f32.gmra.mrb[0].mxu0 %v324
      %v507 = vpop.f32.mrb[0].mxu0
      %v508 = vadd.f32 0.0, %v507
      %v509 = vpop.f32.mrb[0].mxu0
      %510 = vmatprep.mubr.f32.mxu0 0.0
      %511 = vmatmul.mubr.f32.gmra.mrb[0].mxu0 %v327
      %v512 = vpop.f32.mrb[0].mxu0
      %v513 = vadd.f32 0.0, %v512
      %v514 = vpop.f32.mrb[0].mxu0
      %515 = vmatprep.mubr.f32.mxu0 0.0
      %516 = vmatmul.mubr.f32.gmra.mrb[0].mxu0 %v330
      %v517 = vpop.f32.mrb[0].mxu0
      %v518 = vadd.f32 0.0, %v517
      %v519 = vpop.f32.mrb[0].mxu0
      %520 = vmatprep.mubr.f32.mxu0 0.0
      %521 = vmatmul.mubr.f32.gmra.mrb[0].mxu0 %v333
      %v522 = vpop.f32.mrb[0].mxu0
      %v523 = vadd.f32 0.0, %v522
      %v524 = vpop.f32.mrb[0].mxu0
      %525 = vmatprep.mubr.f32.mxu0 0.0
      %526 = vmatmul.mubr.f32.gmra.mrb[0].mxu0 %v336
      %v527 = vpop.f32.mrb[0].mxu0
      %v528 = vadd.f32 0.0, %v527
      %v529 = vpop.f32.mrb[0].mxu0
      %530 = vmatprep.mubr.f32.mxu0 0.0
      %531 = vmatmul.mubr.f32.gmra.mrb[0].mxu0 %v339
      %v532 = vpop.f32.mrb[0].mxu0
      %v533 = vadd.f32 0.0, %v532
      %v534 = vpop.f32.mrb[0].mxu0
      %535 = vmatprep.mubr.f32.mxu0 0.0
      %536 = vmatmul.mubr.f32.gmra.mrb[0].mxu0 %v342
      %v537 = vpop.f32.mrb[0].mxu0
      %v538 = vadd.f32 0.0, %v537
      %v539 = vpop.f32.mrb[0].mxu0
      %540 = vmatprep.mubr.f32.mxu0 0.0
      %541 = vmatmul.mubr.f32.gmra.mrb[0].mxu0 %v345
      %v542 = vpop.f32.mrb[0].mxu0
      %v543 = vadd.f32 0.0, %v542
      %v544 = vpop.f32.mrb[0].mxu0
      %545 = vmatprep.mubr.f32.mxu0 0.0
      %546 = vmatmul.mubr.f32.gmra.mrb[0].mxu0 %v348
      %v547 = vpop.f32.mrb[0].mxu0
      %v548 = vadd.f32 0.0, %v547
      %v549 = vpop.f32.mrb[0].mxu0
      %550 = vmatprep.mubr.f32.mxu0 0.0
      %551 = vmatmul.mubr.f32.gmra.mrb[0].mxu0 %v351
      %v552 = vpop.f32.mrb[0].mxu0
      %v553 = vadd.f32 0.0, %v552
      %v554 = vpop.f32.mrb[0].mxu0
      %555 = vmatprep.mubr.f32.mxu0 0.0
      %556 = vmatmul.mubr.f32.gmra.mrb[0].mxu0 %v354
      %v557 = vpop.f32.mrb[0].mxu0
      %v558 = vadd.f32 0.0, %v557
      %v559 = vpop.f32.mrb[0].mxu0
      %560 = vmatprep.mubr.f32.mxu0 0.0
      %561 = vmatmul.mubr.f32.gmra.mrb[0].mxu0 %v357
      %v562 = vpop.f32.mrb[0].mxu0
      %v563 = vadd.f32 0.0, %v562
      %v564 = vpop.f32.mrb[0].mxu0
      %565 = vmatprep.mubr.f32.mxu0 0.0
      %566 = vmatmul.mubr.f32.gmra.mrb[0].mxu0 %v360
      %v567 = vpop.f32.mrb[0].mxu0
      %v568 = vadd.f32 0.0, %v567
      %v569 = vpop.f32.mrb[0].mxu0
      %570 = vmatprep.mubr.f32.mxu0 0.0
      %571 = vmatmul.mubr.f32.gmra.mrb[0].mxu0 %v363
      %v572 = vpop.f32.mrb[0].mxu0
      %v573 = vadd.f32 0.0, %v572
      %v574 = vpop.f32.mrb[0].mxu0
      %575 = vmatprep.mubr.f32.mxu0 0.0
      %576 = vmatmul.mubr.f32.gmra.mrb[0].mxu0 %v366
      %v577 = vpop.f32.mrb[0].mxu0
      %v578 = vadd.f32 0.0, %v577
      %v579 = vpop.f32.mrb[0].mxu0
      %580 = vmatprep.mubr.f32.mxu0 0.0
      %581 = vmatmul.mubr.f32.gmra.mrb[0].mxu0 %v369
      %v582 = vpop.f32.mrb[0].mxu0
      %v583 = vadd.f32 0.0, %v582
      %v584 = vpop.f32.mrb[0].mxu0
      %585 = vmatprep.mubr.f32.mxu0 0.0
      %586 = vmatmul.mubr.f32.gmra.mrb[0].mxu0 %v372
      %v587 = vpop.f32.mrb[0].mxu0
      %v588 = vadd.f32 0.0, %v587
      %v589 = vpop.f32.mrb[0].mxu0
      %590 = vmatprep.mubr.f32.mxu0 0.0
      %591 = vmatmul.mubr.f32.gmra.mrb[0].mxu0 %v375
      %v592 = vpop.f32.mrb[0].mxu0
      %v593 = vadd.f32 0.0, %v592
      %v594 = vpop.f32.mrb[0].mxu0
      %595 = vmatprep.mubr.f32.mxu0 0.0
      %596 = vmatmul.mubr.f32.gmra.mrb[0].mxu0 %v378
      %v597 = vpop.f32.mrb[0].mxu0
      %v598 = vadd.f32 0.0, %v597
      %v599 = vpop.f32.mrb[0].mxu0
      %600 = vmatprep.mubr.f32.mxu0 0.0
      %601 = vmatmul.mubr.f32.gmra.mrb[0].mxu0 %v381
      %v602 = vpop.f32.mrb[0].mxu0
      %v603 = vadd.f32 0.0, %v602
      %v604 = vpop.f32.mrb[0].mxu0
      %605 = vmatprep.mubr.f32.mxu0 0.0
      %606 = vmatmul.mubr.f32.gmra.mrb[0].mxu0 %v384
      %v607 = vpop.f32.mrb[0].mxu0
      %v608 = vadd.f32 0.0, %v607
      %v609 = vpop.f32.mrb[0].mxu0
      %610 = vdwg.mxu0
      %v612 = vsel %vm289, %v222, 0
      %v615 = vsel %vm289, %v223, 0
      %v618 = vsel %vm289, %v224, 0
      %v621 = vsel %vm289, %v225, 0
      %v624 = vsel %vm289, %v226, 0
      %v627 = vsel %vm289, %v227, 0
      %v630 = vsel %vm289, %v228, 0
      %v633 = vsel %vm289, %v229, 0
      %v636 = vsel %vm289, %v230, 0
      %v639 = vsel %vm289, %v231, 0
      %v642 = vsel %vm289, %v232, 0
      %v645 = vsel %vm289, %v233, 0
      %v648 = vsel %vm289, %v234, 0
      %v651 = vsel %vm289, %v235, 0
      %v654 = vsel %vm289, %v236, 0
      %v657 = vsel %vm289, %v237, 0
      %v660 = vsel %vm289, %v238, 0
      %v663 = vsel %vm289, %v239, 0
      %v666 = vsel %vm289, %v240, 0
      %v669 = vsel %vm289, %v241, 0
      %v672 = vsel %vm289, %v242, 0
      %v675 = vsel %vm289, %v243, 0
      %v678 = vsel %vm289, %v244, 0
      %v681 = vsel %vm289, %v245, 0
      %v684 = vsel %vm289, %v246, 0
      %v687 = vsel %vm289, %v247, 0
      %v690 = vsel %vm289, %v248, 0
      %v693 = vsel %vm289, %v249, 0
      %v696 = vsel %vm289, %v250, 0
      %v699 = vsel %vm289, %v251, 0
      %v702 = vsel %vm289, %v252, 0
      %v705 = vsel %vm289, %v253, 0
      %707 = vmatprep.subr.mxu0 0.0
      %708 = vmatpush1.msra.mxu0 %v254
      %709 = vmatprep.subr.mxu0 0.0
      %710 = vmatpush1.msra.mxu0 0.0
      %711 = vmatprep.subr.mxu0 0.0
      %712 = vmatpush1.msra.mxu0 0.0
      %713 = vmatprep.subr.mxu0 0.0
      %714 = vmatpush1.msra.mxu0 0.0
      %715 = vmatprep.subr.mxu0 0.0
      %716 = vmatpush1.msra.mxu0 0.0
      %717 = vmatprep.subr.mxu0 0.0
      %718 = vmatpush1.msra.mxu0 0.0
      %719 = vmatprep.subr.mxu0 0.0
      %720 = vmatpush1.msra.mxu0 0.0
      %721 = vmatprep.subr.mxu0 0.0
      %722 = vmatpush1.msra.mxu0 0.0
      %723 = vmatprep.subr.mxu0 0.0
      %724 = vmatpush1.msra.mxu0 0.0
      %725 = vmatprep.subr.mxu0 0.0
      %726 = vmatpush1.msra.mxu0 0.0
      %727 = vmatprep.subr.mxu0 0.0
      %728 = vmatpush1.msra.mxu0 0.0
      %729 = vmatprep.subr.mxu0 0.0
      %730 = vmatpush1.msra.mxu0 0.0
      %731 = vmatprep.subr.mxu0 0.0
      %732 = vmatpush1.msra.mxu0 0.0
      %733 = vmatprep.subr.mxu0 0.0
      %734 = vmatpush1.msra.mxu0 0.0
      %735 = vmatprep.subr.mxu0 0.0
      %736 = vmatpush1.msra.mxu0 0.0
      %737 = vmatprep.subr.mxu0 0.0
      %738 = vmatpush1.msra.mxu0 0.0
      %739 = vmatprep.subr.mxu0 0.0
      %740 = vmatpush1.msra.mxu0 0.0
      %741 = vmatprep.subr.mxu0 0.0
      %742 = vmatpush1.msra.mxu0 0.0
      %743 = vmatprep.subr.mxu0 0.0
      %744 = vmatpush1.msra.mxu0 0.0
      %745 = vmatprep.subr.mxu0 0.0
      %746 = vmatpush1.msra.mxu0 0.0
      %747 = vmatprep.subr.mxu0 0.0
      %748 = vmatpush1.msra.mxu0 0.0
      %749 = vmatprep.subr.mxu0 0.0
      %750 = vmatpush1.msra.mxu0 0.0
      %751 = vmatprep.subr.mxu0 0.0
      %752 = vmatpush1.msra.mxu0 0.0
      %753 = vmatprep.subr.mxu0 0.0
      %754 = vmatpush1.msra.mxu0 0.0
      %755 = vmatprep.subr.mxu0 0.0
      %756 = vmatpush1.msra.mxu0 0.0
      %757 = vmatprep.subr.mxu0 0.0
      %758 = vmatpush1.msra.mxu0 0.0
      %759 = vmatprep.subr.mxu0 0.0
      %760 = vmatpush1.msra.mxu0 0.0
      %761 = vmatprep.subr.mxu0 0.0
      %762 = vmatpush1.msra.mxu0 0.0
      %763 = vmatprep.subr.mxu0 0.0
      %764 = vmatpush1.msra.mxu0 0.0
      %765 = vmatprep.subr.mxu0 0.0
      %766 = vmatpush1.msra.mxu0 0.0
      %767 = vmatprep.subr.mxu0 0.0
      %768 = vmatpush1.msra.mxu0 0.0
      %769 = vmatprep.subr.mxu0 0.0
      %770 = vmatpush1.msra.mxu0 0.0
      %771 = vmatprep.mubr.f32.mxu0 0.0
      %772 = vmatmul.mubr.f32.gmra.mrb[0].mxu0 %v612
      %v773 = vpop.f32.mrb[0].mxu0
      %v774 = vadd.f32 %v453, %v773
      %v775 = vpop.f32.mrb[0].mxu0
      %776 = vmatprep.mubr.f32.mxu0 0.0
      %777 = vmatmul.mubr.f32.gmra.mrb[0].mxu0 %v615
      %v778 = vpop.f32.mrb[0].mxu0
      %v779 = vadd.f32 %v458, %v778
      %v780 = vpop.f32.mrb[0].mxu0
      %781 = vmatprep.mubr.f32.mxu0 0.0
      %782 = vmatmul.mubr.f32.gmra.mrb[0].mxu0 %v618
      %v783 = vpop.f32.mrb[0].mxu0
      %v784 = vadd.f32 %v463, %v783
      %v785 = vpop.f32.mrb[0].mxu0
      %786 = vmatprep.mubr.f32.mxu0 0.0
      %787 = vmatmul.mubr.f32.gmra.mrb[0].mxu0 %v621
      %v788 = vpop.f32.mrb[0].mxu0
      %v789 = vadd.f32 %v468, %v788
      %v790 = vpop.f32.mrb[0].mxu0
      %791 = vmatprep.mubr.f32.mxu0 0.0
      %792 = vmatmul.mubr.f32.gmra.mrb[0].mxu0 %v624
      %v793 = vpop.f32.mrb[0].mxu0
      %v794 = vadd.f32 %v473, %v793
      %v795 = vpop.f32.mrb[0].mxu0
      %796 = vmatprep.mubr.f32.mxu0 0.0
      %797 = vmatmul.mubr.f32.gmra.mrb[0].mxu0 %v627
      %v798 = vpop.f32.mrb[0].mxu0
      %v799 = vadd.f32 %v478, %v798
      %v800 = vpop.f32.mrb[0].mxu0
      %801 = vmatprep.mubr.f32.mxu0 0.0
      %802 = vmatmul.mubr.f32.gmra.mrb[0].mxu0 %v630
      %v803 = vpop.f32.mrb[0].mxu0
      %v804 = vadd.f32 %v483, %v803
      %v805 = vpop.f32.mrb[0].mxu0
      %806 = vmatprep.mubr.f32.mxu0 0.0
      %807 = vmatmul.mubr.f32.gmra.mrb[0].mxu0 %v633
      %v808 = vpop.f32.mrb[0].mxu0
      %v809 = vadd.f32 %v488, %v808
      %v810 = vpop.f32.mrb[0].mxu0
      %811 = vmatprep.mubr.f32.mxu0 0.0
      %812 = vmatmul.mubr.f32.gmra.mrb[0].mxu0 %v636
      %v813 = vpop.f32.mrb[0].mxu0
      %v814 = vadd.f32 %v493, %v813
      %v815 = vpop.f32.mrb[0].mxu0
      %816 = vmatprep.mubr.f32.mxu0 0.0
      %817 = vmatmul.mubr.f32.gmra.mrb[0].mxu0 %v639
      %v818 = vpop.f32.mrb[0].mxu0
      %v819 = vadd.f32 %v498, %v818
      %v820 = vpop.f32.mrb[0].mxu0
      %821 = vmatprep.mubr.f32.mxu0 0.0
      %822 = vmatmul.mubr.f32.gmra.mrb[0].mxu0 %v642
      %v823 = vpop.f32.mrb[0].mxu0
      %v824 = vadd.f32 %v503, %v823
      %v825 = vpop.f32.mrb[0].mxu0
      %826 = vmatprep.mubr.f32.mxu0 0.0
      %827 = vmatmul.mubr.f32.gmra.mrb[0].mxu0 %v645
      %v828 = vpop.f32.mrb[0].mxu0
      %v829 = vadd.f32 %v508, %v828
      %v830 = vpop.f32.mrb[0].mxu0
      %831 = vmatprep.mubr.f32.mxu0 0.0
      %832 = vmatmul.mubr.f32.gmra.mrb[0].mxu0 %v648
      %v833 = vpop.f32.mrb[0].mxu0
      %v834 = vadd.f32 %v513, %v833
      %v835 = vpop.f32.mrb[0].mxu0
      %836 = vmatprep.mubr.f32.mxu0 0.0
      %837 = vmatmul.mubr.f32.gmra.mrb[0].mxu0 %v651
      %v838 = vpop.f32.mrb[0].mxu0
      %v839 = vadd.f32 %v518, %v838
      %v840 = vpop.f32.mrb[0].mxu0
      %841 = vmatprep.mubr.f32.mxu0 0.0
      %842 = vmatmul.mubr.f32.gmra.mrb[0].mxu0 %v654
      %v843 = vpop.f32.mrb[0].mxu0
      %v844 = vadd.f32 %v523, %v843
      %v845 = vpop.f32.mrb[0].mxu0
      %846 = vmatprep.mubr.f32.mxu0 0.0
      %847 = vmatmul.mubr.f32.gmra.mrb[0].mxu0 %v657
      %v848 = vpop.f32.mrb[0].mxu0
      %v849 = vadd.f32 %v528, %v848
      %v850 = vpop.f32.mrb[0].mxu0
      %851 = vmatprep.mubr.f32.mxu0 0.0
      %852 = vmatmul.mubr.f32.gmra.mrb[0].mxu0 %v660
      %v853 = vpop.f32.mrb[0].mxu0
      %v854 = vadd.f32 %v533, %v853
      %v855 = vpop.f32.mrb[0].mxu0
      %856 = vmatprep.mubr.f32.mxu0 0.0
      %857 = vmatmul.mubr.f32.gmra.mrb[0].mxu0 %v663
      %v858 = vpop.f32.mrb[0].mxu0
      %v859 = vadd.f32 %v538, %v858
      %v860 = vpop.f32.mrb[0].mxu0
      %861 = vmatprep.mubr.f32.mxu0 0.0
      %862 = vmatmul.mubr.f32.gmra.mrb[0].mxu0 %v666
      %v863 = vpop.f32.mrb[0].mxu0
      %v864 = vadd.f32 %v543, %v863
      %v865 = vpop.f32.mrb[0].mxu0
      %866 = vmatprep.mubr.f32.mxu0 0.0
      %867 = vmatmul.mubr.f32.gmra.mrb[0].mxu0 %v669
      %v868 = vpop.f32.mrb[0].mxu0
      %v869 = vadd.f32 %v548, %v868
      %v870 = vpop.f32.mrb[0].mxu0
      %871 = vmatprep.mubr.f32.mxu0 0.0
      %872 = vmatmul.mubr.f32.gmra.mrb[0].mxu0 %v672
      %v873 = vpop.f32.mrb[0].mxu0
      %v874 = vadd.f32 %v553, %v873
      %v875 = vpop.f32.mrb[0].mxu0
      %876 = vmatprep.mubr.f32.mxu0 0.0
      %877 = vmatmul.mubr.f32.gmra.mrb[0].mxu0 %v675
      %v878 = vpop.f32.mrb[0].mxu0
      %v879 = vadd.f32 %v558, %v878
      %v880 = vpop.f32.mrb[0].mxu0
      %881 = vmatprep.mubr.f32.mxu0 0.0
      %882 = vmatmul.mubr.f32.gmra.mrb[0].mxu0 %v678
      %v883 = vpop.f32.mrb[0].mxu0
      %v884 = vadd.f32 %v563, %v883
      %v885 = vpop.f32.mrb[0].mxu0
      %886 = vmatprep.mubr.f32.mxu0 0.0
      %887 = vmatmul.mubr.f32.gmra.mrb[0].mxu0 %v681
      %v888 = vpop.f32.mrb[0].mxu0
      %v889 = vadd.f32 %v568, %v888
      %v890 = vpop.f32.mrb[0].mxu0
      %891 = vmatprep.mubr.f32.mxu0 0.0
      %892 = vmatmul.mubr.f32.gmra.mrb[0].mxu0 %v684
      %v893 = vpop.f32.mrb[0].mxu0
      %v894 = vadd.f32 %v573, %v893
      %v895 = vpop.f32.mrb[0].mxu0
      %896 = vmatprep.mubr.f32.mxu0 0.0
      %897 = vmatmul.mubr.f32.gmra.mrb[0].mxu0 %v687
      %v898 = vpop.f32.mrb[0].mxu0
      %v899 = vadd.f32 %v578, %v898
      %v900 = vpop.f32.mrb[0].mxu0
      %901 = vmatprep.mubr.f32.mxu0 0.0
      %902 = vmatmul.mubr.f32.gmra.mrb[0].mxu0 %v690
      %v903 = vpop.f32.mrb[0].mxu0
      %v904 = vadd.f32 %v583, %v903
      %v905 = vpop.f32.mrb[0].mxu0
      %906 = vmatprep.mubr.f32.mxu0 0.0
      %907 = vmatmul.mubr.f32.gmra.mrb[0].mxu0 %v693
      %v908 = vpop.f32.mrb[0].mxu0
      %v909 = vadd.f32 %v588, %v908
      %v910 = vpop.f32.mrb[0].mxu0
      %911 = vmatprep.mubr.f32.mxu0 0.0
      %912 = vmatmul.mubr.f32.gmra.mrb[0].mxu0 %v696
      %v913 = vpop.f32.mrb[0].mxu0
      %v914 = vadd.f32 %v593, %v913
      %v915 = vpop.f32.mrb[0].mxu0
      %916 = vmatprep.mubr.f32.mxu0 0.0
      %917 = vmatmul.mubr.f32.gmra.mrb[0].mxu0 %v699
      %v918 = vpop.f32.mrb[0].mxu0
      %v919 = vadd.f32 %v598, %v918
      %v920 = vpop.f32.mrb[0].mxu0
      %921 = vmatprep.mubr.f32.mxu0 0.0
      %922 = vmatmul.mubr.f32.gmra.mrb[0].mxu0 %v702
      %v923 = vpop.f32.mrb[0].mxu0
      %v924 = vadd.f32 %v603, %v923
      %v925 = vpop.f32.mrb[0].mxu0
      %926 = vmatprep.mubr.f32.mxu0 0.0
      %927 = vmatmul.mubr.f32.gmra.mrb[0].mxu0 %v705
      %v928 = vpop.f32.mrb[0].mxu0
      %v929 = vadd.f32 %v608, %v928
      %v930 = vpop.f32.mrb[0].mxu0
      %931 = vdwg.mxu0
      %v932 = vld [vmem:[%s206 + $0x2] sm:$0xff]
      %v933 = vld [vmem:[%s206 + $0xa] sm:$0xff]
      %v934 = vld [vmem:[%s206 + $0x1a] sm:$0xff]
      %v935 = vld [vmem:[%s206 + $0x22] sm:$0xff]
      %v936 = vld [vmem:[%s206 + $0x32] sm:$0xff]
      %v937 = vld [vmem:[%s206 + $0x3a] sm:$0xff]
      %v938 = vld [vmem:[%s206 + $0x4a] sm:$0xff]
      %v939 = vld [vmem:[%s206 + $0x52] sm:$0xff]
      %v940 = vld [vmem:[%s206 + $0x62] sm:$0xff]
      %v941 = vld [vmem:[%s206 + $0x6a] sm:$0xff]
      %v942 = vld [vmem:[%s206 + $0x7a] sm:$0xff]
      %v943 = vld [vmem:[%s206 + $0x82] sm:$0xff]
      %v944 = vld [vmem:[%s206 + $0x92] sm:$0xff]
      %v945 = vld [vmem:[%s206 + $0x9a] sm:$0xff]
      %v946 = vld [vmem:[%s206 + $0xaa] sm:$0xff]
      %v947 = vld [vmem:[%s206 + $0xb2] sm:$0xff]
      %v948 = vld [vmem:[%s206 + $0xc2] sm:$0xff]
      %v949 = vld [vmem:[%s206 + $0xca] sm:$0xff]
      %v950 = vld [vmem:[%s206 + $0xda] sm:$0xff]
      %v951 = vld [vmem:[%s206 + $0xe2] sm:$0xff]
      %v952 = vld [vmem:[%s206 + $0xf2] sm:$0xff]
      %v953 = vld [vmem:[%s206 + $0xfa] sm:$0xff]
      %v954 = vld [vmem:[%s206 + $0x10a] sm:$0xff]
      %v955 = vld [vmem:[%s206 + $0x112] sm:$0xff]
      %v956 = vld [vmem:[%s206 + $0x122] sm:$0xff]
      %v957 = vld [vmem:[%s206 + $0x12a] sm:$0xff]
      %v958 = vld [vmem:[%s206 + $0x13a] sm:$0xff]
      %v959 = vld [vmem:[%s206 + $0x142] sm:$0xff]
      %v960 = vld [vmem:[%s206 + $0x152] sm:$0xff]
      %v961 = vld [vmem:[%s206 + $0x15a] sm:$0xff]
      %v962 = vld [vmem:[%s206 + $0x16a] sm:$0xff]
      %v963 = vld [vmem:[%s206 + $0x172] sm:$0xff]
      %s964 = scalar_lea.vmem %s210, 16
      %v965 = vld [vmem:[%s964] sm:$0xff]
      %v967 = vsel %vm289, %v932, 0
      %v970 = vsel %vm289, %v933, 0
      %v973 = vsel %vm289, %v934, 0
      %v976 = vsel %vm289, %v935, 0
      %v979 = vsel %vm289, %v936, 0
      %v982 = vsel %vm289, %v937, 0
      %v985 = vsel %vm289, %v938, 0
      %v988 = vsel %vm289, %v939, 0
      %v991 = vsel %vm289, %v940, 0
      %v994 = vsel %vm289, %v941, 0
      %v997 = vsel %vm289, %v942, 0
      %v1000 = vsel %vm289, %v943, 0
      %v1003 = vsel %vm289, %v944, 0
      %v1006 = vsel %vm289, %v945, 0
      %v1009 = vsel %vm289, %v946, 0
      %v1012 = vsel %vm289, %v947, 0
      %v1015 = vsel %vm289, %v948, 0
      %v1018 = vsel %vm289, %v949, 0
      %v1021 = vsel %vm289, %v950, 0
      %v1024 = vsel %vm289, %v951, 0
      %v1027 = vsel %vm289, %v952, 0
      %v1030 = vsel %vm289, %v953, 0
      %v1033 = vsel %vm289, %v954, 0
      %v1036 = vsel %vm289, %v955, 0
      %v1039 = vsel %vm289, %v956, 0
      %v1042 = vsel %vm289, %v957, 0
      %v1045 = vsel %vm289, %v958, 0
      %v1048 = vsel %vm289, %v959, 0
      %v1051 = vsel %vm289, %v960, 0
      %v1054 = vsel %vm289, %v961, 0
      %v1057 = vsel %vm289, %v962, 0
      %v1060 = vsel %vm289, %v963, 0
      %1062 = vmatprep.subr.mxu0 0.0
      %1063 = vmatpush1.msra.mxu0 %v965
      %1064 = vmatprep.subr.mxu0 0.0
      %1065 = vmatpush1.msra.mxu0 0.0
      %1066 = vmatprep.subr.mxu0 0.0
      %1067 = vmatpush1.msra.mxu0 0.0
      %1068 = vmatprep.subr.mxu0 0.0
      %1069 = vmatpush1.msra.mxu0 0.0
      %1070 = vmatprep.subr.mxu0 0.0
      %1071 = vmatpush1.msra.mxu0 0.0
      %1072 = vmatprep.subr.mxu0 0.0
      %1073 = vmatpush1.msra.mxu0 0.0
      %1074 = vmatprep.subr.mxu0 0.0
      %1075 = vmatpush1.msra.mxu0 0.0
      %1076 = vmatprep.subr.mxu0 0.0
      %1077 = vmatpush1.msra.mxu0 0.0
      %1078 = vmatprep.subr.mxu0 0.0
      %1079 = vmatpush1.msra.mxu0 0.0
      %1080 = vmatprep.subr.mxu0 0.0
      %1081 = vmatpush1.msra.mxu0 0.0
      %1082 = vmatprep.subr.mxu0 0.0
      %1083 = vmatpush1.msra.mxu0 0.0
      %1084 = vmatprep.subr.mxu0 0.0
      %1085 = vmatpush1.msra.mxu0 0.0
      %1086 = vmatprep.subr.mxu0 0.0
      %1087 = vmatpush1.msra.mxu0 0.0
      %1088 = vmatprep.subr.mxu0 0.0
      %1089 = vmatpush1.msra.mxu0 0.0
      %1090 = vmatprep.subr.mxu0 0.0
      %1091 = vmatpush1.msra.mxu0 0.0
      %1092 = vmatprep.subr.mxu0 0.0
      %1093 = vmatpush1.msra.mxu0 0.0
      %1094 = vmatprep.subr.mxu0 0.0
      %1095 = vmatpush1.msra.mxu0 0.0
      %1096 = vmatprep.subr.mxu0 0.0
      %1097 = vmatpush1.msra.mxu0 0.0
      %1098 = vmatprep.subr.mxu0 0.0
      %1099 = vmatpush1.msra.mxu0 0.0
      %1100 = vmatprep.subr.mxu0 0.0
      %1101 = vmatpush1.msra.mxu0 0.0
      %1102 = vmatprep.subr.mxu0 0.0
      %1103 = vmatpush1.msra.mxu0 0.0
      %1104 = vmatprep.subr.mxu0 0.0
      %1105 = vmatpush1.msra.mxu0 0.0
      %1106 = vmatprep.subr.mxu0 0.0
      %1107 = vmatpush1.msra.mxu0 0.0
      %1108 = vmatprep.subr.mxu0 0.0
      %1109 = vmatpush1.msra.mxu0 0.0
      %1110 = vmatprep.subr.mxu0 0.0
      %1111 = vmatpush1.msra.mxu0 0.0
      %1112 = vmatprep.subr.mxu0 0.0
      %1113 = vmatpush1.msra.mxu0 0.0
      %1114 = vmatprep.subr.mxu0 0.0
      %1115 = vmatpush1.msra.mxu0 0.0
      %1116 = vmatprep.subr.mxu0 0.0
      %1117 = vmatpush1.msra.mxu0 0.0
      %1118 = vmatprep.subr.mxu0 0.0
      %1119 = vmatpush1.msra.mxu0 0.0
      %1120 = vmatprep.subr.mxu0 0.0
      %1121 = vmatpush1.msra.mxu0 0.0
      %1122 = vmatprep.subr.mxu0 0.0
      %1123 = vmatpush1.msra.mxu0 0.0
      %1124 = vmatprep.subr.mxu0 0.0
      %1125 = vmatpush1.msra.mxu0 0.0
      %1126 = vmatprep.mubr.f32.mxu0 0.0
      %1127 = vmatmul.mubr.f32.gmra.mrb[0].mxu0 %v967
      %v1128 = vpop.f32.mrb[0].mxu0
      %v1129 = vadd.f32 0.0, %v1128
      %v1130 = vpop.f32.mrb[0].mxu0
      %1131 = vmatprep.mubr.f32.mxu0 0.0
      %1132 = vmatmul.mubr.f32.gmra.mrb[0].mxu0 %v970
      %v1133 = vpop.f32.mrb[0].mxu0
      %v1134 = vadd.f32 0.0, %v1133
      %v1135 = vpop.f32.mrb[0].mxu0
      %1136 = vmatprep.mubr.f32.mxu0 0.0
      %1137 = vmatmul.mubr.f32.gmra.mrb[0].mxu0 %v973
      %v1138 = vpop.f32.mrb[0].mxu0
      %v1139 = vadd.f32 0.0, %v1138
      %v1140 = vpop.f32.mrb[0].mxu0
      %1141 = vmatprep.mubr.f32.mxu0 0.0
      %1142 = vmatmul.mubr.f32.gmra.mrb[0].mxu0 %v976
      %v1143 = vpop.f32.mrb[0].mxu0
      %v1144 = vadd.f32 0.0, %v1143
      %v1145 = vpop.f32.mrb[0].mxu0
      %1146 = vmatprep.mubr.f32.mxu0 0.0
      %1147 = vmatmul.mubr.f32.gmra.mrb[0].mxu0 %v979
      %v1148 = vpop.f32.mrb[0].mxu0
      %v1149 = vadd.f32 0.0, %v1148
      %v1150 = vpop.f32.mrb[0].mxu0
      %1151 = vmatprep.mubr.f32.mxu0 0.0
      %1152 = vmatmul.mubr.f32.gmra.mrb[0].mxu0 %v982
      %v1153 = vpop.f32.mrb[0].mxu0
      %v1154 = vadd.f32 0.0, %v1153
      %v1155 = vpop.f32.mrb[0].mxu0
      %1156 = vmatprep.mubr.f32.mxu0 0.0
      %1157 = vmatmul.mubr.f32.gmra.mrb[0].mxu0 %v985
      %v1158 = vpop.f32.mrb[0].mxu0
      %v1159 = vadd.f32 0.0, %v1158
      %v1160 = vpop.f32.mrb[0].mxu0
      %1161 = vmatprep.mubr.f32.mxu0 0.0
      %1162 = vmatmul.mubr.f32.gmra.mrb[0].mxu0 %v988
      %v1163 = vpop.f32.mrb[0].mxu0
      %v1164 = vadd.f32 0.0, %v1163
      %v1165 = vpop.f32.mrb[0].mxu0
      %1166 = vmatprep.mubr.f32.mxu0 0.0
      %1167 = vmatmul.mubr.f32.gmra.mrb[0].mxu0 %v991
      %v1168 = vpop.f32.mrb[0].mxu0
      %v1169 = vadd.f32 0.0, %v1168
      %v1170 = vpop.f32.mrb[0].mxu0
      %1171 = vmatprep.mubr.f32.mxu0 0.0
      %1172 = vmatmul.mubr.f32.gmra.mrb[0].mxu0 %v994
      %v1173 = vpop.f32.mrb[0].mxu0
      %v1174 = vadd.f32 0.0, %v1173
      %v1175 = vpop.f32.mrb[0].mxu0
      %1176 = vmatprep.mubr.f32.mxu0 0.0
      %1177 = vmatmul.mubr.f32.gmra.mrb[0].mxu0 %v997
      %v1178 = vpop.f32.mrb[0].mxu0
      %v1179 = vadd.f32 0.0, %v1178
      %v1180 = vpop.f32.mrb[0].mxu0
      %1181 = vmatprep.mubr.f32.mxu0 0.0
      %1182 = vmatmul.mubr.f32.gmra.mrb[0].mxu0 %v1000
      %v1183 = vpop.f32.mrb[0].mxu0
      %v1184 = vadd.f32 0.0, %v1183
      %v1185 = vpop.f32.mrb[0].mxu0
      %1186 = vmatprep.mubr.f32.mxu0 0.0
      %1187 = vmatmul.mubr.f32.gmra.mrb[0].mxu0 %v1003
      %v1188 = vpop.f32.mrb[0].mxu0
      %v1189 = vadd.f32 0.0, %v1188
      %v1190 = vpop.f32.mrb[0].mxu0
      %1191 = vmatprep.mubr.f32.mxu0 0.0
      %1192 = vmatmul.mubr.f32.gmra.mrb[0].mxu0 %v1006
      %v1193 = vpop.f32.mrb[0].mxu0
      %v1194 = vadd.f32 0.0, %v1193
      %v1195 = vpop.f32.mrb[0].mxu0
      %1196 = vmatprep.mubr.f32.mxu0 0.0
      %1197 = vmatmul.mubr.f32.gmra.mrb[0].mxu0 %v1009
      %v1198 = vpop.f32.mrb[0].mxu0
      %v1199 = vadd.f32 0.0, %v1198
      %v1200 = vpop.f32.mrb[0].mxu0
      %1201 = vmatprep.mubr.f32.mxu0 0.0
      %1202 = vmatmul.mubr.f32.gmra.mrb[0].mxu0 %v1012
      %v1203 = vpop.f32.mrb[0].mxu0
      %v1204 = vadd.f32 0.0, %v1203
      %v1205 = vpop.f32.mrb[0].mxu0
      %1206 = vmatprep.mubr.f32.mxu0 0.0
      %1207 = vmatmul.mubr.f32.gmra.mrb[0].mxu0 %v1015
      %v1208 = vpop.f32.mrb[0].mxu0
      %v1209 = vadd.f32 0.0, %v1208
      %v1210 = vpop.f32.mrb[0].mxu0
      %1211 = vmatprep.mubr.f32.mxu0 0.0
      %1212 = vmatmul.mubr.f32.gmra.mrb[0].mxu0 %v1018
      %v1213 = vpop.f32.mrb[0].mxu0
      %v1214 = vadd.f32 0.0, %v1213
      %v1215 = vpop.f32.mrb[0].mxu0
      %1216 = vmatprep.mubr.f32.mxu0 0.0
      %1217 = vmatmul.mubr.f32.gmra.mrb[0].mxu0 %v1021
      %v1218 = vpop.f32.mrb[0].mxu0
      %v1219 = vadd.f32 0.0, %v1218
      %v1220 = vpop.f32.mrb[0].mxu0
      %1221 = vmatprep.mubr.f32.mxu0 0.0
      %1222 = vmatmul.mubr.f32.gmra.mrb[0].mxu0 %v1024
      %v1223 = vpop.f32.mrb[0].mxu0
      %v1224 = vadd.f32 0.0, %v1223
      %v1225 = vpop.f32.mrb[0].mxu0
      %1226 = vmatprep.mubr.f32.mxu0 0.0
      %1227 = vmatmul.mubr.f32.gmra.mrb[0].mxu0 %v1027
      %v1228 = vpop.f32.mrb[0].mxu0
      %v1229 = vadd.f32 0.0, %v1228
      %v1230 = vpop.f32.mrb[0].mxu0
      %1231 = vmatprep.mubr.f32.mxu0 0.0
      %1232 = vmatmul.mubr.f32.gmra.mrb[0].mxu0 %v1030
      %v1233 = vpop.f32.mrb[0].mxu0
      %v1234 = vadd.f32 0.0, %v1233
      %v1235 = vpop.f32.mrb[0].mxu0
      %1236 = vmatprep.mubr.f32.mxu0 0.0
      %1237 = vmatmul.mubr.f32.gmra.mrb[0].mxu0 %v1033
      %v1238 = vpop.f32.mrb[0].mxu0
      %v1239 = vadd.f32 0.0, %v1238
      %v1240 = vpop.f32.mrb[0].mxu0
      %1241 = vmatprep.mubr.f32.mxu0 0.0
      %1242 = vmatmul.mubr.f32.gmra.mrb[0].mxu0 %v1036
      %v1243 = vpop.f32.mrb[0].mxu0
      %v1244 = vadd.f32 0.0, %v1243
      %v1245 = vpop.f32.mrb[0].mxu0
      %1246 = vmatprep.mubr.f32.mxu0 0.0
      %1247 = vmatmul.mubr.f32.gmra.mrb[0].mxu0 %v1039
      %v1248 = vpop.f32.mrb[0].mxu0
      %v1249 = vadd.f32 0.0, %v1248
      %v1250 = vpop.f32.mrb[0].mxu0
      %1251 = vmatprep.mubr.f32.mxu0 0.0
      %1252 = vmatmul.mubr.f32.gmra.mrb[0].mxu0 %v1042
      %v1253 = vpop.f32.mrb[0].mxu0
      %v1254 = vadd.f32 0.0, %v1253
      %v1255 = vpop.f32.mrb[0].mxu0
      %1256 = vmatprep.mubr.f32.mxu0 0.0
      %1257 = vmatmul.mubr.f32.gmra.mrb[0].mxu0 %v1045
      %v1258 = vpop.f32.mrb[0].mxu0
      %v1259 = vadd.f32 0.0, %v1258
      %v1260 = vpop.f32.mrb[0].mxu0
      %1261 = vmatprep.mubr.f32.mxu0 0.0
      %1262 = vmatmul.mubr.f32.gmra.mrb[0].mxu0 %v1048
      %v1263 = vpop.f32.mrb[0].mxu0
      %v1264 = vadd.f32 0.0, %v1263
      %v1265 = vpop.f32.mrb[0].mxu0
      %1266 = vmatprep.mubr.f32.mxu0 0.0
      %1267 = vmatmul.mubr.f32.gmra.mrb[0].mxu0 %v1051
      %v1268 = vpop.f32.mrb[0].mxu0
      %v1269 = vadd.f32 0.0, %v1268
      %v1270 = vpop.f32.mrb[0].mxu0
      %1271 = vmatprep.mubr.f32.mxu0 0.0
      %1272 = vmatmul.mubr.f32.gmra.mrb[0].mxu0 %v1054
      %v1273 = vpop.f32.mrb[0].mxu0
      %v1274 = vadd.f32 0.0, %v1273
      %v1275 = vpop.f32.mrb[0].mxu0
      %1276 = vmatprep.mubr.f32.mxu0 0.0
      %1277 = vmatmul.mubr.f32.gmra.mrb[0].mxu0 %v1057
      %v1278 = vpop.f32.mrb[0].mxu0
      %v1279 = vadd.f32 0.0, %v1278
      %v1280 = vpop.f32.mrb[0].mxu0
      %1281 = vmatprep.mubr.f32.mxu0 0.0
      %1282 = vmatmul.mubr.f32.gmra.mrb[0].mxu0 %v1060
      %v1283 = vpop.f32.mrb[0].mxu0
      %v1284 = vadd.f32 0.0, %v1283
      %v1285 = vpop.f32.mrb[0].mxu0
      %1286 = vdwg.mxu0
      %v1287 = vadd.f32 %v774, %v1129
      %v1288 = vadd.f32 %v779, %v1134
      %v1289 = vadd.f32 %v784, %v1139
      %v1290 = vadd.f32 %v789, %v1144
      %v1291 = vadd.f32 %v794, %v1149
      %v1292 = vadd.f32 %v799, %v1154
      %v1293 = vadd.f32 %v804, %v1159
      %v1294 = vadd.f32 %v809, %v1164
      %v1295 = vadd.f32 %v814, %v1169
      %v1296 = vadd.f32 %v819, %v1174
      %v1297 = vadd.f32 %v824, %v1179
      %v1298 = vadd.f32 %v829, %v1184
      %v1299 = vadd.f32 %v834, %v1189
      %v1300 = vadd.f32 %v839, %v1194
      %v1301 = vadd.f32 %v844, %v1199
      %v1302 = vadd.f32 %v849, %v1204
      %v1303 = vadd.f32 %v854, %v1209
      %v1304 = vadd.f32 %v859, %v1214
      %v1305 = vadd.f32 %v864, %v1219
      %v1306 = vadd.f32 %v869, %v1224
      %v1307 = vadd.f32 %v874, %v1229
      %v1308 = vadd.f32 %v879, %v1234
      %v1309 = vadd.f32 %v884, %v1239
      %v1310 = vadd.f32 %v889, %v1244
      %v1311 = vadd.f32 %v894, %v1249
      %v1312 = vadd.f32 %v899, %v1254
      %v1313 = vadd.f32 %v904, %v1259
      %v1314 = vadd.f32 %v909, %v1264
      %v1315 = vadd.f32 %v914, %v1269
      %v1316 = vadd.f32 %v919, %v1274
      %v1317 = vadd.f32 %v924, %v1279
      %v1318 = vadd.f32 %v929, %v1284
      %s1319 = scalar_lea.vmem %s206, 24
      %v1320 = vld [vmem:[%s1319] sm:$0xff]
      %v1321 = vld [vmem:[%s1319 + $0x8] sm:$0xff]
      %v1322 = vld [vmem:[%s1319 + $0x18] sm:$0xff]
      %v1323 = vld [vmem:[%s1319 + $0x20] sm:$0xff]
      %v1324 = vld [vmem:[%s1319 + $0x30] sm:$0xff]
      %v1325 = vld [vmem:[%s1319 + $0x38] sm:$0xff]
      %v1326 = vld [vmem:[%s1319 + $0x48] sm:$0xff]
      %v1327 = vld [vmem:[%s1319 + $0x50] sm:$0xff]
      %v1328 = vld [vmem:[%s1319 + $0x60] sm:$0xff]
      %v1329 = vld [vmem:[%s1319 + $0x68] sm:$0xff]
      %v1330 = vld [vmem:[%s1319 + $0x78] sm:$0xff]
      %v1331 = vld [vmem:[%s1319 + $0x80] sm:$0xff]
      %v1332 = vld [vmem:[%s1319 + $0x90] sm:$0xff]
      %v1333 = vld [vmem:[%s1319 + $0x98] sm:$0xff]
      %v1334 = vld [vmem:[%s1319 + $0xa8] sm:$0xff]
      %v1335 = vld [vmem:[%s1319 + $0xb0] sm:$0xff]
      %v1336 = vld [vmem:[%s1319 + $0xc0] sm:$0xff]
      %v1337 = vld [vmem:[%s1319 + $0xc8] sm:$0xff]
      %v1338 = vld [vmem:[%s1319 + $0xd8] sm:$0xff]
      %v1339 = vld [vmem:[%s1319 + $0xe0] sm:$0xff]
      %v1340 = vld [vmem:[%s1319 + $0xf0] sm:$0xff]
      %v1341 = vld [vmem:[%s1319 + $0xf8] sm:$0xff]
      %v1342 = vld [vmem:[%s1319 + $0x108] sm:$0xff]
      %v1343 = vld [vmem:[%s1319 + $0x110] sm:$0xff]
      %v1344 = vld [vmem:[%s1319 + $0x120] sm:$0xff]
      %v1345 = vld [vmem:[%s1319 + $0x128] sm:$0xff]
      %v1346 = vld [vmem:[%s1319 + $0x138] sm:$0xff]
      %v1347 = vld [vmem:[%s1319 + $0x140] sm:$0xff]
      %v1348 = vld [vmem:[%s1319 + $0x150] sm:$0xff]
      %v1349 = vld [vmem:[%s1319 + $0x158] sm:$0xff]
      %v1350 = vld [vmem:[%s1319 + $0x168] sm:$0xff]
      %v1351 = vld [vmem:[%s1319 + $0x170] sm:$0xff]
      %s1352 = scalar_lea.vmem %s210, 24
      %v1353 = vld [vmem:[%s1352] sm:$0xff]
      %v1355 = vsel %vm289, %v1320, 0
      %v1358 = vsel %vm289, %v1321, 0
      %v1361 = vsel %vm289, %v1322, 0
      %v1364 = vsel %vm289, %v1323, 0
      %v1367 = vsel %vm289, %v1324, 0
      %v1370 = vsel %vm289, %v1325, 0
      %v1373 = vsel %vm289, %v1326, 0
      %v1376 = vsel %vm289, %v1327, 0
      %v1379 = vsel %vm289, %v1328, 0
      %v1382 = vsel %vm289, %v1329, 0
      %v1385 = vsel %vm289, %v1330, 0
      %v1388 = vsel %vm289, %v1331, 0
      %v1391 = vsel %vm289, %v1332, 0
      %v1394 = vsel %vm289, %v1333, 0
      %v1397 = vsel %vm289, %v1334, 0
      %v1400 = vsel %vm289, %v1335, 0
      %v1403 = vsel %vm289, %v1336, 0
      %v1406 = vsel %vm289, %v1337, 0
      %v1409 = vsel %vm289, %v1338, 0
      %v1412 = vsel %vm289, %v1339, 0
      %v1415 = vsel %vm289, %v1340, 0
      %v1418 = vsel %vm289, %v1341, 0
      %v1421 = vsel %vm289, %v1342, 0
      %v1424 = vsel %vm289, %v1343, 0
      %v1427 = vsel %vm289, %v1344, 0
      %v1430 = vsel %vm289, %v1345, 0
      %v1433 = vsel %vm289, %v1346, 0
      %v1436 = vsel %vm289, %v1347, 0
      %v1439 = vsel %vm289, %v1348, 0
      %v1442 = vsel %vm289, %v1349, 0
      %v1445 = vsel %vm289, %v1350, 0
      %v1448 = vsel %vm289, %v1351, 0
      %1450 = vmatprep.subr.mxu0 0.0
      %1451 = vmatpush1.msra.mxu0 %v1353
      %1452 = vmatprep.subr.mxu0 0.0
      %1453 = vmatpush1.msra.mxu0 0.0
      %1454 = vmatprep.subr.mxu0 0.0
      %1455 = vmatpush1.msra.mxu0 0.0
      %1456 = vmatprep.subr.mxu0 0.0
      %1457 = vmatpush1.msra.mxu0 0.0
      %1458 = vmatprep.subr.mxu0 0.0
      %1459 = vmatpush1.msra.mxu0 0.0
      %1460 = vmatprep.subr.mxu0 0.0
      %1461 = vmatpush1.msra.mxu0 0.0
      %1462 = vmatprep.subr.mxu0 0.0
      %1463 = vmatpush1.msra.mxu0 0.0
      %1464 = vmatprep.subr.mxu0 0.0
      %1465 = vmatpush1.msra.mxu0 0.0
      %1466 = vmatprep.subr.mxu0 0.0
      %1467 = vmatpush1.msra.mxu0 0.0
      %1468 = vmatprep.subr.mxu0 0.0
      %1469 = vmatpush1.msra.mxu0 0.0
      %1470 = vmatprep.subr.mxu0 0.0
      %1471 = vmatpush1.msra.mxu0 0.0
      %1472 = vmatprep.subr.mxu0 0.0
      %1473 = vmatpush1.msra.mxu0 0.0
      %1474 = vmatprep.subr.mxu0 0.0
      %1475 = vmatpush1.msra.mxu0 0.0
      %1476 = vmatprep.subr.mxu0 0.0
      %1477 = vmatpush1.msra.mxu0 0.0
      %1478 = vmatprep.subr.mxu0 0.0
      %1479 = vmatpush1.msra.mxu0 0.0
      %1480 = vmatprep.subr.mxu0 0.0
      %1481 = vmatpush1.msra.mxu0 0.0
      %1482 = vmatprep.subr.mxu0 0.0
      %1483 = vmatpush1.msra.mxu0 0.0
      %1484 = vmatprep.subr.mxu0 0.0
      %1485 = vmatpush1.msra.mxu0 0.0
      %1486 = vmatprep.subr.mxu0 0.0
      %1487 = vmatpush1.msra.mxu0 0.0
      %1488 = vmatprep.subr.mxu0 0.0
      %1489 = vmatpush1.msra.mxu0 0.0
      %1490 = vmatprep.subr.mxu0 0.0
      %1491 = vmatpush1.msra.mxu0 0.0
      %1492 = vmatprep.subr.mxu0 0.0
      %1493 = vmatpush1.msra.mxu0 0.0
      %1494 = vmatprep.subr.mxu0 0.0
      %1495 = vmatpush1.msra.mxu0 0.0
      %1496 = vmatprep.subr.mxu0 0.0
      %1497 = vmatpush1.msra.mxu0 0.0
      %1498 = vmatprep.subr.mxu0 0.0
      %1499 = vmatpush1.msra.mxu0 0.0
      %1500 = vmatprep.subr.mxu0 0.0
      %1501 = vmatpush1.msra.mxu0 0.0
      %1502 = vmatprep.subr.mxu0 0.0
      %1503 = vmatpush1.msra.mxu0 0.0
      %1504 = vmatprep.subr.mxu0 0.0
      %1505 = vmatpush1.msra.mxu0 0.0
      %1506 = vmatprep.subr.mxu0 0.0
      %1507 = vmatpush1.msra.mxu0 0.0
      %1508 = vmatprep.subr.mxu0 0.0
      %1509 = vmatpush1.msra.mxu0 0.0
      %1510 = vmatprep.subr.mxu0 0.0
      %1511 = vmatpush1.msra.mxu0 0.0
      %1512 = vmatprep.subr.mxu0 0.0
      %1513 = vmatpush1.msra.mxu0 0.0
      %1514 = vmatprep.mubr.f32.mxu0 0.0
      %1515 = vmatmul.mubr.f32.gmra.mrb[0].mxu0 %v1355
      %v1516 = vpop.f32.mrb[0].mxu0
      %v1517 = vadd.f32 0.0, %v1516
      %v1518 = vpop.f32.mrb[0].mxu0
      %1519 = vmatprep.mubr.f32.mxu0 0.0
      %1520 = vmatmul.mubr.f32.gmra.mrb[0].mxu0 %v1358
      %v1521 = vpop.f32.mrb[0].mxu0
      %v1522 = vadd.f32 0.0, %v1521
      %v1523 = vpop.f32.mrb[0].mxu0
      %1524 = vmatprep.mubr.f32.mxu0 0.0
      %1525 = vmatmul.mubr.f32.gmra.mrb[0].mxu0 %v1361
      %v1526 = vpop.f32.mrb[0].mxu0
      %v1527 = vadd.f32 0.0, %v1526
      %v1528 = vpop.f32.mrb[0].mxu0
      %1529 = vmatprep.mubr.f32.mxu0 0.0
      %1530 = vmatmul.mubr.f32.gmra.mrb[0].mxu0 %v1364
      %v1531 = vpop.f32.mrb[0].mxu0
      %v1532 = vadd.f32 0.0, %v1531
      %v1533 = vpop.f32.mrb[0].mxu0
      %1534 = vmatprep.mubr.f32.mxu0 0.0
      %1535 = vmatmul.mubr.f32.gmra.mrb[0].mxu0 %v1367
      %v1536 = vpop.f32.mrb[0].mxu0
      %v1537 = vadd.f32 0.0, %v1536
      %v1538 = vpop.f32.mrb[0].mxu0
      %1539 = vmatprep.mubr.f32.mxu0 0.0
      %1540 = vmatmul.mubr.f32.gmra.mrb[0].mxu0 %v1370
      %v1541 = vpop.f32.mrb[0].mxu0
      %v1542 = vadd.f32 0.0, %v1541
      %v1543 = vpop.f32.mrb[0].mxu0
      %1544 = vmatprep.mubr.f32.mxu0 0.0
      %1545 = vmatmul.mubr.f32.gmra.mrb[0].mxu0 %v1373
      %v1546 = vpop.f32.mrb[0].mxu0
      %v1547 = vadd.f32 0.0, %v1546
      %v1548 = vpop.f32.mrb[0].mxu0
      %1549 = vmatprep.mubr.f32.mxu0 0.0
      %1550 = vmatmul.mubr.f32.gmra.mrb[0].mxu0 %v1376
      %v1551 = vpop.f32.mrb[0].mxu0
      %v1552 = vadd.f32 0.0, %v1551
      %v1553 = vpop.f32.mrb[0].mxu0
      %1554 = vmatprep.mubr.f32.mxu0 0.0
      %1555 = vmatmul.mubr.f32.gmra.mrb[0].mxu0 %v1379
      %v1556 = vpop.f32.mrb[0].mxu0
      %v1557 = vadd.f32 0.0, %v1556
      %v1558 = vpop.f32.mrb[0].mxu0
      %1559 = vmatprep.mubr.f32.mxu0 0.0
      %1560 = vmatmul.mubr.f32.gmra.mrb[0].mxu0 %v1382
      %v1561 = vpop.f32.mrb[0].mxu0
      %v1562 = vadd.f32 0.0, %v1561
      %v1563 = vpop.f32.mrb[0].mxu0
      %1564 = vmatprep.mubr.f32.mxu0 0.0
      %1565 = vmatmul.mubr.f32.gmra.mrb[0].mxu0 %v1385
      %v1566 = vpop.f32.mrb[0].mxu0
      %v1567 = vadd.f32 0.0, %v1566
      %v1568 = vpop.f32.mrb[0].mxu0
      %1569 = vmatprep.mubr.f32.mxu0 0.0
      %1570 = vmatmul.mubr.f32.gmra.mrb[0].mxu0 %v1388
      %v1571 = vpop.f32.mrb[0].mxu0
      %v1572 = vadd.f32 0.0, %v1571
      %v1573 = vpop.f32.mrb[0].mxu0
      %1574 = vmatprep.mubr.f32.mxu0 0.0
      %1575 = vmatmul.mubr.f32.gmra.mrb[0].mxu0 %v1391
      %v1576 = vpop.f32.mrb[0].mxu0
      %v1577 = vadd.f32 0.0, %v1576
      %v1578 = vpop.f32.mrb[0].mxu0
      %1579 = vmatprep.mubr.f32.mxu0 0.0
      %1580 = vmatmul.mubr.f32.gmra.mrb[0].mxu0 %v1394
      %v1581 = vpop.f32.mrb[0].mxu0
      %v1582 = vadd.f32 0.0, %v1581
      %v1583 = vpop.f32.mrb[0].mxu0
      %1584 = vmatprep.mubr.f32.mxu0 0.0
      %1585 = vmatmul.mubr.f32.gmra.mrb[0].mxu0 %v1397
      %v1586 = vpop.f32.mrb[0].mxu0
      %v1587 = vadd.f32 0.0, %v1586
      %v1588 = vpop.f32.mrb[0].mxu0
      %1589 = vmatprep.mubr.f32.mxu0 0.0
      %1590 = vmatmul.mubr.f32.gmra.mrb[0].mxu0 %v1400
      %v1591 = vpop.f32.mrb[0].mxu0
      %v1592 = vadd.f32 0.0, %v1591
      %v1593 = vpop.f32.mrb[0].mxu0
      %1594 = vmatprep.mubr.f32.mxu0 0.0
      %1595 = vmatmul.mubr.f32.gmra.mrb[0].mxu0 %v1403
      %v1596 = vpop.f32.mrb[0].mxu0
      %v1597 = vadd.f32 0.0, %v1596
      %v1598 = vpop.f32.mrb[0].mxu0
      %1599 = vmatprep.mubr.f32.mxu0 0.0
      %1600 = vmatmul.mubr.f32.gmra.mrb[0].mxu0 %v1406
      %v1601 = vpop.f32.mrb[0].mxu0
      %v1602 = vadd.f32 0.0, %v1601
      %v1603 = vpop.f32.mrb[0].mxu0
      %1604 = vmatprep.mubr.f32.mxu0 0.0
      %1605 = vmatmul.mubr.f32.gmra.mrb[0].mxu0 %v1409
      %v1606 = vpop.f32.mrb[0].mxu0
      %v1607 = vadd.f32 0.0, %v1606
      %v1608 = vpop.f32.mrb[0].mxu0
      %1609 = vmatprep.mubr.f32.mxu0 0.0
      %1610 = vmatmul.mubr.f32.gmra.mrb[0].mxu0 %v1412
      %v1611 = vpop.f32.mrb[0].mxu0
      %v1612 = vadd.f32 0.0, %v1611
      %v1613 = vpop.f32.mrb[0].mxu0
      %1614 = vmatprep.mubr.f32.mxu0 0.0
      %1615 = vmatmul.mubr.f32.gmra.mrb[0].mxu0 %v1415
      %v1616 = vpop.f32.mrb[0].mxu0
      %v1617 = vadd.f32 0.0, %v1616
      %v1618 = vpop.f32.mrb[0].mxu0
      %1619 = vmatprep.mubr.f32.mxu0 0.0
      %1620 = vmatmul.mubr.f32.gmra.mrb[0].mxu0 %v1418
      %v1621 = vpop.f32.mrb[0].mxu0
      %v1622 = vadd.f32 0.0, %v1621
      %v1623 = vpop.f32.mrb[0].mxu0
      %1624 = vmatprep.mubr.f32.mxu0 0.0
      %1625 = vmatmul.mubr.f32.gmra.mrb[0].mxu0 %v1421
      %v1626 = vpop.f32.mrb[0].mxu0
      %v1627 = vadd.f32 0.0, %v1626
      %v1628 = vpop.f32.mrb[0].mxu0
      %1629 = vmatprep.mubr.f32.mxu0 0.0
      %1630 = vmatmul.mubr.f32.gmra.mrb[0].mxu0 %v1424
      %v1631 = vpop.f32.mrb[0].mxu0
      %v1632 = vadd.f32 0.0, %v1631
      %v1633 = vpop.f32.mrb[0].mxu0
      %1634 = vmatprep.mubr.f32.mxu0 0.0
      %1635 = vmatmul.mubr.f32.gmra.mrb[0].mxu0 %v1427
      %v1636 = vpop.f32.mrb[0].mxu0
      %v1637 = vadd.f32 0.0, %v1636
      %v1638 = vpop.f32.mrb[0].mxu0
      %1639 = vmatprep.mubr.f32.mxu0 0.0
      %1640 = vmatmul.mubr.f32.gmra.mrb[0].mxu0 %v1430
      %v1641 = vpop.f32.mrb[0].mxu0
      %v1642 = vadd.f32 0.0, %v1641
      %v1643 = vpop.f32.mrb[0].mxu0
      %1644 = vmatprep.mubr.f32.mxu0 0.0
      %1645 = vmatmul.mubr.f32.gmra.mrb[0].mxu0 %v1433
      %v1646 = vpop.f32.mrb[0].mxu0
      %v1647 = vadd.f32 0.0, %v1646
      %v1648 = vpop.f32.mrb[0].mxu0
      %1649 = vmatprep.mubr.f32.mxu0 0.0
      %1650 = vmatmul.mubr.f32.gmra.mrb[0].mxu0 %v1436
      %v1651 = vpop.f32.mrb[0].mxu0
      %v1652 = vadd.f32 0.0, %v1651
      %v1653 = vpop.f32.mrb[0].mxu0
      %1654 = vmatprep.mubr.f32.mxu0 0.0
      %1655 = vmatmul.mubr.f32.gmra.mrb[0].mxu0 %v1439
      %v1656 = vpop.f32.mrb[0].mxu0
      %v1657 = vadd.f32 0.0, %v1656
      %v1658 = vpop.f32.mrb[0].mxu0
      %1659 = vmatprep.mubr.f32.mxu0 0.0
      %1660 = vmatmul.mubr.f32.gmra.mrb[0].mxu0 %v1442
      %v1661 = vpop.f32.mrb[0].mxu0
      %v1662 = vadd.f32 0.0, %v1661
      %v1663 = vpop.f32.mrb[0].mxu0
      %1664 = vmatprep.mubr.f32.mxu0 0.0
      %1665 = vmatmul.mubr.f32.gmra.mrb[0].mxu0 %v1445
      %v1666 = vpop.f32.mrb[0].mxu0
      %v1667 = vadd.f32 0.0, %v1666
      %v1668 = vpop.f32.mrb[0].mxu0
      %1669 = vmatprep.mubr.f32.mxu0 0.0
      %1670 = vmatmul.mubr.f32.gmra.mrb[0].mxu0 %v1448
      %v1671 = vpop.f32.mrb[0].mxu0
      %v1672 = vadd.f32 0.0, %v1671
      %v1673 = vpop.f32.mrb[0].mxu0
      %1674 = vdwg.mxu0
      %v1675 = vadd.f32 %v1287, %v1517
      %v1676 = vadd.f32 %v1288, %v1522
      %v1677 = vadd.f32 %v1289, %v1527
      %v1678 = vadd.f32 %v1290, %v1532
      %v1679 = vadd.f32 %v1291, %v1537
      %v1680 = vadd.f32 %v1292, %v1542
      %v1681 = vadd.f32 %v1293, %v1547
      %v1682 = vadd.f32 %v1294, %v1552
      %v1683 = vadd.f32 %v1295, %v1557
      %v1684 = vadd.f32 %v1296, %v1562
      %v1685 = vadd.f32 %v1297, %v1567
      %v1686 = vadd.f32 %v1298, %v1572
      %v1687 = vadd.f32 %v1299, %v1577
      %v1688 = vadd.f32 %v1300, %v1582
      %v1689 = vadd.f32 %v1301, %v1587
      %v1690 = vadd.f32 %v1302, %v1592
      %v1691 = vadd.f32 %v1303, %v1597
      %v1692 = vadd.f32 %v1304, %v1602
      %v1693 = vadd.f32 %v1305, %v1607
      %v1694 = vadd.f32 %v1306, %v1612
      %v1695 = vadd.f32 %v1307, %v1617
      %v1696 = vadd.f32 %v1308, %v1622
      %v1697 = vadd.f32 %v1309, %v1627
      %v1698 = vadd.f32 %v1310, %v1632
      %v1699 = vadd.f32 %v1311, %v1637
      %v1700 = vadd.f32 %v1312, %v1642
      %v1701 = vadd.f32 %v1313, %v1647
      %v1702 = vadd.f32 %v1314, %v1652
      %v1703 = vadd.f32 %v1315, %v1657
      %v1704 = vadd.f32 %v1316, %v1662
      %v1705 = vadd.f32 %v1317, %v1667
      %v1706 = vadd.f32 %v1318, %v1672
      %v1707 = vld [vmem:[%s1319 + $0x1] sm:$0xff]
      %v1708 = vld [vmem:[%s1319 + $0x9] sm:$0xff]
      %v1709 = vld [vmem:[%s1319 + $0x19] sm:$0xff]
      %v1710 = vld [vmem:[%s1319 + $0x21] sm:$0xff]
      %v1711 = vld [vmem:[%s1319 + $0x31] sm:$0xff]
      %v1712 = vld [vmem:[%s1319 + $0x39] sm:$0xff]
      %v1713 = vld [vmem:[%s1319 + $0x49] sm:$0xff]
      %v1714 = vld [vmem:[%s1319 + $0x51] sm:$0xff]
      %v1715 = vld [vmem:[%s1319 + $0x61] sm:$0xff]
      %v1716 = vld [vmem:[%s1319 + $0x69] sm:$0xff]
      %v1717 = vld [vmem:[%s1319 + $0x79] sm:$0xff]
      %v1718 = vld [vmem:[%s1319 + $0x81] sm:$0xff]
      %v1719 = vld [vmem:[%s1319 + $0x91] sm:$0xff]
      %v1720 = vld [vmem:[%s1319 + $0x99] sm:$0xff]
      %v1721 = vld [vmem:[%s1319 + $0xa9] sm:$0xff]
      %v1722 = vld [vmem:[%s1319 + $0xb1] sm:$0xff]
      %v1723 = vld [vmem:[%s1319 + $0xc1] sm:$0xff]
      %v1724 = vld [vmem:[%s1319 + $0xc9] sm:$0xff]
      %v1725 = vld [vmem:[%s1319 + $0xd9] sm:$0xff]
      %v1726 = vld [vmem:[%s1319 + $0xe1] sm:$0xff]
      %v1727 = vld [vmem:[%s1319 + $0xf1] sm:$0xff]
      %v1728 = vld [vmem:[%s1319 + $0xf9] sm:$0xff]
      %v1729 = vld [vmem:[%s1319 + $0x109] sm:$0xff]
      %v1730 = vld [vmem:[%s1319 + $0x111] sm:$0xff]
      %v1731 = vld [vmem:[%s1319 + $0x121] sm:$0xff]
      %v1732 = vld [vmem:[%s1319 + $0x129] sm:$0xff]
      %v1733 = vld [vmem:[%s1319 + $0x139] sm:$0xff]
      %v1734 = vld [vmem:[%s1319 + $0x141] sm:$0xff]
      %v1735 = vld [vmem:[%s1319 + $0x151] sm:$0xff]
      %v1736 = vld [vmem:[%s1319 + $0x159] sm:$0xff]
      %v1737 = vld [vmem:[%s1319 + $0x169] sm:$0xff]
      %v1738 = vld [vmem:[%s1319 + $0x171] sm:$0xff]
      %s1739 = scalar_lea.vmem %s210, 32
      %v1740 = vld [vmem:[%s1739] sm:$0xff]
      %v1742 = vsel %vm289, %v1707, 0
      %v1745 = vsel %vm289, %v1708, 0
      %v1748 = vsel %vm289, %v1709, 0
      %v1751 = vsel %vm289, %v1710, 0
      %v1754 = vsel %vm289, %v1711, 0
      %v1757 = vsel %vm289, %v1712, 0
      %v1760 = vsel %vm289, %v1713, 0
      %v1763 = vsel %vm289, %v1714, 0
      %v1766 = vsel %vm289, %v1715, 0
      %v1769 = vsel %vm289, %v1716, 0
      %v1772 = vsel %vm289, %v1717, 0
      %v1775 = vsel %vm289, %v1718, 0
      %v1778 = vsel %vm289, %v1719, 0
      %v1781 = vsel %vm289, %v1720, 0
      %v1784 = vsel %vm289, %v1721, 0
      %v1787 = vsel %vm289, %v1722, 0
      %v1790 = vsel %vm289, %v1723, 0
      %v1793 = vsel %vm289, %v1724, 0
      %v1796 = vsel %vm289, %v1725, 0
      %v1799 = vsel %vm289, %v1726, 0
      %v1802 = vsel %vm289, %v1727, 0
      %v1805 = vsel %vm289, %v1728, 0
      %v1808 = vsel %vm289, %v1729, 0
      %v1811 = vsel %vm289, %v1730, 0
      %v1814 = vsel %vm289, %v1731, 0
      %v1817 = vsel %vm289, %v1732, 0
      %v1820 = vsel %vm289, %v1733, 0
      %v1823 = vsel %vm289, %v1734, 0
      %v1826 = vsel %vm289, %v1735, 0
      %v1829 = vsel %vm289, %v1736, 0
      %v1832 = vsel %vm289, %v1737, 0
      %v1835 = vsel %vm289, %v1738, 0
      %1837 = vmatprep.subr.mxu0 0.0
      %1838 = vmatpush1.msra.mxu0 %v1740
      %1839 = vmatprep.subr.mxu0 0.0
      %1840 = vmatpush1.msra.mxu0 0.0
      %1841 = vmatprep.subr.mxu0 0.0
      %1842 = vmatpush1.msra.mxu0 0.0
      %1843 = vmatprep.subr.mxu0 0.0
      %1844 = vmatpush1.msra.mxu0 0.0
      %1845 = vmatprep.subr.mxu0 0.0
      %1846 = vmatpush1.msra.mxu0 0.0
      %1847 = vmatprep.subr.mxu0 0.0
      %1848 = vmatpush1.msra.mxu0 0.0
      %1849 = vmatprep.subr.mxu0 0.0
      %1850 = vmatpush1.msra.mxu0 0.0
      %1851 = vmatprep.subr.mxu0 0.0
      %1852 = vmatpush1.msra.mxu0 0.0
      %1853 = vmatprep.subr.mxu0 0.0
      %1854 = vmatpush1.msra.mxu0 0.0
      %1855 = vmatprep.subr.mxu0 0.0
      %1856 = vmatpush1.msra.mxu0 0.0
      %1857 = vmatprep.subr.mxu0 0.0
      %1858 = vmatpush1.msra.mxu0 0.0
      %1859 = vmatprep.subr.mxu0 0.0
      %1860 = vmatpush1.msra.mxu0 0.0
      %1861 = vmatprep.subr.mxu0 0.0
      %1862 = vmatpush1.msra.mxu0 0.0
      %1863 = vmatprep.subr.mxu0 0.0
      %1864 = vmatpush1.msra.mxu0 0.0
      %1865 = vmatprep.subr.mxu0 0.0
      %1866 = vmatpush1.msra.mxu0 0.0
      %1867 = vmatprep.subr.mxu0 0.0
      %1868 = vmatpush1.msra.mxu0 0.0
      %1869 = vmatprep.subr.mxu0 0.0
      %1870 = vmatpush1.msra.mxu0 0.0
      %1871 = vmatprep.subr.mxu0 0.0
      %1872 = vmatpush1.msra.mxu0 0.0
      %1873 = vmatprep.subr.mxu0 0.0
      %1874 = vmatpush1.msra.mxu0 0.0
      %1875 = vmatprep.subr.mxu0 0.0
      %1876 = vmatpush1.msra.mxu0 0.0
      %1877 = vmatprep.subr.mxu0 0.0
      %1878 = vmatpush1.msra.mxu0 0.0
      %1879 = vmatprep.subr.mxu0 0.0
      %1880 = vmatpush1.msra.mxu0 0.0
      %1881 = vmatprep.subr.mxu0 0.0
      %1882 = vmatpush1.msra.mxu0 0.0
      %1883 = vmatprep.subr.mxu0 0.0
      %1884 = vmatpush1.msra.mxu0 0.0
      %1885 = vmatprep.subr.mxu0 0.0
      %1886 = vmatpush1.msra.mxu0 0.0
      %1887 = vmatprep.subr.mxu0 0.0
      %1888 = vmatpush1.msra.mxu0 0.0
      %1889 = vmatprep.subr.mxu0 0.0
      %1890 = vmatpush1.msra.mxu0 0.0
      %1891 = vmatprep.subr.mxu0 0.0
      %1892 = vmatpush1.msra.mxu0 0.0
      %1893 = vmatprep.subr.mxu0 0.0
      %1894 = vmatpush1.msra.mxu0 0.0
      %1895 = vmatprep.subr.mxu0 0.0
      %1896 = vmatpush1.msra.mxu0 0.0
      %1897 = vmatprep.subr.mxu0 0.0
      %1898 = vmatpush1.msra.mxu0 0.0
      %1899 = vmatprep.subr.mxu0 0.0
      %1900 = vmatpush1.msra.mxu0 0.0
      %1901 = vmatprep.mubr.f32.mxu0 0.0
      %1902 = vmatmul.mubr.f32.gmra.mrb[0].mxu0 %v1742
      %v1903 = vpop.f32.mrb[0].mxu0
      %v1904 = vadd.f32 0.0, %v1903
      %v1905 = vpop.f32.mrb[0].mxu0
      %1906 = vmatprep.mubr.f32.mxu0 0.0
      %1907 = vmatmul.mubr.f32.gmra.mrb[0].mxu0 %v1745
      %v1908 = vpop.f32.mrb[0].mxu0
      %v1909 = vadd.f32 0.0, %v1908
      %v1910 = vpop.f32.mrb[0].mxu0
      %1911 = vmatprep.mubr.f32.mxu0 0.0
      %1912 = vmatmul.mubr.f32.gmra.mrb[0].mxu0 %v1748
      %v1913 = vpop.f32.mrb[0].mxu0
      %v1914 = vadd.f32 0.0, %v1913
      %v1915 = vpop.f32.mrb[0].mxu0
      %1916 = vmatprep.mubr.f32.mxu0 0.0
      %1917 = vmatmul.mubr.f32.gmra.mrb[0].mxu0 %v1751
      %v1918 = vpop.f32.mrb[0].mxu0
      %v1919 = vadd.f32 0.0, %v1918
      %v1920 = vpop.f32.mrb[0].mxu0
      %1921 = vmatprep.mubr.f32.mxu0 0.0
      %1922 = vmatmul.mubr.f32.gmra.mrb[0].mxu0 %v1754
      %v1923 = vpop.f32.mrb[0].mxu0
      %v1924 = vadd.f32 0.0, %v1923
      %v1925 = vpop.f32.mrb[0].mxu0
      %1926 = vmatprep.mubr.f32.mxu0 0.0
      %1927 = vmatmul.mubr.f32.gmra.mrb[0].mxu0 %v1757
      %v1928 = vpop.f32.mrb[0].mxu0
      %v1929 = vadd.f32 0.0, %v1928
      %v1930 = vpop.f32.mrb[0].mxu0
      %1931 = vmatprep.mubr.f32.mxu0 0.0
      %1932 = vmatmul.mubr.f32.gmra.mrb[0].mxu0 %v1760
      %v1933 = vpop.f32.mrb[0].mxu0
      %v1934 = vadd.f32 0.0, %v1933
      %v1935 = vpop.f32.mrb[0].mxu0
      %1936 = vmatprep.mubr.f32.mxu0 0.0
      %1937 = vmatmul.mubr.f32.gmra.mrb[0].mxu0 %v1763
      %v1938 = vpop.f32.mrb[0].mxu0
      %v1939 = vadd.f32 0.0, %v1938
      %v1940 = vpop.f32.mrb[0].mxu0
      %1941 = vmatprep.mubr.f32.mxu0 0.0
      %1942 = vmatmul.mubr.f32.gmra.mrb[0].mxu0 %v1766
      %v1943 = vpop.f32.mrb[0].mxu0
      %v1944 = vadd.f32 0.0, %v1943
      %v1945 = vpop.f32.mrb[0].mxu0
      %1946 = vmatprep.mubr.f32.mxu0 0.0
      %1947 = vmatmul.mubr.f32.gmra.mrb[0].mxu0 %v1769
      %v1948 = vpop.f32.mrb[0].mxu0
      %v1949 = vadd.f32 0.0, %v1948
      %v1950 = vpop.f32.mrb[0].mxu0
      %1951 = vmatprep.mubr.f32.mxu0 0.0
      %1952 = vmatmul.mubr.f32.gmra.mrb[0].mxu0 %v1772
      %v1953 = vpop.f32.mrb[0].mxu0
      %v1954 = vadd.f32 0.0, %v1953
      %v1955 = vpop.f32.mrb[0].mxu0
      %1956 = vmatprep.mubr.f32.mxu0 0.0
      %1957 = vmatmul.mubr.f32.gmra.mrb[0].mxu0 %v1775
      %v1958 = vpop.f32.mrb[0].mxu0
      %v1959 = vadd.f32 0.0, %v1958
      %v1960 = vpop.f32.mrb[0].mxu0
      %1961 = vmatprep.mubr.f32.mxu0 0.0
      %1962 = vmatmul.mubr.f32.gmra.mrb[0].mxu0 %v1778
      %v1963 = vpop.f32.mrb[0].mxu0
      %v1964 = vadd.f32 0.0, %v1963
      %v1965 = vpop.f32.mrb[0].mxu0
      %1966 = vmatprep.mubr.f32.mxu0 0.0
      %1967 = vmatmul.mubr.f32.gmra.mrb[0].mxu0 %v1781
      %v1968 = vpop.f32.mrb[0].mxu0
      %v1969 = vadd.f32 0.0, %v1968
      %v1970 = vpop.f32.mrb[0].mxu0
      %1971 = vmatprep.mubr.f32.mxu0 0.0
      %1972 = vmatmul.mubr.f32.gmra.mrb[0].mxu0 %v1784
      %v1973 = vpop.f32.mrb[0].mxu0
      %v1974 = vadd.f32 0.0, %v1973
      %v1975 = vpop.f32.mrb[0].mxu0
      %1976 = vmatprep.mubr.f32.mxu0 0.0
      %1977 = vmatmul.mubr.f32.gmra.mrb[0].mxu0 %v1787
      %v1978 = vpop.f32.mrb[0].mxu0
      %v1979 = vadd.f32 0.0, %v1978
      %v1980 = vpop.f32.mrb[0].mxu0
      %1981 = vmatprep.mubr.f32.mxu0 0.0
      %1982 = vmatmul.mubr.f32.gmra.mrb[0].mxu0 %v1790
      %v1983 = vpop.f32.mrb[0].mxu0
      %v1984 = vadd.f32 0.0, %v1983
      %v1985 = vpop.f32.mrb[0].mxu0
      %1986 = vmatprep.mubr.f32.mxu0 0.0
      %1987 = vmatmul.mubr.f32.gmra.mrb[0].mxu0 %v1793
      %v1988 = vpop.f32.mrb[0].mxu0
      %v1989 = vadd.f32 0.0, %v1988
      %v1990 = vpop.f32.mrb[0].mxu0
      %1991 = vmatprep.mubr.f32.mxu0 0.0
      %1992 = vmatmul.mubr.f32.gmra.mrb[0].mxu0 %v1796
      %v1993 = vpop.f32.mrb[0].mxu0
      %v1994 = vadd.f32 0.0, %v1993
      %v1995 = vpop.f32.mrb[0].mxu0
      %1996 = vmatprep.mubr.f32.mxu0 0.0
      %1997 = vmatmul.mubr.f32.gmra.mrb[0].mxu0 %v1799
      %v1998 = vpop.f32.mrb[0].mxu0
      %v1999 = vadd.f32 0.0, %v1998
      %v2000 = vpop.f32.mrb[0].mxu0
      %2001 = vmatprep.mubr.f32.mxu0 0.0
      %2002 = vmatmul.mubr.f32.gmra.mrb[0].mxu0 %v1802
      %v2003 = vpop.f32.mrb[0].mxu0
      %v2004 = vadd.f32 0.0, %v2003
      %v2005 = vpop.f32.mrb[0].mxu0
      %2006 = vmatprep.mubr.f32.mxu0 0.0
      %2007 = vmatmul.mubr.f32.gmra.mrb[0].mxu0 %v1805
      %v2008 = vpop.f32.mrb[0].mxu0
      %v2009 = vadd.f32 0.0, %v2008
      %v2010 = vpop.f32.mrb[0].mxu0
      %2011 = vmatprep.mubr.f32.mxu0 0.0
      %2012 = vmatmul.mubr.f32.gmra.mrb[0].mxu0 %v1808
      %v2013 = vpop.f32.mrb[0].mxu0
      %v2014 = vadd.f32 0.0, %v2013
      %v2015 = vpop.f32.mrb[0].mxu0
      %2016 = vmatprep.mubr.f32.mxu0 0.0
      %2017 = vmatmul.mubr.f32.gmra.mrb[0].mxu0 %v1811
      %v2018 = vpop.f32.mrb[0].mxu0
      %v2019 = vadd.f32 0.0, %v2018
      %v2020 = vpop.f32.mrb[0].mxu0
      %2021 = vmatprep.mubr.f32.mxu0 0.0
      %2022 = vmatmul.mubr.f32.gmra.mrb[0].mxu0 %v1814
      %v2023 = vpop.f32.mrb[0].mxu0
      %v2024 = vadd.f32 0.0, %v2023
      %v2025 = vpop.f32.mrb[0].mxu0
      %2026 = vmatprep.mubr.f32.mxu0 0.0
      %2027 = vmatmul.mubr.f32.gmra.mrb[0].mxu0 %v1817
      %v2028 = vpop.f32.mrb[0].mxu0
      %v2029 = vadd.f32 0.0, %v2028
      %v2030 = vpop.f32.mrb[0].mxu0
      %2031 = vmatprep.mubr.f32.mxu0 0.0
      %2032 = vmatmul.mubr.f32.gmra.mrb[0].mxu0 %v1820
      %v2033 = vpop.f32.mrb[0].mxu0
      %v2034 = vadd.f32 0.0, %v2033
      %v2035 = vpop.f32.mrb[0].mxu0
      %2036 = vmatprep.mubr.f32.mxu0 0.0
      %2037 = vmatmul.mubr.f32.gmra.mrb[0].mxu0 %v1823
      %v2038 = vpop.f32.mrb[0].mxu0
      %v2039 = vadd.f32 0.0, %v2038
      %v2040 = vpop.f32.mrb[0].mxu0
      %2041 = vmatprep.mubr.f32.mxu0 0.0
      %2042 = vmatmul.mubr.f32.gmra.mrb[0].mxu0 %v1826
      %v2043 = vpop.f32.mrb[0].mxu0
      %v2044 = vadd.f32 0.0, %v2043
      %v2045 = vpop.f32.mrb[0].mxu0
      %2046 = vmatprep.mubr.f32.mxu0 0.0
      %2047 = vmatmul.mubr.f32.gmra.mrb[0].mxu0 %v1829
      %v2048 = vpop.f32.mrb[0].mxu0
      %v2049 = vadd.f32 0.0, %v2048
      %v2050 = vpop.f32.mrb[0].mxu0
      %2051 = vmatprep.mubr.f32.mxu0 0.0
      %2052 = vmatmul.mubr.f32.gmra.mrb[0].mxu0 %v1832
      %v2053 = vpop.f32.mrb[0].mxu0
      %v2054 = vadd.f32 0.0, %v2053
      %v2055 = vpop.f32.mrb[0].mxu0
      %2056 = vmatprep.mubr.f32.mxu0 0.0
      %2057 = vmatmul.mubr.f32.gmra.mrb[0].mxu0 %v1835
      %v2058 = vpop.f32.mrb[0].mxu0
      %v2059 = vadd.f32 0.0, %v2058
      %v2060 = vpop.f32.mrb[0].mxu0
      %2061 = vdwg.mxu0
      %v2062 = vadd.f32 %v1675, %v1904
      %v2063 = vadd.f32 %v1676, %v1909
      %v2064 = vadd.f32 %v1677, %v1914
      %v2065 = vadd.f32 %v1678, %v1919
      %v2066 = vadd.f32 %v1679, %v1924
      %v2067 = vadd.f32 %v1680, %v1929
      %v2068 = vadd.f32 %v1681, %v1934
      %v2069 = vadd.f32 %v1682, %v1939
      %v2070 = vadd.f32 %v1683, %v1944
      %v2071 = vadd.f32 %v1684, %v1949
      %v2072 = vadd.f32 %v1685, %v1954
      %v2073 = vadd.f32 %v1686, %v1959
      %v2074 = vadd.f32 %v1687, %v1964
      %v2075 = vadd.f32 %v1688, %v1969
      %v2076 = vadd.f32 %v1689, %v1974
      %v2077 = vadd.f32 %v1690, %v1979
      %v2078 = vadd.f32 %v1691, %v1984
      %v2079 = vadd.f32 %v1692, %v1989
      %v2080 = vadd.f32 %v1693, %v1994
      %v2081 = vadd.f32 %v1694, %v1999
      %v2082 = vadd.f32 %v1695, %v2004
      %v2083 = vadd.f32 %v1696, %v2009
      %v2084 = vadd.f32 %v1697, %v2014
      %v2085 = vadd.f32 %v1698, %v2019
      %v2086 = vadd.f32 %v1699, %v2024
      %v2087 = vadd.f32 %v1700, %v2029
      %v2088 = vadd.f32 %v1701, %v2034
      %v2089 = vadd.f32 %v1702, %v2039
      %v2090 = vadd.f32 %v1703, %v2044
      %v2091 = vadd.f32 %v1704, %v2049
      %v2092 = vadd.f32 %v1705, %v2054
      %v2093 = vadd.f32 %v1706, %v2059
      %v2094 = vld [vmem:[%s1319 + $0x2] sm:$0xff]
      %v2095 = vld [vmem:[%s1319 + $0xa] sm:$0xff]
      %v2096 = vld [vmem:[%s1319 + $0x1a] sm:$0xff]
      %v2097 = vld [vmem:[%s1319 + $0x22] sm:$0xff]
      %v2098 = vld [vmem:[%s1319 + $0x32] sm:$0xff]
      %v2099 = vld [vmem:[%s1319 + $0x3a] sm:$0xff]
      %v2100 = vld [vmem:[%s1319 + $0x4a] sm:$0xff]
      %v2101 = vld [vmem:[%s1319 + $0x52] sm:$0xff]
      %v2102 = vld [vmem:[%s1319 + $0x62] sm:$0xff]
      %v2103 = vld [vmem:[%s1319 + $0x6a] sm:$0xff]
      %v2104 = vld [vmem:[%s1319 + $0x7a] sm:$0xff]
      %v2105 = vld [vmem:[%s1319 + $0x82] sm:$0xff]
      %v2106 = vld [vmem:[%s1319 + $0x92] sm:$0xff]
      %v2107 = vld [vmem:[%s1319 + $0x9a] sm:$0xff]
      %v2108 = vld [vmem:[%s1319 + $0xaa] sm:$0xff]
      %v2109 = vld [vmem:[%s1319 + $0xb2] sm:$0xff]
      %v2110 = vld [vmem:[%s1319 + $0xc2] sm:$0xff]
      %v2111 = vld [vmem:[%s1319 + $0xca] sm:$0xff]
      %v2112 = vld [vmem:[%s1319 + $0xda] sm:$0xff]
      %v2113 = vld [vmem:[%s1319 + $0xe2] sm:$0xff]
      %v2114 = vld [vmem:[%s1319 + $0xf2] sm:$0xff]
      %v2115 = vld [vmem:[%s1319 + $0xfa] sm:$0xff]
      %v2116 = vld [vmem:[%s1319 + $0x10a] sm:$0xff]
      %v2117 = vld [vmem:[%s1319 + $0x112] sm:$0xff]
      %v2118 = vld [vmem:[%s1319 + $0x122] sm:$0xff]
      %v2119 = vld [vmem:[%s1319 + $0x12a] sm:$0xff]
      %v2120 = vld [vmem:[%s1319 + $0x13a] sm:$0xff]
      %v2121 = vld [vmem:[%s1319 + $0x142] sm:$0xff]
      %v2122 = vld [vmem:[%s1319 + $0x152] sm:$0xff]
      %v2123 = vld [vmem:[%s1319 + $0x15a] sm:$0xff]
      %v2124 = vld [vmem:[%s1319 + $0x16a] sm:$0xff]
      %v2125 = vld [vmem:[%s1319 + $0x172] sm:$0xff]
      %s2126 = scalar_lea.vmem %s210, 40
      %v2127 = vld [vmem:[%s2126] sm:$0xff]
      %v2129 = vsel %vm289, %v2094, 0
      %v2132 = vsel %vm289, %v2095, 0
      %v2135 = vsel %vm289, %v2096, 0
      %v2138 = vsel %vm289, %v2097, 0
      %v2141 = vsel %vm289, %v2098, 0
      %v2144 = vsel %vm289, %v2099, 0
      %v2147 = vsel %vm289, %v2100, 0
      %v2150 = vsel %vm289, %v2101, 0
      %v2153 = vsel %vm289, %v2102, 0
      %v2156 = vsel %vm289, %v2103, 0
      %v2159 = vsel %vm289, %v2104, 0
      %v2162 = vsel %vm289, %v2105, 0
      %v2165 = vsel %vm289, %v2106, 0
      %v2168 = vsel %vm289, %v2107, 0
      %v2171 = vsel %vm289, %v2108, 0
      %v2174 = vsel %vm289, %v2109, 0
      %v2177 = vsel %vm289, %v2110, 0
      %v2180 = vsel %vm289, %v2111, 0
      %v2183 = vsel %vm289, %v2112, 0
      %v2186 = vsel %vm289, %v2113, 0
      %v2189 = vsel %vm289, %v2114, 0
      %v2192 = vsel %vm289, %v2115, 0
      %v2195 = vsel %vm289, %v2116, 0
      %v2198 = vsel %vm289, %v2117, 0
      %v2201 = vsel %vm289, %v2118, 0
      %v2204 = vsel %vm289, %v2119, 0
      %v2207 = vsel %vm289, %v2120, 0
      %v2210 = vsel %vm289, %v2121, 0
      %v2213 = vsel %vm289, %v2122, 0
      %v2216 = vsel %vm289, %v2123, 0
      %v2219 = vsel %vm289, %v2124, 0
      %v2222 = vsel %vm289, %v2125, 0
      %2224 = vmatprep.subr.mxu0 0.0
      %2225 = vmatpush1.msra.mxu0 %v2127
      %2226 = vmatprep.subr.mxu0 0.0
      %2227 = vmatpush1.msra.mxu0 0.0
      %2228 = vmatprep.subr.mxu0 0.0
      %2229 = vmatpush1.msra.mxu0 0.0
      %2230 = vmatprep.subr.mxu0 0.0
      %2231 = vmatpush1.msra.mxu0 0.0
      %2232 = vmatprep.subr.mxu0 0.0
      %2233 = vmatpush1.msra.mxu0 0.0
      %2234 = vmatprep.subr.mxu0 0.0
      %2235 = vmatpush1.msra.mxu0 0.0
      %2236 = vmatprep.subr.mxu0 0.0
      %2237 = vmatpush1.msra.mxu0 0.0
      %2238 = vmatprep.subr.mxu0 0.0
      %2239 = vmatpush1.msra.mxu0 0.0
      %2240 = vmatprep.subr.mxu0 0.0
      %2241 = vmatpush1.msra.mxu0 0.0
      %2242 = vmatprep.subr.mxu0 0.0
      %2243 = vmatpush1.msra.mxu0 0.0
      %2244 = vmatprep.subr.mxu0 0.0
      %2245 = vmatpush1.msra.mxu0 0.0
      %2246 = vmatprep.subr.mxu0 0.0
      %2247 = vmatpush1.msra.mxu0 0.0
      %2248 = vmatprep.subr.mxu0 0.0
      %2249 = vmatpush1.msra.mxu0 0.0
      %2250 = vmatprep.subr.mxu0 0.0
      %2251 = vmatpush1.msra.mxu0 0.0
      %2252 = vmatprep.subr.mxu0 0.0
      %2253 = vmatpush1.msra.mxu0 0.0
      %2254 = vmatprep.subr.mxu0 0.0
      %2255 = vmatpush1.msra.mxu0 0.0
      %2256 = vmatprep.subr.mxu0 0.0
      %2257 = vmatpush1.msra.mxu0 0.0
      %2258 = vmatprep.subr.mxu0 0.0
      %2259 = vmatpush1.msra.mxu0 0.0
      %2260 = vmatprep.subr.mxu0 0.0
      %2261 = vmatpush1.msra.mxu0 0.0
      %2262 = vmatprep.subr.mxu0 0.0
      %2263 = vmatpush1.msra.mxu0 0.0
      %2264 = vmatprep.subr.mxu0 0.0
      %2265 = vmatpush1.msra.mxu0 0.0
      %2266 = vmatprep.subr.mxu0 0.0
      %2267 = vmatpush1.msra.mxu0 0.0
      %2268 = vmatprep.subr.mxu0 0.0
      %2269 = vmatpush1.msra.mxu0 0.0
      %2270 = vmatprep.subr.mxu0 0.0
      %2271 = vmatpush1.msra.mxu0 0.0
      %2272 = vmatprep.subr.mxu0 0.0
      %2273 = vmatpush1.msra.mxu0 0.0
      %2274 = vmatprep.subr.mxu0 0.0
      %2275 = vmatpush1.msra.mxu0 0.0
      %2276 = vmatprep.subr.mxu0 0.0
      %2277 = vmatpush1.msra.mxu0 0.0
      %2278 = vmatprep.subr.mxu0 0.0
      %2279 = vmatpush1.msra.mxu0 0.0
      %2280 = vmatprep.subr.mxu0 0.0
      %2281 = vmatpush1.msra.mxu0 0.0
      %2282 = vmatprep.subr.mxu0 0.0
      %2283 = vmatpush1.msra.mxu0 0.0
      %2284 = vmatprep.subr.mxu0 0.0
      %2285 = vmatpush1.msra.mxu0 0.0
      %2286 = vmatprep.subr.mxu0 0.0
      %2287 = vmatpush1.msra.mxu0 0.0
      %2288 = vmatprep.mubr.f32.mxu0 0.0
      %2289 = vmatmul.mubr.f32.gmra.mrb[0].mxu0 %v2129
      %v2290 = vpop.f32.mrb[0].mxu0
      %v2291 = vadd.f32 0.0, %v2290
      %v2292 = vpop.f32.mrb[0].mxu0
      %2293 = vmatprep.mubr.f32.mxu0 0.0
      %2294 = vmatmul.mubr.f32.gmra.mrb[0].mxu0 %v2132
      %v2295 = vpop.f32.mrb[0].mxu0
      %v2296 = vadd.f32 0.0, %v2295
      %v2297 = vpop.f32.mrb[0].mxu0
      %2298 = vmatprep.mubr.f32.mxu0 0.0
      %2299 = vmatmul.mubr.f32.gmra.mrb[0].mxu0 %v2135
      %v2300 = vpop.f32.mrb[0].mxu0
      %v2301 = vadd.f32 0.0, %v2300
      %v2302 = vpop.f32.mrb[0].mxu0
      %2303 = vmatprep.mubr.f32.mxu0 0.0
      %2304 = vmatmul.mubr.f32.gmra.mrb[0].mxu0 %v2138
      %v2305 = vpop.f32.mrb[0].mxu0
      %v2306 = vadd.f32 0.0, %v2305
      %v2307 = vpop.f32.mrb[0].mxu0
      %2308 = vmatprep.mubr.f32.mxu0 0.0
      %2309 = vmatmul.mubr.f32.gmra.mrb[0].mxu0 %v2141
      %v2310 = vpop.f32.mrb[0].mxu0
      %v2311 = vadd.f32 0.0, %v2310
      %v2312 = vpop.f32.mrb[0].mxu0
      %2313 = vmatprep.mubr.f32.mxu0 0.0
      %2314 = vmatmul.mubr.f32.gmra.mrb[0].mxu0 %v2144
      %v2315 = vpop.f32.mrb[0].mxu0
      %v2316 = vadd.f32 0.0, %v2315
      %v2317 = vpop.f32.mrb[0].mxu0
      %2318 = vmatprep.mubr.f32.mxu0 0.0
      %2319 = vmatmul.mubr.f32.gmra.mrb[0].mxu0 %v2147
      %v2320 = vpop.f32.mrb[0].mxu0
      %v2321 = vadd.f32 0.0, %v2320
      %v2322 = vpop.f32.mrb[0].mxu0
      %2323 = vmatprep.mubr.f32.mxu0 0.0
      %2324 = vmatmul.mubr.f32.gmra.mrb[0].mxu0 %v2150
      %v2325 = vpop.f32.mrb[0].mxu0
      %v2326 = vadd.f32 0.0, %v2325
      %v2327 = vpop.f32.mrb[0].mxu0
      %2328 = vmatprep.mubr.f32.mxu0 0.0
      %2329 = vmatmul.mubr.f32.gmra.mrb[0].mxu0 %v2153
      %v2330 = vpop.f32.mrb[0].mxu0
      %v2331 = vadd.f32 0.0, %v2330
      %v2332 = vpop.f32.mrb[0].mxu0
      %2333 = vmatprep.mubr.f32.mxu0 0.0
      %2334 = vmatmul.mubr.f32.gmra.mrb[0].mxu0 %v2156
      %v2335 = vpop.f32.mrb[0].mxu0
      %v2336 = vadd.f32 0.0, %v2335
      %v2337 = vpop.f32.mrb[0].mxu0
      %2338 = vmatprep.mubr.f32.mxu0 0.0
      %2339 = vmatmul.mubr.f32.gmra.mrb[0].mxu0 %v2159
      %v2340 = vpop.f32.mrb[0].mxu0
      %v2341 = vadd.f32 0.0, %v2340
      %v2342 = vpop.f32.mrb[0].mxu0
      %2343 = vmatprep.mubr.f32.mxu0 0.0
      %2344 = vmatmul.mubr.f32.gmra.mrb[0].mxu0 %v2162
      %v2345 = vpop.f32.mrb[0].mxu0
      %v2346 = vadd.f32 0.0, %v2345
      %v2347 = vpop.f32.mrb[0].mxu0
      %2348 = vmatprep.mubr.f32.mxu0 0.0
      %2349 = vmatmul.mubr.f32.gmra.mrb[0].mxu0 %v2165
      %v2350 = vpop.f32.mrb[0].mxu0
      %v2351 = vadd.f32 0.0, %v2350
      %v2352 = vpop.f32.mrb[0].mxu0
      %2353 = vmatprep.mubr.f32.mxu0 0.0
      %2354 = vmatmul.mubr.f32.gmra.mrb[0].mxu0 %v2168
      %v2355 = vpop.f32.mrb[0].mxu0
      %v2356 = vadd.f32 0.0, %v2355
      %v2357 = vpop.f32.mrb[0].mxu0
      %2358 = vmatprep.mubr.f32.mxu0 0.0
      %2359 = vmatmul.mubr.f32.gmra.mrb[0].mxu0 %v2171
      %v2360 = vpop.f32.mrb[0].mxu0
      %v2361 = vadd.f32 0.0, %v2360
      %v2362 = vpop.f32.mrb[0].mxu0
      %2363 = vmatprep.mubr.f32.mxu0 0.0
      %2364 = vmatmul.mubr.f32.gmra.mrb[0].mxu0 %v2174
      %v2365 = vpop.f32.mrb[0].mxu0
      %v2366 = vadd.f32 0.0, %v2365
      %v2367 = vpop.f32.mrb[0].mxu0
      %2368 = vmatprep.mubr.f32.mxu0 0.0
      %2369 = vmatmul.mubr.f32.gmra.mrb[0].mxu0 %v2177
      %v2370 = vpop.f32.mrb[0].mxu0
      %v2371 = vadd.f32 0.0, %v2370
      %v2372 = vpop.f32.mrb[0].mxu0
      %2373 = vmatprep.mubr.f32.mxu0 0.0
      %2374 = vmatmul.mubr.f32.gmra.mrb[0].mxu0 %v2180
      %v2375 = vpop.f32.mrb[0].mxu0
      %v2376 = vadd.f32 0.0, %v2375
      %v2377 = vpop.f32.mrb[0].mxu0
      %2378 = vmatprep.mubr.f32.mxu0 0.0
      %2379 = vmatmul.mubr.f32.gmra.mrb[0].mxu0 %v2183
      %v2380 = vpop.f32.mrb[0].mxu0
      %v2381 = vadd.f32 0.0, %v2380
      %v2382 = vpop.f32.mrb[0].mxu0
      %2383 = vmatprep.mubr.f32.mxu0 0.0
      %2384 = vmatmul.mubr.f32.gmra.mrb[0].mxu0 %v2186
      %v2385 = vpop.f32.mrb[0].mxu0
      %v2386 = vadd.f32 0.0, %v2385
      %v2387 = vpop.f32.mrb[0].mxu0
      %2388 = vmatprep.mubr.f32.mxu0 0.0
      %2389 = vmatmul.mubr.f32.gmra.mrb[0].mxu0 %v2189
      %v2390 = vpop.f32.mrb[0].mxu0
      %v2391 = vadd.f32 0.0, %v2390
      %v2392 = vpop.f32.mrb[0].mxu0
      %2393 = vmatprep.mubr.f32.mxu0 0.0
      %2394 = vmatmul.mubr.f32.gmra.mrb[0].mxu0 %v2192
      %v2395 = vpop.f32.mrb[0].mxu0
      %v2396 = vadd.f32 0.0, %v2395
      %v2397 = vpop.f32.mrb[0].mxu0
      %2398 = vmatprep.mubr.f32.mxu0 0.0
      %2399 = vmatmul.mubr.f32.gmra.mrb[0].mxu0 %v2195
      %v2400 = vpop.f32.mrb[0].mxu0
      %v2401 = vadd.f32 0.0, %v2400
      %v2402 = vpop.f32.mrb[0].mxu0
      %2403 = vmatprep.mubr.f32.mxu0 0.0
      %2404 = vmatmul.mubr.f32.gmra.mrb[0].mxu0 %v2198
      %v2405 = vpop.f32.mrb[0].mxu0
      %v2406 = vadd.f32 0.0, %v2405
      %v2407 = vpop.f32.mrb[0].mxu0
      %2408 = vmatprep.mubr.f32.mxu0 0.0
      %2409 = vmatmul.mubr.f32.gmra.mrb[0].mxu0 %v2201
      %v2410 = vpop.f32.mrb[0].mxu0
      %v2411 = vadd.f32 0.0, %v2410
      %v2412 = vpop.f32.mrb[0].mxu0
      %2413 = vmatprep.mubr.f32.mxu0 0.0
      %2414 = vmatmul.mubr.f32.gmra.mrb[0].mxu0 %v2204
      %v2415 = vpop.f32.mrb[0].mxu0
      %v2416 = vadd.f32 0.0, %v2415
      %v2417 = vpop.f32.mrb[0].mxu0
      %2418 = vmatprep.mubr.f32.mxu0 0.0
      %2419 = vmatmul.mubr.f32.gmra.mrb[0].mxu0 %v2207
      %v2420 = vpop.f32.mrb[0].mxu0
      %v2421 = vadd.f32 0.0, %v2420
      %v2422 = vpop.f32.mrb[0].mxu0
      %2423 = vmatprep.mubr.f32.mxu0 0.0
      %2424 = vmatmul.mubr.f32.gmra.mrb[0].mxu0 %v2210
      %v2425 = vpop.f32.mrb[0].mxu0
      %v2426 = vadd.f32 0.0, %v2425
      %v2427 = vpop.f32.mrb[0].mxu0
      %2428 = vmatprep.mubr.f32.mxu0 0.0
      %2429 = vmatmul.mubr.f32.gmra.mrb[0].mxu0 %v2213
      %v2430 = vpop.f32.mrb[0].mxu0
      %v2431 = vadd.f32 0.0, %v2430
      %v2432 = vpop.f32.mrb[0].mxu0
      %2433 = vmatprep.mubr.f32.mxu0 0.0
      %2434 = vmatmul.mubr.f32.gmra.mrb[0].mxu0 %v2216
      %v2435 = vpop.f32.mrb[0].mxu0
      %v2436 = vadd.f32 0.0, %v2435
      %v2437 = vpop.f32.mrb[0].mxu0
      %2438 = vmatprep.mubr.f32.mxu0 0.0
      %2439 = vmatmul.mubr.f32.gmra.mrb[0].mxu0 %v2219
      %v2440 = vpop.f32.mrb[0].mxu0
      %v2441 = vadd.f32 0.0, %v2440
      %v2442 = vpop.f32.mrb[0].mxu0
      %2443 = vmatprep.mubr.f32.mxu0 0.0
      %2444 = vmatmul.mubr.f32.gmra.mrb[0].mxu0 %v2222
      %v2445 = vpop.f32.mrb[0].mxu0
      %v2446 = vadd.f32 0.0, %v2445
      %v2447 = vpop.f32.mrb[0].mxu0
      %2448 = vdwg.mxu0
      %v2449 = vadd.f32 %v2062, %v2291
      %v2450 = vadd.f32 %v2063, %v2296
      %v2451 = vadd.f32 %v2064, %v2301
      %v2452 = vadd.f32 %v2065, %v2306
      %v2453 = vadd.f32 %v2066, %v2311
      %v2454 = vadd.f32 %v2067, %v2316
      %v2455 = vadd.f32 %v2068, %v2321
      %v2456 = vadd.f32 %v2069, %v2326
      %v2457 = vadd.f32 %v2070, %v2331
      %v2458 = vadd.f32 %v2071, %v2336
      %v2459 = vadd.f32 %v2072, %v2341
      %v2460 = vadd.f32 %v2073, %v2346
      %v2461 = vadd.f32 %v2074, %v2351
      %v2462 = vadd.f32 %v2075, %v2356
      %v2463 = vadd.f32 %v2076, %v2361
      %v2464 = vadd.f32 %v2077, %v2366
      %v2465 = vadd.f32 %v2078, %v2371
      %v2466 = vadd.f32 %v2079, %v2376
      %v2467 = vadd.f32 %v2080, %v2381
      %v2468 = vadd.f32 %v2081, %v2386
      %v2469 = vadd.f32 %v2082, %v2391
      %v2470 = vadd.f32 %v2083, %v2396
      %v2471 = vadd.f32 %v2084, %v2401
      %v2472 = vadd.f32 %v2085, %v2406
      %v2473 = vadd.f32 %v2086, %v2411
      %v2474 = vadd.f32 %v2087, %v2416
      %v2475 = vadd.f32 %v2088, %v2421
      %v2476 = vadd.f32 %v2089, %v2426
      %v2477 = vadd.f32 %v2090, %v2431
      %v2478 = vadd.f32 %v2091, %v2436
      %v2479 = vadd.f32 %v2092, %v2441
      %v2480 = vadd.f32 %v2093, %v2446
      %s2481 = scalar_lea.vmem %s206, 48
      %v2482 = vld [vmem:[%s2481] sm:$0xff]
      %v2483 = vld [vmem:[%s2481 + $0x8] sm:$0xff]
      %v2484 = vld [vmem:[%s2481 + $0x18] sm:$0xff]
      %v2485 = vld [vmem:[%s2481 + $0x20] sm:$0xff]
      %v2486 = vld [vmem:[%s2481 + $0x30] sm:$0xff]
      %v2487 = vld [vmem:[%s2481 + $0x38] sm:$0xff]
      %v2488 = vld [vmem:[%s2481 + $0x48] sm:$0xff]
      %v2489 = vld [vmem:[%s2481 + $0x50] sm:$0xff]
      %v2490 = vld [vmem:[%s2481 + $0x60] sm:$0xff]
      %v2491 = vld [vmem:[%s2481 + $0x68] sm:$0xff]
      %v2492 = vld [vmem:[%s2481 + $0x78] sm:$0xff]
      %v2493 = vld [vmem:[%s2481 + $0x80] sm:$0xff]
      %v2494 = vld [vmem:[%s2481 + $0x90] sm:$0xff]
      %v2495 = vld [vmem:[%s2481 + $0x98] sm:$0xff]
      %v2496 = vld [vmem:[%s2481 + $0xa8] sm:$0xff]
      %v2497 = vld [vmem:[%s2481 + $0xb0] sm:$0xff]
      %v2498 = vld [vmem:[%s2481 + $0xc0] sm:$0xff]
      %v2499 = vld [vmem:[%s2481 + $0xc8] sm:$0xff]
      %v2500 = vld [vmem:[%s2481 + $0xd8] sm:$0xff]
      %v2501 = vld [vmem:[%s2481 + $0xe0] sm:$0xff]
      %v2502 = vld [vmem:[%s2481 + $0xf0] sm:$0xff]
      %v2503 = vld [vmem:[%s2481 + $0xf8] sm:$0xff]
      %v2504 = vld [vmem:[%s2481 + $0x108] sm:$0xff]
      %v2505 = vld [vmem:[%s2481 + $0x110] sm:$0xff]
      %v2506 = vld [vmem:[%s2481 + $0x120] sm:$0xff]
      %v2507 = vld [vmem:[%s2481 + $0x128] sm:$0xff]
      %v2508 = vld [vmem:[%s2481 + $0x138] sm:$0xff]
      %v2509 = vld [vmem:[%s2481 + $0x140] sm:$0xff]
      %v2510 = vld [vmem:[%s2481 + $0x150] sm:$0xff]
      %v2511 = vld [vmem:[%s2481 + $0x158] sm:$0xff]
      %v2512 = vld [vmem:[%s2481 + $0x168] sm:$0xff]
      %v2513 = vld [vmem:[%s2481 + $0x170] sm:$0xff]
      %s2514 = scalar_lea.vmem %s210, 48
      %v2515 = vld [vmem:[%s2514] sm:$0xff]
      %v2517 = vsel %vm289, %v2482, 0
      %v2520 = vsel %vm289, %v2483, 0
      %v2523 = vsel %vm289, %v2484, 0
      %v2526 = vsel %vm289, %v2485, 0
      %v2529 = vsel %vm289, %v2486, 0
      %v2532 = vsel %vm289, %v2487, 0
      %v2535 = vsel %vm289, %v2488, 0
      %v2538 = vsel %vm289, %v2489, 0
      %v2541 = vsel %vm289, %v2490, 0
      %v2544 = vsel %vm289, %v2491, 0
      %v2547 = vsel %vm289, %v2492, 0
      %v2550 = vsel %vm289, %v2493, 0
      %v2553 = vsel %vm289, %v2494, 0
      %v2556 = vsel %vm289, %v2495, 0
      %v2559 = vsel %vm289, %v2496, 0
      %v2562 = vsel %vm289, %v2497, 0
      %v2565 = vsel %vm289, %v2498, 0
      %v2568 = vsel %vm289, %v2499, 0
      %v2571 = vsel %vm289, %v2500, 0
      %v2574 = vsel %vm289, %v2501, 0
      %v2577 = vsel %vm289, %v2502, 0
      %v2580 = vsel %vm289, %v2503, 0
      %v2583 = vsel %vm289, %v2504, 0
      %v2586 = vsel %vm289, %v2505, 0
      %v2589 = vsel %vm289, %v2506, 0
      %v2592 = vsel %vm289, %v2507, 0
      %v2595 = vsel %vm289, %v2508, 0
      %v2598 = vsel %vm289, %v2509, 0
      %v2601 = vsel %vm289, %v2510, 0
      %v2604 = vsel %vm289, %v2511, 0
      %v2607 = vsel %vm289, %v2512, 0
      %v2610 = vsel %vm289, %v2513, 0
      %2612 = vmatprep.subr.mxu0 0.0
      %2613 = vmatpush1.msra.mxu0 %v2515
      %2614 = vmatprep.subr.mxu0 0.0
      %2615 = vmatpush1.msra.mxu0 0.0
      %2616 = vmatprep.subr.mxu0 0.0
      %2617 = vmatpush1.msra.mxu0 0.0
      %2618 = vmatprep.subr.mxu0 0.0
      %2619 = vmatpush1.msra.mxu0 0.0
      %2620 = vmatprep.subr.mxu0 0.0
      %2621 = vmatpush1.msra.mxu0 0.0
      %2622 = vmatprep.subr.mxu0 0.0
      %2623 = vmatpush1.msra.mxu0 0.0
      %2624 = vmatprep.subr.mxu0 0.0
      %2625 = vmatpush1.msra.mxu0 0.0
      %2626 = vmatprep.subr.mxu0 0.0
      %2627 = vmatpush1.msra.mxu0 0.0
      %2628 = vmatprep.subr.mxu0 0.0
      %2629 = vmatpush1.msra.mxu0 0.0
      %2630 = vmatprep.subr.mxu0 0.0
      %2631 = vmatpush1.msra.mxu0 0.0
      %2632 = vmatprep.subr.mxu0 0.0
      %2633 = vmatpush1.msra.mxu0 0.0
      %2634 = vmatprep.subr.mxu0 0.0
      %2635 = vmatpush1.msra.mxu0 0.0
      %2636 = vmatprep.subr.mxu0 0.0
      %2637 = vmatpush1.msra.mxu0 0.0
      %2638 = vmatprep.subr.mxu0 0.0
      %2639 = vmatpush1.msra.mxu0 0.0
      %2640 = vmatprep.subr.mxu0 0.0
      %2641 = vmatpush1.msra.mxu0 0.0
      %2642 = vmatprep.subr.mxu0 0.0
      %2643 = vmatpush1.msra.mxu0 0.0
      %2644 = vmatprep.subr.mxu0 0.0
      %2645 = vmatpush1.msra.mxu0 0.0
      %2646 = vmatprep.subr.mxu0 0.0
      %2647 = vmatpush1.msra.mxu0 0.0
      %2648 = vmatprep.subr.mxu0 0.0
      %2649 = vmatpush1.msra.mxu0 0.0
      %2650 = vmatprep.subr.mxu0 0.0
      %2651 = vmatpush1.msra.mxu0 0.0
      %2652 = vmatprep.subr.mxu0 0.0
      %2653 = vmatpush1.msra.mxu0 0.0
      %2654 = vmatprep.subr.mxu0 0.0
      %2655 = vmatpush1.msra.mxu0 0.0
      %2656 = vmatprep.subr.mxu0 0.0
      %2657 = vmatpush1.msra.mxu0 0.0
      %2658 = vmatprep.subr.mxu0 0.0
      %2659 = vmatpush1.msra.mxu0 0.0
      %2660 = vmatprep.subr.mxu0 0.0
      %2661 = vmatpush1.msra.mxu0 0.0
      %2662 = vmatprep.subr.mxu0 0.0
      %2663 = vmatpush1.msra.mxu0 0.0
      %2664 = vmatprep.subr.mxu0 0.0
      %2665 = vmatpush1.msra.mxu0 0.0
      %2666 = vmatprep.subr.mxu0 0.0
      %2667 = vmatpush1.msra.mxu0 0.0
      %2668 = vmatprep.subr.mxu0 0.0
      %2669 = vmatpush1.msra.mxu0 0.0
      %2670 = vmatprep.subr.mxu0 0.0
      %2671 = vmatpush1.msra.mxu0 0.0
      %2672 = vmatprep.subr.mxu0 0.0
      %2673 = vmatpush1.msra.mxu0 0.0
      %2674 = vmatprep.subr.mxu0 0.0
      %2675 = vmatpush1.msra.mxu0 0.0
      %2676 = vmatprep.mubr.f32.mxu0 0.0
      %2677 = vmatmul.mubr.f32.gmra.mrb[0].mxu0 %v2517
      %v2678 = vpop.f32.mrb[0].mxu0
      %v2679 = vadd.f32 0.0, %v2678
      %v2680 = vpop.f32.mrb[0].mxu0
      %2681 = vmatprep.mubr.f32.mxu0 0.0
      %2682 = vmatmul.mubr.f32.gmra.mrb[0].mxu0 %v2520
      %v2683 = vpop.f32.mrb[0].mxu0
      %v2684 = vadd.f32 0.0, %v2683
      %v2685 = vpop.f32.mrb[0].mxu0
      %2686 = vmatprep.mubr.f32.mxu0 0.0
      %2687 = vmatmul.mubr.f32.gmra.mrb[0].mxu0 %v2523
      %v2688 = vpop.f32.mrb[0].mxu0
      %v2689 = vadd.f32 0.0, %v2688
      %v2690 = vpop.f32.mrb[0].mxu0
      %2691 = vmatprep.mubr.f32.mxu0 0.0
      %2692 = vmatmul.mubr.f32.gmra.mrb[0].mxu0 %v2526
      %v2693 = vpop.f32.mrb[0].mxu0
      %v2694 = vadd.f32 0.0, %v2693
      %v2695 = vpop.f32.mrb[0].mxu0
      %2696 = vmatprep.mubr.f32.mxu0 0.0
      %2697 = vmatmul.mubr.f32.gmra.mrb[0].mxu0 %v2529
      %v2698 = vpop.f32.mrb[0].mxu0
      %v2699 = vadd.f32 0.0, %v2698
      %v2700 = vpop.f32.mrb[0].mxu0
      %2701 = vmatprep.mubr.f32.mxu0 0.0
      %2702 = vmatmul.mubr.f32.gmra.mrb[0].mxu0 %v2532
      %v2703 = vpop.f32.mrb[0].mxu0
      %v2704 = vadd.f32 0.0, %v2703
      %v2705 = vpop.f32.mrb[0].mxu0
      %2706 = vmatprep.mubr.f32.mxu0 0.0
      %2707 = vmatmul.mubr.f32.gmra.mrb[0].mxu0 %v2535
      %v2708 = vpop.f32.mrb[0].mxu0
      %v2709 = vadd.f32 0.0, %v2708
      %v2710 = vpop.f32.mrb[0].mxu0
      %2711 = vmatprep.mubr.f32.mxu0 0.0
      %2712 = vmatmul.mubr.f32.gmra.mrb[0].mxu0 %v2538
      %v2713 = vpop.f32.mrb[0].mxu0
      %v2714 = vadd.f32 0.0, %v2713
      %v2715 = vpop.f32.mrb[0].mxu0
      %2716 = vmatprep.mubr.f32.mxu0 0.0
      %2717 = vmatmul.mubr.f32.gmra.mrb[0].mxu0 %v2541
      %v2718 = vpop.f32.mrb[0].mxu0
      %v2719 = vadd.f32 0.0, %v2718
      %v2720 = vpop.f32.mrb[0].mxu0
      %2721 = vmatprep.mubr.f32.mxu0 0.0
      %2722 = vmatmul.mubr.f32.gmra.mrb[0].mxu0 %v2544
      %v2723 = vpop.f32.mrb[0].mxu0
      %v2724 = vadd.f32 0.0, %v2723
      %v2725 = vpop.f32.mrb[0].mxu0
      %2726 = vmatprep.mubr.f32.mxu0 0.0
      %2727 = vmatmul.mubr.f32.gmra.mrb[0].mxu0 %v2547
      %v2728 = vpop.f32.mrb[0].mxu0
      %v2729 = vadd.f32 0.0, %v2728
      %v2730 = vpop.f32.mrb[0].mxu0
      %2731 = vmatprep.mubr.f32.mxu0 0.0
      %2732 = vmatmul.mubr.f32.gmra.mrb[0].mxu0 %v2550
      %v2733 = vpop.f32.mrb[0].mxu0
      %v2734 = vadd.f32 0.0, %v2733
      %v2735 = vpop.f32.mrb[0].mxu0
      %2736 = vmatprep.mubr.f32.mxu0 0.0
      %2737 = vmatmul.mubr.f32.gmra.mrb[0].mxu0 %v2553
      %v2738 = vpop.f32.mrb[0].mxu0
      %v2739 = vadd.f32 0.0, %v2738
      %v2740 = vpop.f32.mrb[0].mxu0
      %2741 = vmatprep.mubr.f32.mxu0 0.0
      %2742 = vmatmul.mubr.f32.gmra.mrb[0].mxu0 %v2556
      %v2743 = vpop.f32.mrb[0].mxu0
      %v2744 = vadd.f32 0.0, %v2743
      %v2745 = vpop.f32.mrb[0].mxu0
      %2746 = vmatprep.mubr.f32.mxu0 0.0
      %2747 = vmatmul.mubr.f32.gmra.mrb[0].mxu0 %v2559
      %v2748 = vpop.f32.mrb[0].mxu0
      %v2749 = vadd.f32 0.0, %v2748
      %v2750 = vpop.f32.mrb[0].mxu0
      %2751 = vmatprep.mubr.f32.mxu0 0.0
      %2752 = vmatmul.mubr.f32.gmra.mrb[0].mxu0 %v2562
      %v2753 = vpop.f32.mrb[0].mxu0
      %v2754 = vadd.f32 0.0, %v2753
      %v2755 = vpop.f32.mrb[0].mxu0
      %2756 = vmatprep.mubr.f32.mxu0 0.0
      %2757 = vmatmul.mubr.f32.gmra.mrb[0].mxu0 %v2565
      %v2758 = vpop.f32.mrb[0].mxu0
      %v2759 = vadd.f32 0.0, %v2758
      %v2760 = vpop.f32.mrb[0].mxu0
      %2761 = vmatprep.mubr.f32.mxu0 0.0
      %2762 = vmatmul.mubr.f32.gmra.mrb[0].mxu0 %v2568
      %v2763 = vpop.f32.mrb[0].mxu0
      %v2764 = vadd.f32 0.0, %v2763
      %v2765 = vpop.f32.mrb[0].mxu0
      %2766 = vmatprep.mubr.f32.mxu0 0.0
      %2767 = vmatmul.mubr.f32.gmra.mrb[0].mxu0 %v2571
      %v2768 = vpop.f32.mrb[0].mxu0
      %v2769 = vadd.f32 0.0, %v2768
      %v2770 = vpop.f32.mrb[0].mxu0
      %2771 = vmatprep.mubr.f32.mxu0 0.0
      %2772 = vmatmul.mubr.f32.gmra.mrb[0].mxu0 %v2574
      %v2773 = vpop.f32.mrb[0].mxu0
      %v2774 = vadd.f32 0.0, %v2773
      %v2775 = vpop.f32.mrb[0].mxu0
      %2776 = vmatprep.mubr.f32.mxu0 0.0
      %2777 = vmatmul.mubr.f32.gmra.mrb[0].mxu0 %v2577
      %v2778 = vpop.f32.mrb[0].mxu0
      %v2779 = vadd.f32 0.0, %v2778
      %v2780 = vpop.f32.mrb[0].mxu0
      %2781 = vmatprep.mubr.f32.mxu0 0.0
      %2782 = vmatmul.mubr.f32.gmra.mrb[0].mxu0 %v2580
      %v2783 = vpop.f32.mrb[0].mxu0
      %v2784 = vadd.f32 0.0, %v2783
      %v2785 = vpop.f32.mrb[0].mxu0
      %2786 = vmatprep.mubr.f32.mxu0 0.0
      %2787 = vmatmul.mubr.f32.gmra.mrb[0].mxu0 %v2583
      %v2788 = vpop.f32.mrb[0].mxu0
      %v2789 = vadd.f32 0.0, %v2788
      %v2790 = vpop.f32.mrb[0].mxu0
      %2791 = vmatprep.mubr.f32.mxu0 0.0
      %2792 = vmatmul.mubr.f32.gmra.mrb[0].mxu0 %v2586
      %v2793 = vpop.f32.mrb[0].mxu0
      %v2794 = vadd.f32 0.0, %v2793
      %v2795 = vpop.f32.mrb[0].mxu0
      %2796 = vmatprep.mubr.f32.mxu0 0.0
      %2797 = vmatmul.mubr.f32.gmra.mrb[0].mxu0 %v2589
      %v2798 = vpop.f32.mrb[0].mxu0
      %v2799 = vadd.f32 0.0, %v2798
      %v2800 = vpop.f32.mrb[0].mxu0
      %2801 = vmatprep.mubr.f32.mxu0 0.0
      %2802 = vmatmul.mubr.f32.gmra.mrb[0].mxu0 %v2592
      %v2803 = vpop.f32.mrb[0].mxu0
      %v2804 = vadd.f32 0.0, %v2803
      %v2805 = vpop.f32.mrb[0].mxu0
      %2806 = vmatprep.mubr.f32.mxu0 0.0
      %2807 = vmatmul.mubr.f32.gmra.mrb[0].mxu0 %v2595
      %v2808 = vpop.f32.mrb[0].mxu0
      %v2809 = vadd.f32 0.0, %v2808
      %v2810 = vpop.f32.mrb[0].mxu0
      %2811 = vmatprep.mubr.f32.mxu0 0.0
      %2812 = vmatmul.mubr.f32.gmra.mrb[0].mxu0 %v2598
      %v2813 = vpop.f32.mrb[0].mxu0
      %v2814 = vadd.f32 0.0, %v2813
      %v2815 = vpop.f32.mrb[0].mxu0
      %2816 = vmatprep.mubr.f32.mxu0 0.0
      %2817 = vmatmul.mubr.f32.gmra.mrb[0].mxu0 %v2601
      %v2818 = vpop.f32.mrb[0].mxu0
      %v2819 = vadd.f32 0.0, %v2818
      %v2820 = vpop.f32.mrb[0].mxu0
      %2821 = vmatprep.mubr.f32.mxu0 0.0
      %2822 = vmatmul.mubr.f32.gmra.mrb[0].mxu0 %v2604
      %v2823 = vpop.f32.mrb[0].mxu0
      %v2824 = vadd.f32 0.0, %v2823
      %v2825 = vpop.f32.mrb[0].mxu0
      %2826 = vmatprep.mubr.f32.mxu0 0.0
      %2827 = vmatmul.mubr.f32.gmra.mrb[0].mxu0 %v2607
      %v2828 = vpop.f32.mrb[0].mxu0
      %v2829 = vadd.f32 0.0, %v2828
      %v2830 = vpop.f32.mrb[0].mxu0
      %2831 = vmatprep.mubr.f32.mxu0 0.0
      %2832 = vmatmul.mubr.f32.gmra.mrb[0].mxu0 %v2610
      %v2833 = vpop.f32.mrb[0].mxu0
      %v2834 = vadd.f32 0.0, %v2833
      %v2835 = vpop.f32.mrb[0].mxu0
      %2836 = vdwg.mxu0
      %v2837 = vadd.f32 %v2449, %v2679
      %v2838 = vadd.f32 %v2450, %v2684
      %v2839 = vadd.f32 %v2451, %v2689
      %v2840 = vadd.f32 %v2452, %v2694
      %v2841 = vadd.f32 %v2453, %v2699
      %v2842 = vadd.f32 %v2454, %v2704
      %v2843 = vadd.f32 %v2455, %v2709
      %v2844 = vadd.f32 %v2456, %v2714
      %v2845 = vadd.f32 %v2457, %v2719
      %v2846 = vadd.f32 %v2458, %v2724
      %v2847 = vadd.f32 %v2459, %v2729
      %v2848 = vadd.f32 %v2460, %v2734
      %v2849 = vadd.f32 %v2461, %v2739
      %v2850 = vadd.f32 %v2462, %v2744
      %v2851 = vadd.f32 %v2463, %v2749
      %v2852 = vadd.f32 %v2464, %v2754
      %v2853 = vadd.f32 %v2465, %v2759
      %v2854 = vadd.f32 %v2466, %v2764
      %v2855 = vadd.f32 %v2467, %v2769
      %v2856 = vadd.f32 %v2468, %v2774
      %v2857 = vadd.f32 %v2469, %v2779
      %v2858 = vadd.f32 %v2470, %v2784
      %v2859 = vadd.f32 %v2471, %v2789
      %v2860 = vadd.f32 %v2472, %v2794
      %v2861 = vadd.f32 %v2473, %v2799
      %v2862 = vadd.f32 %v2474, %v2804
      %v2863 = vadd.f32 %v2475, %v2809
      %v2864 = vadd.f32 %v2476, %v2814
      %v2865 = vadd.f32 %v2477, %v2819
      %v2866 = vadd.f32 %v2478, %v2824
      %v2867 = vadd.f32 %v2479, %v2829
      %v2868 = vadd.f32 %v2480, %v2834
      %v2869 = vld [vmem:[%s2481 + $0x1] sm:$0xff]
      %v2870 = vld [vmem:[%s2481 + $0x9] sm:$0xff]
      %v2871 = vld [vmem:[%s2481 + $0x19] sm:$0xff]
      %v2872 = vld [vmem:[%s2481 + $0x21] sm:$0xff]
      %v2873 = vld [vmem:[%s2481 + $0x31] sm:$0xff]
      %v2874 = vld [vmem:[%s2481 + $0x39] sm:$0xff]
      %v2875 = vld [vmem:[%s2481 + $0x49] sm:$0xff]
      %v2876 = vld [vmem:[%s2481 + $0x51] sm:$0xff]
      %v2877 = vld [vmem:[%s2481 + $0x61] sm:$0xff]
      %v2878 = vld [vmem:[%s2481 + $0x69] sm:$0xff]
      %v2879 = vld [vmem:[%s2481 + $0x79] sm:$0xff]
      %v2880 = vld [vmem:[%s2481 + $0x81] sm:$0xff]
      %v2881 = vld [vmem:[%s2481 + $0x91] sm:$0xff]
      %v2882 = vld [vmem:[%s2481 + $0x99] sm:$0xff]
      %v2883 = vld [vmem:[%s2481 + $0xa9] sm:$0xff]
      %v2884 = vld [vmem:[%s2481 + $0xb1] sm:$0xff]
      %v2885 = vld [vmem:[%s2481 + $0xc1] sm:$0xff]
      %v2886 = vld [vmem:[%s2481 + $0xc9] sm:$0xff]
      %v2887 = vld [vmem:[%s2481 + $0xd9] sm:$0xff]
      %v2888 = vld [vmem:[%s2481 + $0xe1] sm:$0xff]
      %v2889 = vld [vmem:[%s2481 + $0xf1] sm:$0xff]
      %v2890 = vld [vmem:[%s2481 + $0xf9] sm:$0xff]
      %v2891 = vld [vmem:[%s2481 + $0x109] sm:$0xff]
      %v2892 = vld [vmem:[%s2481 + $0x111] sm:$0xff]
      %v2893 = vld [vmem:[%s2481 + $0x121] sm:$0xff]
      %v2894 = vld [vmem:[%s2481 + $0x129] sm:$0xff]
      %v2895 = vld [vmem:[%s2481 + $0x139] sm:$0xff]
      %v2896 = vld [vmem:[%s2481 + $0x141] sm:$0xff]
      %v2897 = vld [vmem:[%s2481 + $0x151] sm:$0xff]
      %v2898 = vld [vmem:[%s2481 + $0x159] sm:$0xff]
      %v2899 = vld [vmem:[%s2481 + $0x169] sm:$0xff]
      %v2900 = vld [vmem:[%s2481 + $0x171] sm:$0xff]
      %s2901 = scalar_lea.vmem %s210, 56
      %v2902 = vld [vmem:[%s2901] sm:$0xff]
      %v2904 = vsel %vm289, %v2869, 0
      %v2907 = vsel %vm289, %v2870, 0
      %v2910 = vsel %vm289, %v2871, 0
      %v2913 = vsel %vm289, %v2872, 0
      %v2916 = vsel %vm289, %v2873, 0
      %v2919 = vsel %vm289, %v2874, 0
      %v2922 = vsel %vm289, %v2875, 0
      %v2925 = vsel %vm289, %v2876, 0
      %v2928 = vsel %vm289, %v2877, 0
      %v2931 = vsel %vm289, %v2878, 0
      %v2934 = vsel %vm289, %v2879, 0
      %v2937 = vsel %vm289, %v2880, 0
      %v2940 = vsel %vm289, %v2881, 0
      %v2943 = vsel %vm289, %v2882, 0
      %v2946 = vsel %vm289, %v2883, 0
      %v2949 = vsel %vm289, %v2884, 0
      %v2952 = vsel %vm289, %v2885, 0
      %v2955 = vsel %vm289, %v2886, 0
      %v2958 = vsel %vm289, %v2887, 0
      %v2961 = vsel %vm289, %v2888, 0
      %v2964 = vsel %vm289, %v2889, 0
      %v2967 = vsel %vm289, %v2890, 0
      %v2970 = vsel %vm289, %v2891, 0
      %v2973 = vsel %vm289, %v2892, 0
      %v2976 = vsel %vm289, %v2893, 0
      %v2979 = vsel %vm289, %v2894, 0
      %v2982 = vsel %vm289, %v2895, 0
      %v2985 = vsel %vm289, %v2896, 0
      %v2988 = vsel %vm289, %v2897, 0
      %v2991 = vsel %vm289, %v2898, 0
      %v2994 = vsel %vm289, %v2899, 0
      %v2997 = vsel %vm289, %v2900, 0
      %2999 = vmatprep.subr.mxu0 0.0
      %3000 = vmatpush1.msra.mxu0 %v2902
      %3001 = vmatprep.subr.mxu0 0.0
      %3002 = vmatpush1.msra.mxu0 0.0
      %3003 = vmatprep.subr.mxu0 0.0
      %3004 = vmatpush1.msra.mxu0 0.0
      %3005 = vmatprep.subr.mxu0 0.0
      %3006 = vmatpush1.msra.mxu0 0.0
      %3007 = vmatprep.subr.mxu0 0.0
      %3008 = vmatpush1.msra.mxu0 0.0
      %3009 = vmatprep.subr.mxu0 0.0
      %3010 = vmatpush1.msra.mxu0 0.0
      %3011 = vmatprep.subr.mxu0 0.0
      %3012 = vmatpush1.msra.mxu0 0.0
      %3013 = vmatprep.subr.mxu0 0.0
      %3014 = vmatpush1.msra.mxu0 0.0
      %3015 = vmatprep.subr.mxu0 0.0
      %3016 = vmatpush1.msra.mxu0 0.0
      %3017 = vmatprep.subr.mxu0 0.0
      %3018 = vmatpush1.msra.mxu0 0.0
      %3019 = vmatprep.subr.mxu0 0.0
      %3020 = vmatpush1.msra.mxu0 0.0
      %3021 = vmatprep.subr.mxu0 0.0
      %3022 = vmatpush1.msra.mxu0 0.0
      %3023 = vmatprep.subr.mxu0 0.0
      %3024 = vmatpush1.msra.mxu0 0.0
      %3025 = vmatprep.subr.mxu0 0.0
      %3026 = vmatpush1.msra.mxu0 0.0
      %3027 = vmatprep.subr.mxu0 0.0
      %3028 = vmatpush1.msra.mxu0 0.0
      %3029 = vmatprep.subr.mxu0 0.0
      %3030 = vmatpush1.msra.mxu0 0.0
      %3031 = vmatprep.subr.mxu0 0.0
      %3032 = vmatpush1.msra.mxu0 0.0
      %3033 = vmatprep.subr.mxu0 0.0
      %3034 = vmatpush1.msra.mxu0 0.0
      %3035 = vmatprep.subr.mxu0 0.0
      %3036 = vmatpush1.msra.mxu0 0.0
      %3037 = vmatprep.subr.mxu0 0.0
      %3038 = vmatpush1.msra.mxu0 0.0
      %3039 = vmatprep.subr.mxu0 0.0
      %3040 = vmatpush1.msra.mxu0 0.0
      %3041 = vmatprep.subr.mxu0 0.0
      %3042 = vmatpush1.msra.mxu0 0.0
      %3043 = vmatprep.subr.mxu0 0.0
      %3044 = vmatpush1.msra.mxu0 0.0
      %3045 = vmatprep.subr.mxu0 0.0
      %3046 = vmatpush1.msra.mxu0 0.0
      %3047 = vmatprep.subr.mxu0 0.0
      %3048 = vmatpush1.msra.mxu0 0.0
      %3049 = vmatprep.subr.mxu0 0.0
      %3050 = vmatpush1.msra.mxu0 0.0
      %3051 = vmatprep.subr.mxu0 0.0
      %3052 = vmatpush1.msra.mxu0 0.0
      %3053 = vmatprep.subr.mxu0 0.0
      %3054 = vmatpush1.msra.mxu0 0.0
      %3055 = vmatprep.subr.mxu0 0.0
      %3056 = vmatpush1.msra.mxu0 0.0
      %3057 = vmatprep.subr.mxu0 0.0
      %3058 = vmatpush1.msra.mxu0 0.0
      %3059 = vmatprep.subr.mxu0 0.0
      %3060 = vmatpush1.msra.mxu0 0.0
      %3061 = vmatprep.subr.mxu0 0.0
      %3062 = vmatpush1.msra.mxu0 0.0
      %3063 = vmatprep.mubr.f32.mxu0 0.0
      %3064 = vmatmul.mubr.f32.gmra.mrb[0].mxu0 %v2904
      %v3065 = vpop.f32.mrb[0].mxu0
      %v3066 = vadd.f32 0.0, %v3065
      %v3067 = vpop.f32.mrb[0].mxu0
      %3068 = vmatprep.mubr.f32.mxu0 0.0
      %3069 = vmatmul.mubr.f32.gmra.mrb[0].mxu0 %v2907
      %v3070 = vpop.f32.mrb[0].mxu0
      %v3071 = vadd.f32 0.0, %v3070
      %v3072 = vpop.f32.mrb[0].mxu0
      %3073 = vmatprep.mubr.f32.mxu0 0.0
      %3074 = vmatmul.mubr.f32.gmra.mrb[0].mxu0 %v2910
      %v3075 = vpop.f32.mrb[0].mxu0
      %v3076 = vadd.f32 0.0, %v3075
      %v3077 = vpop.f32.mrb[0].mxu0
      %3078 = vmatprep.mubr.f32.mxu0 0.0
      %3079 = vmatmul.mubr.f32.gmra.mrb[0].mxu0 %v2913
      %v3080 = vpop.f32.mrb[0].mxu0
      %v3081 = vadd.f32 0.0, %v3080
      %v3082 = vpop.f32.mrb[0].mxu0
      %3083 = vmatprep.mubr.f32.mxu0 0.0
      %3084 = vmatmul.mubr.f32.gmra.mrb[0].mxu0 %v2916
      %v3085 = vpop.f32.mrb[0].mxu0
      %v3086 = vadd.f32 0.0, %v3085
      %v3087 = vpop.f32.mrb[0].mxu0
      %3088 = vmatprep.mubr.f32.mxu0 0.0
      %3089 = vmatmul.mubr.f32.gmra.mrb[0].mxu0 %v2919
      %v3090 = vpop.f32.mrb[0].mxu0
      %v3091 = vadd.f32 0.0, %v3090
      %v3092 = vpop.f32.mrb[0].mxu0
      %3093 = vmatprep.mubr.f32.mxu0 0.0
      %3094 = vmatmul.mubr.f32.gmra.mrb[0].mxu0 %v2922
      %v3095 = vpop.f32.mrb[0].mxu0
      %v3096 = vadd.f32 0.0, %v3095
      %v3097 = vpop.f32.mrb[0].mxu0
      %3098 = vmatprep.mubr.f32.mxu0 0.0
      %3099 = vmatmul.mubr.f32.gmra.mrb[0].mxu0 %v2925
      %v3100 = vpop.f32.mrb[0].mxu0
      %v3101 = vadd.f32 0.0, %v3100
      %v3102 = vpop.f32.mrb[0].mxu0
      %3103 = vmatprep.mubr.f32.mxu0 0.0
      %3104 = vmatmul.mubr.f32.gmra.mrb[0].mxu0 %v2928
      %v3105 = vpop.f32.mrb[0].mxu0
      %v3106 = vadd.f32 0.0, %v3105
      %v3107 = vpop.f32.mrb[0].mxu0
      %3108 = vmatprep.mubr.f32.mxu0 0.0
      %3109 = vmatmul.mubr.f32.gmra.mrb[0].mxu0 %v2931
      %v3110 = vpop.f32.mrb[0].mxu0
      %v3111 = vadd.f32 0.0, %v3110
      %v3112 = vpop.f32.mrb[0].mxu0
      %3113 = vmatprep.mubr.f32.mxu0 0.0
      %3114 = vmatmul.mubr.f32.gmra.mrb[0].mxu0 %v2934
      %v3115 = vpop.f32.mrb[0].mxu0
      %v3116 = vadd.f32 0.0, %v3115
      %v3117 = vpop.f32.mrb[0].mxu0
      %3118 = vmatprep.mubr.f32.mxu0 0.0
      %3119 = vmatmul.mubr.f32.gmra.mrb[0].mxu0 %v2937
      %v3120 = vpop.f32.mrb[0].mxu0
      %v3121 = vadd.f32 0.0, %v3120
      %v3122 = vpop.f32.mrb[0].mxu0
      %3123 = vmatprep.mubr.f32.mxu0 0.0
      %3124 = vmatmul.mubr.f32.gmra.mrb[0].mxu0 %v2940
      %v3125 = vpop.f32.mrb[0].mxu0
      %v3126 = vadd.f32 0.0, %v3125
      %v3127 = vpop.f32.mrb[0].mxu0
      %3128 = vmatprep.mubr.f32.mxu0 0.0
      %3129 = vmatmul.mubr.f32.gmra.mrb[0].mxu0 %v2943
      %v3130 = vpop.f32.mrb[0].mxu0
      %v3131 = vadd.f32 0.0, %v3130
      %v3132 = vpop.f32.mrb[0].mxu0
      %3133 = vmatprep.mubr.f32.mxu0 0.0
      %3134 = vmatmul.mubr.f32.gmra.mrb[0].mxu0 %v2946
      %v3135 = vpop.f32.mrb[0].mxu0
      %v3136 = vadd.f32 0.0, %v3135
      %v3137 = vpop.f32.mrb[0].mxu0
      %3138 = vmatprep.mubr.f32.mxu0 0.0
      %3139 = vmatmul.mubr.f32.gmra.mrb[0].mxu0 %v2949
      %v3140 = vpop.f32.mrb[0].mxu0
      %v3141 = vadd.f32 0.0, %v3140
      %v3142 = vpop.f32.mrb[0].mxu0
      %3143 = vmatprep.mubr.f32.mxu0 0.0
      %3144 = vmatmul.mubr.f32.gmra.mrb[0].mxu0 %v2952
      %v3145 = vpop.f32.mrb[0].mxu0
      %v3146 = vadd.f32 0.0, %v3145
      %v3147 = vpop.f32.mrb[0].mxu0
      %3148 = vmatprep.mubr.f32.mxu0 0.0
      %3149 = vmatmul.mubr.f32.gmra.mrb[0].mxu0 %v2955
      %v3150 = vpop.f32.mrb[0].mxu0
      %v3151 = vadd.f32 0.0, %v3150
      %v3152 = vpop.f32.mrb[0].mxu0
      %3153 = vmatprep.mubr.f32.mxu0 0.0
      %3154 = vmatmul.mubr.f32.gmra.mrb[0].mxu0 %v2958
      %v3155 = vpop.f32.mrb[0].mxu0
      %v3156 = vadd.f32 0.0, %v3155
      %v3157 = vpop.f32.mrb[0].mxu0
      %3158 = vmatprep.mubr.f32.mxu0 0.0
      %3159 = vmatmul.mubr.f32.gmra.mrb[0].mxu0 %v2961
      %v3160 = vpop.f32.mrb[0].mxu0
      %v3161 = vadd.f32 0.0, %v3160
      %v3162 = vpop.f32.mrb[0].mxu0
      %3163 = vmatprep.mubr.f32.mxu0 0.0
      %3164 = vmatmul.mubr.f32.gmra.mrb[0].mxu0 %v2964
      %v3165 = vpop.f32.mrb[0].mxu0
      %v3166 = vadd.f32 0.0, %v3165
      %v3167 = vpop.f32.mrb[0].mxu0
      %3168 = vmatprep.mubr.f32.mxu0 0.0
      %3169 = vmatmul.mubr.f32.gmra.mrb[0].mxu0 %v2967
      %v3170 = vpop.f32.mrb[0].mxu0
      %v3171 = vadd.f32 0.0, %v3170
      %v3172 = vpop.f32.mrb[0].mxu0
      %3173 = vmatprep.mubr.f32.mxu0 0.0
      %3174 = vmatmul.mubr.f32.gmra.mrb[0].mxu0 %v2970
      %v3175 = vpop.f32.mrb[0].mxu0
      %v3176 = vadd.f32 0.0, %v3175
      %v3177 = vpop.f32.mrb[0].mxu0
      %3178 = vmatprep.mubr.f32.mxu0 0.0
      %3179 = vmatmul.mubr.f32.gmra.mrb[0].mxu0 %v2973
      %v3180 = vpop.f32.mrb[0].mxu0
      %v3181 = vadd.f32 0.0, %v3180
      %v3182 = vpop.f32.mrb[0].mxu0
      %3183 = vmatprep.mubr.f32.mxu0 0.0
      %3184 = vmatmul.mubr.f32.gmra.mrb[0].mxu0 %v2976
      %v3185 = vpop.f32.mrb[0].mxu0
      %v3186 = vadd.f32 0.0, %v3185
      %v3187 = vpop.f32.mrb[0].mxu0
      %3188 = vmatprep.mubr.f32.mxu0 0.0
      %3189 = vmatmul.mubr.f32.gmra.mrb[0].mxu0 %v2979
      %v3190 = vpop.f32.mrb[0].mxu0
      %v3191 = vadd.f32 0.0, %v3190
      %v3192 = vpop.f32.mrb[0].mxu0
      %3193 = vmatprep.mubr.f32.mxu0 0.0
      %3194 = vmatmul.mubr.f32.gmra.mrb[0].mxu0 %v2982
      %v3195 = vpop.f32.mrb[0].mxu0
      %v3196 = vadd.f32 0.0, %v3195
      %v3197 = vpop.f32.mrb[0].mxu0
      %3198 = vmatprep.mubr.f32.mxu0 0.0
      %3199 = vmatmul.mubr.f32.gmra.mrb[0].mxu0 %v2985
      %v3200 = vpop.f32.mrb[0].mxu0
      %v3201 = vadd.f32 0.0, %v3200
      %v3202 = vpop.f32.mrb[0].mxu0
      %3203 = vmatprep.mubr.f32.mxu0 0.0
      %3204 = vmatmul.mubr.f32.gmra.mrb[0].mxu0 %v2988
      %v3205 = vpop.f32.mrb[0].mxu0
      %v3206 = vadd.f32 0.0, %v3205
      %v3207 = vpop.f32.mrb[0].mxu0
      %3208 = vmatprep.mubr.f32.mxu0 0.0
      %3209 = vmatmul.mubr.f32.gmra.mrb[0].mxu0 %v2991
      %v3210 = vpop.f32.mrb[0].mxu0
      %v3211 = vadd.f32 0.0, %v3210
      %v3212 = vpop.f32.mrb[0].mxu0
      %3213 = vmatprep.mubr.f32.mxu0 0.0
      %3214 = vmatmul.mubr.f32.gmra.mrb[0].mxu0 %v2994
      %v3215 = vpop.f32.mrb[0].mxu0
      %v3216 = vadd.f32 0.0, %v3215
      %v3217 = vpop.f32.mrb[0].mxu0
      %3218 = vmatprep.mubr.f32.mxu0 0.0
      %3219 = vmatmul.mubr.f32.gmra.mrb[0].mxu0 %v2997
      %v3220 = vpop.f32.mrb[0].mxu0
      %v3221 = vadd.f32 0.0, %v3220
      %v3222 = vpop.f32.mrb[0].mxu0
      %3223 = vdwg.mxu0
      %v3224 = vadd.f32 %v2837, %v3066
      %v3225 = vadd.f32 %v2838, %v3071
      %v3226 = vadd.f32 %v2839, %v3076
      %v3227 = vadd.f32 %v2840, %v3081
      %v3228 = vadd.f32 %v2841, %v3086
      %v3229 = vadd.f32 %v2842, %v3091
      %v3230 = vadd.f32 %v2843, %v3096
      %v3231 = vadd.f32 %v2844, %v3101
      %v3232 = vadd.f32 %v2845, %v3106
      %v3233 = vadd.f32 %v2846, %v3111
      %v3234 = vadd.f32 %v2847, %v3116
      %v3235 = vadd.f32 %v2848, %v3121
      %v3236 = vadd.f32 %v2849, %v3126
      %v3237 = vadd.f32 %v2850, %v3131
      %v3238 = vadd.f32 %v2851, %v3136
      %v3239 = vadd.f32 %v2852, %v3141
      %v3240 = vadd.f32 %v2853, %v3146
      %v3241 = vadd.f32 %v2854, %v3151
      %v3242 = vadd.f32 %v2855, %v3156
      %v3243 = vadd.f32 %v2856, %v3161
      %v3244 = vadd.f32 %v2857, %v3166
      %v3245 = vadd.f32 %v2858, %v3171
      %v3246 = vadd.f32 %v2859, %v3176
      %v3247 = vadd.f32 %v2860, %v3181
      %v3248 = vadd.f32 %v2861, %v3186
      %v3249 = vadd.f32 %v2862, %v3191
      %v3250 = vadd.f32 %v2863, %v3196
      %v3251 = vadd.f32 %v2864, %v3201
      %v3252 = vadd.f32 %v2865, %v3206
      %v3253 = vadd.f32 %v2866, %v3211
      %v3254 = vadd.f32 %v2867, %v3216
      %v3255 = vadd.f32 %v2868, %v3221
      %v3256 = vld [vmem:[%s2481 + $0x2] sm:$0xff]
      %v3257 = vld [vmem:[%s2481 + $0xa] sm:$0xff]
      %v3258 = vld [vmem:[%s2481 + $0x1a] sm:$0xff]
      %v3259 = vld [vmem:[%s2481 + $0x22] sm:$0xff]
      %v3260 = vld [vmem:[%s2481 + $0x32] sm:$0xff]
      %v3261 = vld [vmem:[%s2481 + $0x3a] sm:$0xff]
      %v3262 = vld [vmem:[%s2481 + $0x4a] sm:$0xff]
      %v3263 = vld [vmem:[%s2481 + $0x52] sm:$0xff]
      %v3264 = vld [vmem:[%s2481 + $0x62] sm:$0xff]
      %v3265 = vld [vmem:[%s2481 + $0x6a] sm:$0xff]
      %v3266 = vld [vmem:[%s2481 + $0x7a] sm:$0xff]
      %v3267 = vld [vmem:[%s2481 + $0x82] sm:$0xff]
      %v3268 = vld [vmem:[%s2481 + $0x92] sm:$0xff]
      %v3269 = vld [vmem:[%s2481 + $0x9a] sm:$0xff]
      %v3270 = vld [vmem:[%s2481 + $0xaa] sm:$0xff]
      %v3271 = vld [vmem:[%s2481 + $0xb2] sm:$0xff]
      %v3272 = vld [vmem:[%s2481 + $0xc2] sm:$0xff]
      %v3273 = vld [vmem:[%s2481 + $0xca] sm:$0xff]
      %v3274 = vld [vmem:[%s2481 + $0xda] sm:$0xff]
      %v3275 = vld [vmem:[%s2481 + $0xe2] sm:$0xff]
      %v3276 = vld [vmem:[%s2481 + $0xf2] sm:$0xff]
      %v3277 = vld [vmem:[%s2481 + $0xfa] sm:$0xff]
      %v3278 = vld [vmem:[%s2481 + $0x10a] sm:$0xff]
      %v3279 = vld [vmem:[%s2481 + $0x112] sm:$0xff]
      %v3280 = vld [vmem:[%s2481 + $0x122] sm:$0xff]
      %v3281 = vld [vmem:[%s2481 + $0x12a] sm:$0xff]
      %v3282 = vld [vmem:[%s2481 + $0x13a] sm:$0xff]
      %v3283 = vld [vmem:[%s2481 + $0x142] sm:$0xff]
      %v3284 = vld [vmem:[%s2481 + $0x152] sm:$0xff]
      %v3285 = vld [vmem:[%s2481 + $0x15a] sm:$0xff]
      %v3286 = vld [vmem:[%s2481 + $0x16a] sm:$0xff]
      %v3287 = vld [vmem:[%s2481 + $0x172] sm:$0xff]
      %s3288 = scalar_lea.vmem %s210, 64
      %v3289 = vld [vmem:[%s3288] sm:$0xff]
      %v3291 = vsel %vm289, %v3256, 0
      %v3294 = vsel %vm289, %v3257, 0
      %v3297 = vsel %vm289, %v3258, 0
      %v3300 = vsel %vm289, %v3259, 0
      %v3303 = vsel %vm289, %v3260, 0
      %v3306 = vsel %vm289, %v3261, 0
      %v3309 = vsel %vm289, %v3262, 0
      %v3312 = vsel %vm289, %v3263, 0
      %v3315 = vsel %vm289, %v3264, 0
      %v3318 = vsel %vm289, %v3265, 0
      %v3321 = vsel %vm289, %v3266, 0
      %v3324 = vsel %vm289, %v3267, 0
      %v3327 = vsel %vm289, %v3268, 0
      %v3330 = vsel %vm289, %v3269, 0
      %v3333 = vsel %vm289, %v3270, 0
      %v3336 = vsel %vm289, %v3271, 0
      %v3339 = vsel %vm289, %v3272, 0
      %v3342 = vsel %vm289, %v3273, 0
      %v3345 = vsel %vm289, %v3274, 0
      %v3348 = vsel %vm289, %v3275, 0
      %v3351 = vsel %vm289, %v3276, 0
      %v3354 = vsel %vm289, %v3277, 0
      %v3357 = vsel %vm289, %v3278, 0
      %v3360 = vsel %vm289, %v3279, 0
      %v3363 = vsel %vm289, %v3280, 0
      %v3366 = vsel %vm289, %v3281, 0
      %v3369 = vsel %vm289, %v3282, 0
      %v3372 = vsel %vm289, %v3283, 0
      %v3375 = vsel %vm289, %v3284, 0
      %v3378 = vsel %vm289, %v3285, 0
      %v3381 = vsel %vm289, %v3286, 0
      %v3384 = vsel %vm289, %v3287, 0
      %3386 = vmatprep.subr.mxu0 0.0
      %3387 = vmatpush1.msra.mxu0 %v3289
      %3388 = vmatprep.subr.mxu0 0.0
      %3389 = vmatpush1.msra.mxu0 0.0
      %3390 = vmatprep.subr.mxu0 0.0
      %3391 = vmatpush1.msra.mxu0 0.0
      %3392 = vmatprep.subr.mxu0 0.0
      %3393 = vmatpush1.msra.mxu0 0.0
      %3394 = vmatprep.subr.mxu0 0.0
      %3395 = vmatpush1.msra.mxu0 0.0
      %3396 = vmatprep.subr.mxu0 0.0
      %3397 = vmatpush1.msra.mxu0 0.0
      %3398 = vmatprep.subr.mxu0 0.0
      %3399 = vmatpush1.msra.mxu0 0.0
      %3400 = vmatprep.subr.mxu0 0.0
      %3401 = vmatpush1.msra.mxu0 0.0
      %3402 = vmatprep.subr.mxu0 0.0
      %3403 = vmatpush1.msra.mxu0 0.0
      %3404 = vmatprep.subr.mxu0 0.0
      %3405 = vmatpush1.msra.mxu0 0.0
      %3406 = vmatprep.subr.mxu0 0.0
      %3407 = vmatpush1.msra.mxu0 0.0
      %3408 = vmatprep.subr.mxu0 0.0
      %3409 = vmatpush1.msra.mxu0 0.0
      %3410 = vmatprep.subr.mxu0 0.0
      %3411 = vmatpush1.msra.mxu0 0.0
      %3412 = vmatprep.subr.mxu0 0.0
      %3413 = vmatpush1.msra.mxu0 0.0
      %3414 = vmatprep.subr.mxu0 0.0
      %3415 = vmatpush1.msra.mxu0 0.0
      %3416 = vmatprep.subr.mxu0 0.0
      %3417 = vmatpush1.msra.mxu0 0.0
      %3418 = vmatprep.subr.mxu0 0.0
      %3419 = vmatpush1.msra.mxu0 0.0
      %3420 = vmatprep.subr.mxu0 0.0
      %3421 = vmatpush1.msra.mxu0 0.0
      %3422 = vmatprep.subr.mxu0 0.0
      %3423 = vmatpush1.msra.mxu0 0.0
      %3424 = vmatprep.subr.mxu0 0.0
      %3425 = vmatpush1.msra.mxu0 0.0
      %3426 = vmatprep.subr.mxu0 0.0
      %3427 = vmatpush1.msra.mxu0 0.0
      %3428 = vmatprep.subr.mxu0 0.0
      %3429 = vmatpush1.msra.mxu0 0.0
      %3430 = vmatprep.subr.mxu0 0.0
      %3431 = vmatpush1.msra.mxu0 0.0
      %3432 = vmatprep.subr.mxu0 0.0
      %3433 = vmatpush1.msra.mxu0 0.0
      %3434 = vmatprep.subr.mxu0 0.0
      %3435 = vmatpush1.msra.mxu0 0.0
      %3436 = vmatprep.subr.mxu0 0.0
      %3437 = vmatpush1.msra.mxu0 0.0
      %3438 = vmatprep.subr.mxu0 0.0
      %3439 = vmatpush1.msra.mxu0 0.0
      %3440 = vmatprep.subr.mxu0 0.0
      %3441 = vmatpush1.msra.mxu0 0.0
      %3442 = vmatprep.subr.mxu0 0.0
      %3443 = vmatpush1.msra.mxu0 0.0
      %3444 = vmatprep.subr.mxu0 0.0
      %3445 = vmatpush1.msra.mxu0 0.0
      %3446 = vmatprep.subr.mxu0 0.0
      %3447 = vmatpush1.msra.mxu0 0.0
      %3448 = vmatprep.subr.mxu0 0.0
      %3449 = vmatpush1.msra.mxu0 0.0
      %3450 = vmatprep.mubr.f32.mxu0 0.0
      %3451 = vmatmul.mubr.f32.gmra.mrb[0].mxu0 %v3291
      %v3452 = vpop.f32.mrb[0].mxu0
      %v3453 = vadd.f32 0.0, %v3452
      %v3454 = vpop.f32.mrb[0].mxu0
      %3455 = vmatprep.mubr.f32.mxu0 0.0
      %3456 = vmatmul.mubr.f32.gmra.mrb[0].mxu0 %v3294
      %v3457 = vpop.f32.mrb[0].mxu0
      %v3458 = vadd.f32 0.0, %v3457
      %v3459 = vpop.f32.mrb[0].mxu0
      %3460 = vmatprep.mubr.f32.mxu0 0.0
      %3461 = vmatmul.mubr.f32.gmra.mrb[0].mxu0 %v3297
      %v3462 = vpop.f32.mrb[0].mxu0
      %v3463 = vadd.f32 0.0, %v3462
      %v3464 = vpop.f32.mrb[0].mxu0
      %3465 = vmatprep.mubr.f32.mxu0 0.0
      %3466 = vmatmul.mubr.f32.gmra.mrb[0].mxu0 %v3300
      %v3467 = vpop.f32.mrb[0].mxu0
      %v3468 = vadd.f32 0.0, %v3467
      %v3469 = vpop.f32.mrb[0].mxu0
      %3470 = vmatprep.mubr.f32.mxu0 0.0
      %3471 = vmatmul.mubr.f32.gmra.mrb[0].mxu0 %v3303
      %v3472 = vpop.f32.mrb[0].mxu0
      %v3473 = vadd.f32 0.0, %v3472
      %v3474 = vpop.f32.mrb[0].mxu0
      %3475 = vmatprep.mubr.f32.mxu0 0.0
      %3476 = vmatmul.mubr.f32.gmra.mrb[0].mxu0 %v3306
      %v3477 = vpop.f32.mrb[0].mxu0
      %v3478 = vadd.f32 0.0, %v3477
      %v3479 = vpop.f32.mrb[0].mxu0
      %3480 = vmatprep.mubr.f32.mxu0 0.0
      %3481 = vmatmul.mubr.f32.gmra.mrb[0].mxu0 %v3309
      %v3482 = vpop.f32.mrb[0].mxu0
      %v3483 = vadd.f32 0.0, %v3482
      %v3484 = vpop.f32.mrb[0].mxu0
      %3485 = vmatprep.mubr.f32.mxu0 0.0
      %3486 = vmatmul.mubr.f32.gmra.mrb[0].mxu0 %v3312
      %v3487 = vpop.f32.mrb[0].mxu0
      %v3488 = vadd.f32 0.0, %v3487
      %v3489 = vpop.f32.mrb[0].mxu0
      %3490 = vmatprep.mubr.f32.mxu0 0.0
      %3491 = vmatmul.mubr.f32.gmra.mrb[0].mxu0 %v3315
      %v3492 = vpop.f32.mrb[0].mxu0
      %v3493 = vadd.f32 0.0, %v3492
      %v3494 = vpop.f32.mrb[0].mxu0
      %3495 = vmatprep.mubr.f32.mxu0 0.0
      %3496 = vmatmul.mubr.f32.gmra.mrb[0].mxu0 %v3318
      %v3497 = vpop.f32.mrb[0].mxu0
      %v3498 = vadd.f32 0.0, %v3497
      %v3499 = vpop.f32.mrb[0].mxu0
      %3500 = vmatprep.mubr.f32.mxu0 0.0
      %3501 = vmatmul.mubr.f32.gmra.mrb[0].mxu0 %v3321
      %v3502 = vpop.f32.mrb[0].mxu0
      %v3503 = vadd.f32 0.0, %v3502
      %v3504 = vpop.f32.mrb[0].mxu0
      %3505 = vmatprep.mubr.f32.mxu0 0.0
      %3506 = vmatmul.mubr.f32.gmra.mrb[0].mxu0 %v3324
      %v3507 = vpop.f32.mrb[0].mxu0
      %v3508 = vadd.f32 0.0, %v3507
      %v3509 = vpop.f32.mrb[0].mxu0
      %3510 = vmatprep.mubr.f32.mxu0 0.0
      %3511 = vmatmul.mubr.f32.gmra.mrb[0].mxu0 %v3327
      %v3512 = vpop.f32.mrb[0].mxu0
      %v3513 = vadd.f32 0.0, %v3512
      %v3514 = vpop.f32.mrb[0].mxu0
      %3515 = vmatprep.mubr.f32.mxu0 0.0
      %3516 = vmatmul.mubr.f32.gmra.mrb[0].mxu0 %v3330
      %v3517 = vpop.f32.mrb[0].mxu0
      %v3518 = vadd.f32 0.0, %v3517
      %v3519 = vpop.f32.mrb[0].mxu0
      %3520 = vmatprep.mubr.f32.mxu0 0.0
      %3521 = vmatmul.mubr.f32.gmra.mrb[0].mxu0 %v3333
      %v3522 = vpop.f32.mrb[0].mxu0
      %v3523 = vadd.f32 0.0, %v3522
      %v3524 = vpop.f32.mrb[0].mxu0
      %3525 = vmatprep.mubr.f32.mxu0 0.0
      %3526 = vmatmul.mubr.f32.gmra.mrb[0].mxu0 %v3336
      %v3527 = vpop.f32.mrb[0].mxu0
      %v3528 = vadd.f32 0.0, %v3527
      %v3529 = vpop.f32.mrb[0].mxu0
      %3530 = vmatprep.mubr.f32.mxu0 0.0
      %3531 = vmatmul.mubr.f32.gmra.mrb[0].mxu0 %v3339
      %v3532 = vpop.f32.mrb[0].mxu0
      %v3533 = vadd.f32 0.0, %v3532
      %v3534 = vpop.f32.mrb[0].mxu0
      %3535 = vmatprep.mubr.f32.mxu0 0.0
      %3536 = vmatmul.mubr.f32.gmra.mrb[0].mxu0 %v3342
      %v3537 = vpop.f32.mrb[0].mxu0
      %v3538 = vadd.f32 0.0, %v3537
      %v3539 = vpop.f32.mrb[0].mxu0
      %3540 = vmatprep.mubr.f32.mxu0 0.0
      %3541 = vmatmul.mubr.f32.gmra.mrb[0].mxu0 %v3345
      %v3542 = vpop.f32.mrb[0].mxu0
      %v3543 = vadd.f32 0.0, %v3542
      %v3544 = vpop.f32.mrb[0].mxu0
      %3545 = vmatprep.mubr.f32.mxu0 0.0
      %3546 = vmatmul.mubr.f32.gmra.mrb[0].mxu0 %v3348
      %v3547 = vpop.f32.mrb[0].mxu0
      %v3548 = vadd.f32 0.0, %v3547
      %v3549 = vpop.f32.mrb[0].mxu0
      %3550 = vmatprep.mubr.f32.mxu0 0.0
      %3551 = vmatmul.mubr.f32.gmra.mrb[0].mxu0 %v3351
      %v3552 = vpop.f32.mrb[0].mxu0
      %v3553 = vadd.f32 0.0, %v3552
      %v3554 = vpop.f32.mrb[0].mxu0
      %3555 = vmatprep.mubr.f32.mxu0 0.0
      %3556 = vmatmul.mubr.f32.gmra.mrb[0].mxu0 %v3354
      %v3557 = vpop.f32.mrb[0].mxu0
      %v3558 = vadd.f32 0.0, %v3557
      %v3559 = vpop.f32.mrb[0].mxu0
      %3560 = vmatprep.mubr.f32.mxu0 0.0
      %3561 = vmatmul.mubr.f32.gmra.mrb[0].mxu0 %v3357
      %v3562 = vpop.f32.mrb[0].mxu0
      %v3563 = vadd.f32 0.0, %v3562
      %v3564 = vpop.f32.mrb[0].mxu0
      %3565 = vmatprep.mubr.f32.mxu0 0.0
      %3566 = vmatmul.mubr.f32.gmra.mrb[0].mxu0 %v3360
      %v3567 = vpop.f32.mrb[0].mxu0
      %v3568 = vadd.f32 0.0, %v3567
      %v3569 = vpop.f32.mrb[0].mxu0
      %3570 = vmatprep.mubr.f32.mxu0 0.0
      %3571 = vmatmul.mubr.f32.gmra.mrb[0].mxu0 %v3363
      %v3572 = vpop.f32.mrb[0].mxu0
      %v3573 = vadd.f32 0.0, %v3572
      %v3574 = vpop.f32.mrb[0].mxu0
      %3575 = vmatprep.mubr.f32.mxu0 0.0
      %3576 = vmatmul.mubr.f32.gmra.mrb[0].mxu0 %v3366
      %v3577 = vpop.f32.mrb[0].mxu0
      %v3578 = vadd.f32 0.0, %v3577
      %v3579 = vpop.f32.mrb[0].mxu0
      %3580 = vmatprep.mubr.f32.mxu0 0.0
      %3581 = vmatmul.mubr.f32.gmra.mrb[0].mxu0 %v3369
      %v3582 = vpop.f32.mrb[0].mxu0
      %v3583 = vadd.f32 0.0, %v3582
      %v3584 = vpop.f32.mrb[0].mxu0
      %3585 = vmatprep.mubr.f32.mxu0 0.0
      %3586 = vmatmul.mubr.f32.gmra.mrb[0].mxu0 %v3372
      %v3587 = vpop.f32.mrb[0].mxu0
      %v3588 = vadd.f32 0.0, %v3587
      %v3589 = vpop.f32.mrb[0].mxu0
      %3590 = vmatprep.mubr.f32.mxu0 0.0
      %3591 = vmatmul.mubr.f32.gmra.mrb[0].mxu0 %v3375
      %v3592 = vpop.f32.mrb[0].mxu0
      %v3593 = vadd.f32 0.0, %v3592
      %v3594 = vpop.f32.mrb[0].mxu0
      %3595 = vmatprep.mubr.f32.mxu0 0.0
      %3596 = vmatmul.mubr.f32.gmra.mrb[0].mxu0 %v3378
      %v3597 = vpop.f32.mrb[0].mxu0
      %v3598 = vadd.f32 0.0, %v3597
      %v3599 = vpop.f32.mrb[0].mxu0
      %3600 = vmatprep.mubr.f32.mxu0 0.0
      %3601 = vmatmul.mubr.f32.gmra.mrb[0].mxu0 %v3381
      %v3602 = vpop.f32.mrb[0].mxu0
      %v3603 = vadd.f32 0.0, %v3602
      %v3604 = vpop.f32.mrb[0].mxu0
      %3605 = vmatprep.mubr.f32.mxu0 0.0
      %3606 = vmatmul.mubr.f32.gmra.mrb[0].mxu0 %v3384
      %v3607 = vpop.f32.mrb[0].mxu0
      %v3608 = vadd.f32 0.0, %v3607
      %v3609 = vpop.f32.mrb[0].mxu0
      %3610 = vdwg.mxu0
      %v3611 = vadd.f32 %v3224, %v3453
      %v3612 = vadd.f32 %v3225, %v3458
      %v3613 = vadd.f32 %v3226, %v3463
      %v3614 = vadd.f32 %v3227, %v3468
      %v3615 = vadd.f32 %v3228, %v3473
      %v3616 = vadd.f32 %v3229, %v3478
      %v3617 = vadd.f32 %v3230, %v3483
      %v3618 = vadd.f32 %v3231, %v3488
      %v3619 = vadd.f32 %v3232, %v3493
      %v3620 = vadd.f32 %v3233, %v3498
      %v3621 = vadd.f32 %v3234, %v3503
      %v3622 = vadd.f32 %v3235, %v3508
      %v3623 = vadd.f32 %v3236, %v3513
      %v3624 = vadd.f32 %v3237, %v3518
      %v3625 = vadd.f32 %v3238, %v3523
      %v3626 = vadd.f32 %v3239, %v3528
      %v3627 = vadd.f32 %v3240, %v3533
      %v3628 = vadd.f32 %v3241, %v3538
      %v3629 = vadd.f32 %v3242, %v3543
      %v3630 = vadd.f32 %v3243, %v3548
      %v3631 = vadd.f32 %v3244, %v3553
      %v3632 = vadd.f32 %v3245, %v3558
      %v3633 = vadd.f32 %v3246, %v3563
      %v3634 = vadd.f32 %v3247, %v3568
      %v3635 = vadd.f32 %v3248, %v3573
      %v3636 = vadd.f32 %v3249, %v3578
      %v3637 = vadd.f32 %v3250, %v3583
      %v3638 = vadd.f32 %v3251, %v3588
      %v3639 = vadd.f32 %v3252, %v3593
      %v3640 = vadd.f32 %v3253, %v3598
      %v3641 = vadd.f32 %v3254, %v3603
      %v3642 = vadd.f32 %v3255, %v3608
      %v3643 = vld [vmem:[%s213] sm:$0x1]
      %v3645 = vlaneseq
      %v3646 = vshrl.u32 %v3645, 7
      %v3647 = vsub.s32 0, %v3646
      %v3648 = vrot.slane %v3643, %v3647
      %v3650 = vadd.f32 %v3611, %v3648
      %v3651 = vadd.f32 %v3612, %v3648
      %v3652 = vadd.f32 %v3613, %v3648
      %v3653 = vadd.f32 %v3614, %v3648
      %v3654 = vadd.f32 %v3615, %v3648
      %v3655 = vadd.f32 %v3616, %v3648
      %v3656 = vadd.f32 %v3617, %v3648
      %v3657 = vadd.f32 %v3618, %v3648
      %v3658 = vadd.f32 %v3619, %v3648
      %v3659 = vadd.f32 %v3620, %v3648
      %v3660 = vadd.f32 %v3621, %v3648
      %v3661 = vadd.f32 %v3622, %v3648
      %v3662 = vadd.f32 %v3623, %v3648
      %v3663 = vadd.f32 %v3624, %v3648
      %v3664 = vadd.f32 %v3625, %v3648
      %v3665 = vadd.f32 %v3626, %v3648
      %v3666 = vadd.f32 %v3627, %v3648
      %v3667 = vadd.f32 %v3628, %v3648
      %v3668 = vadd.f32 %v3629, %v3648
      %v3669 = vadd.f32 %v3630, %v3648
      %v3670 = vadd.f32 %v3631, %v3648
      %v3671 = vadd.f32 %v3632, %v3648
      %v3672 = vadd.f32 %v3633, %v3648
      %v3673 = vadd.f32 %v3634, %v3648
      %v3674 = vadd.f32 %v3635, %v3648
      %v3675 = vadd.f32 %v3636, %v3648
      %v3676 = vadd.f32 %v3637, %v3648
      %v3677 = vadd.f32 %v3638, %v3648
      %v3678 = vadd.f32 %v3639, %v3648
      %v3679 = vadd.f32 %v3640, %v3648
      %v3680 = vadd.f32 %v3641, %v3648
      %v3681 = vadd.f32 %v3642, %v3648
      %3682 = vst [vmem:[%s221] sm:$0xff] %v3650
      %3683 = vst [vmem:[%s221 + $0x8] sm:$0xff] %v3651
      %3684 = vst [vmem:[%s221 + $0x10] sm:$0xff] %v3652
      %3685 = vst [vmem:[%s221 + $0x18] sm:$0xff] %v3653
      %3686 = vst [vmem:[%s221 + $0x20] sm:$0xff] %v3654
      %3687 = vst [vmem:[%s221 + $0x28] sm:$0xff] %v3655
      %3688 = vst [vmem:[%s221 + $0x30] sm:$0xff] %v3656
      %3689 = vst [vmem:[%s221 + $0x38] sm:$0xff] %v3657
      %3690 = vst [vmem:[%s221 + $0x40] sm:$0xff] %v3658
      %3691 = vst [vmem:[%s221 + $0x48] sm:$0xff] %v3659
      %3692 = vst [vmem:[%s221 + $0x50] sm:$0xff] %v3660
      %3693 = vst [vmem:[%s221 + $0x58] sm:$0xff] %v3661
      %3694 = vst [vmem:[%s221 + $0x60] sm:$0xff] %v3662
      %3695 = vst [vmem:[%s221 + $0x68] sm:$0xff] %v3663
      %3696 = vst [vmem:[%s221 + $0x70] sm:$0xff] %v3664
      %3697 = vst [vmem:[%s221 + $0x78] sm:$0xff] %v3665
      %3698 = vst [vmem:[%s221 + $0x80] sm:$0xff] %v3666
      %3699 = vst [vmem:[%s221 + $0x88] sm:$0xff] %v3667
      %3700 = vst [vmem:[%s221 + $0x90] sm:$0xff] %v3668
      %3701 = vst [vmem:[%s221 + $0x98] sm:$0xff] %v3669
      %3702 = vst [vmem:[%s221 + $0xa0] sm:$0xff] %v3670
      %3703 = vst [vmem:[%s221 + $0xa8] sm:$0xff] %v3671
      %3704 = vst [vmem:[%s221 + $0xb0] sm:$0xff] %v3672
      %3705 = vst [vmem:[%s221 + $0xb8] sm:$0xff] %v3673
      %3706 = vst [vmem:[%s221 + $0xc0] sm:$0xff] %v3674
      %3707 = vst [vmem:[%s221 + $0xc8] sm:$0xff] %v3675
      %3708 = vst [vmem:[%s221 + $0xd0] sm:$0xff] %v3676
      %3709 = vst [vmem:[%s221 + $0xd8] sm:$0xff] %v3677
      %3710 = vst [vmem:[%s221 + $0xe0] sm:$0xff] %v3678
      %3711 = vst [vmem:[%s221 + $0xe8] sm:$0xff] %v3679
      %3712 = vst [vmem:[%s221 + $0xf0] sm:$0xff] %v3680
      %3713 = vst [vmem:[%s221 + $0xf8] sm:$0xff] %v3681
      %p3714 = scmp.lt.s32.totalorder %s18, 1
      %s3715 = scalar_select %p3714, %s18, 1
      %p3716 = scmp.lt.s32.totalorder %s19, 0
      %s3717 = scalar_select %p3716, %s19, 0
      %s3718 = smul.addr %s3715, 32
      %s3719 = sadd.s32 %s3717, %s3718
      %s3720 = smul.addr %s3719, 8
      %s3721 = scalar_lea.vmem %s3, %s3720
      // Predicated region
      $region33: #{cconv2d.1} parent=31 // pred_check
        %p3722 = pneg %p124
      $region34: #{cconv2d.1} parent=31 // pred_check_branch
        %3724 = sbr.rel (%p3722) target = $region36
      $region35: #{cconv2d.1} parent=31 // pred_region
        _
      $region36: #{cconv2d.1} parent=31 // pred_fallthru
        _
    $region32: #{cconv2d.1} parent=5 // pred_fallthru
      _
    %p3725 = scmp.le.s32.totalorder 2, %s9
    // Predicated region
    $region37: #{cconv2d.1} parent=5 // pred_check
      %p3726 = pneg %p3725
    $region38: #{cconv2d.1} parent=5 // pred_check_branch
      %3728 = sbr.rel (%p3726) target = $region40
    $region39: #{cconv2d.1} parent=5 // pred_region
      %s3729 = ssub.s32 %s9, 2
      // Predicated region
      $region41: #{cconv2d.1} parent=39 // pred_check
        %p3730 = pneg %p130
      $region42: #{cconv2d.1} parent=39 // pred_check_branch
        %3732 = sbr.rel (%p3730) target = $region44
      $region43: #{cconv2d.1} parent=39 // pred_region
        %p3733 = scmp.lt.s32.totalorder %s20, 1
        %s3734 = scalar_select %p3733, %s20, 1
        %p3735 = scmp.lt.s32.totalorder %s21, 0
        %s3736 = scalar_select %p3735, %s21, 0
        %s3737 = smul.addr %s3734, 32
        %s3738 = sadd.s32 %s3736, %s3737
        %s3739 = smul.addr %s3738, 8
        %s3740 = scalar_lea.vmem %s3, %s3739
      $region44: #{cconv2d.1} parent=39 // pred_fallthru
        _
    $region40: #{cconv2d.1} parent=5 // pred_fallthru
      _
  $region6: #{cconv2d.1} parent=0 // loop_footer
    %s13 = sadd.s32 1, %s9
  $region7: #{cconv2d.1} parent=0 // loop_footer_branch
    %8 = sbr.rel target = $region3
  $region8: #{cconv2d.1} parent=0 // loop_exit
    _

</llo_original>
